<compile_context>
chip_gen: v6e
topology: v6e:2x2x1
jax: 0.10.0
libtpu: 0.0.40
codegen_flags: <defaults>
</compile_context>

<pallas_src>
import numpy as np
import jax
import jax.numpy as jnp
from jax.experimental import pallas as pl
from jax.experimental.pallas import tpu as pltpu

_LANES = 128                       # lane-dense padded Cout (all layers <= 128)
_TM_MAX = 512                      # M tile for the tiled fallback path
_VMEM_LIMIT = 32 * 1024 * 1024
_FUSED_VMEM_BUDGET = 12 * 1024 * 1024   # conservative: stay inside v5e scoped VMEM


def _round_up(x, m):
    return (x + m - 1) // m * m


# ----------------------------------------------------------------------------
# Fully fused layer kernel: GEMM + BN batch-stats + normalize + ReLU in one
# pass over a single VMEM-resident block.
# ----------------------------------------------------------------------------
def _make_fused_layer_kernel(inv_m, eps):
    def kernel(p_ref, w_ref, g_ref, b_ref, o_ref):
        y = jnp.dot(p_ref[...], w_ref[...], preferred_element_type=jnp.float32)
        # Padded rows of P are zero and there is no conv bias, so they add
        # nothing to the sums; inv_m uses the real (unpadded) row count.
        s1 = jnp.sum(y, axis=0, keepdims=True)
        s2 = jnp.sum(y * y, axis=0, keepdims=True)
        mean = s1 * inv_m
        var = jnp.maximum(s2 * inv_m - mean * mean, 0.0)   # one-pass biased var
        scale = g_ref[...] * jax.lax.rsqrt(var + eps)      # EUP rsqrt
        shift = b_ref[...] - mean * scale
        o_ref[...] = jnp.maximum(y * scale + shift, 0.0)
    return kernel


# ----------------------------------------------------------------------------
# Tiled fallback kernels (two passes over the activation) for large layers.
# ----------------------------------------------------------------------------
def _conv_stats_kernel(p_ref, w_ref, y_ref, stats_ref):
    """One M-tile: bf16 GEMM (f32 accumulate) + partial BN statistics."""
    y = jnp.dot(p_ref[...], w_ref[...], preferred_element_type=jnp.float32)
    y_ref[...] = y
    s1 = jnp.sum(y, axis=0, keepdims=True)        # per-channel sum
    s2 = jnp.sum(y * y, axis=0, keepdims=True)    # per-channel sum of squares
    pad = jnp.zeros((6, y.shape[1]), jnp.float32)  # fill out the (8,128) tile
    stats_ref[...] = jnp.concatenate([s1, s2, pad], axis=0)[None]


def _bn_relu_kernel(y_ref, scale_ref, shift_ref, o_ref):
    """Normalize + affine + ReLU sweep; all epilogue math stays in f32."""
    o_ref[...] = jnp.maximum(y_ref[...] * scale_ref[...] + shift_ref[...], 0.0)


# ----------------------------------------------------------------------------
# im2col in NHWC (lane-contiguous, no transposes); cast to bf16 for the MXU.
# TODO(synk): patch extraction is still XLA-side (9x duplicated patch matrix in
# HBM); moving it in-kernel as 9 shifted dots over a padded NHWC block would
# remove that traffic but is left out here for robustness.
# ----------------------------------------------------------------------------
def _im2col_nhwc(x, stride):
    N, H, W, C = x.shape
    Ho = (H + 2 - 3) // stride + 1
    Wo = (W + 2 - 3) // stride + 1
    xp = jnp.pad(x, ((0, 0), (1, 1), (1, 1), (0, 0)))
    cols = []
    for ky in range(3):
        for kx in range(3):
            cols.append(xp[:, ky:ky + stride * (Ho - 1) + 1:stride,
                           kx:kx + stride * (Wo - 1) + 1:stride, :])
    P = jnp.concatenate(cols, axis=-1).reshape(N * Ho * Wo, 9 * C)
    return P.astype(jnp.bfloat16), Ho, Wo


# ----------------------------------------------------------------------------
# Fused Conv3x3(pad=1) + BatchNorm2d(training, batch stats) + ReLU layer
# ----------------------------------------------------------------------------
def conv_bn_relu(x, w, gamma, beta, *, stride, eps=1e-5):
    """x: (N,H,W,Cin) f32 NHWC.  w: (Cout,Cin,3,3) f32.
    The conv bias is omitted: it cancels exactly in (y - mean) under
    training-mode BatchNorm, so dropping it is semantics-preserving."""
    N, H, W, Cin = x.shape
    Cout = w.shape[0]
    P, Ho, Wo = _im2col_nhwc(x, stride)
    M, K = P.shape
    CP = _LANES

    # weight (Cout,Cin,3,3) -> (ky,kx,Cin,Cout) -> (K,Cout) -> lane-dense 128
    Wm = jnp.transpose(w, (2, 3, 1, 0)).reshape(K, Cout)
    Wm = jnp.pad(Wm, ((0, 0), (0, CP - Cout))).astype(jnp.bfloat16)
    gamma_p = jnp.pad(gamma.astype(jnp.float32), (0, CP - Cout)).reshape(1, CP)
    beta_p = jnp.pad(beta.astype(jnp.float32), (0, CP - Cout)).reshape(1, CP)

    cparams_arb = pltpu.CompilerParams(dimension_semantics=("arbitrary",),
                                       vmem_limit_bytes=_VMEM_LIMIT)

    # ---- fused single-call path (whole layer resident in VMEM) -------------
    M8 = _round_up(M, 8)
    fused_bytes = (2 * M8 * K * 2        # P (bf16, double-buffered estimate)
                   + 2 * K * CP * 2      # W (bf16)
                   + 5 * M8 * CP * 4)    # out + in-kernel f32 intermediates
    if fused_bytes <= _FUSED_VMEM_BUDGET:
        if M8 != M:
            P = jnp.pad(P, ((0, M8 - M), (0, 0)))
        out = pl.pallas_call(
            _make_fused_layer_kernel(1.0 / M, eps),
            out_shape=jax.ShapeDtypeStruct((M8, CP), jnp.float32),
            grid_spec=pltpu.PrefetchScalarGridSpec(
                num_scalar_prefetch=0,
                grid=(1,),
                in_specs=[pl.BlockSpec((M8, K), lambda i: (0, 0)),
                          pl.BlockSpec((K, CP), lambda i: (0, 0)),
                          pl.BlockSpec((1, CP), lambda i: (0, 0)),
                          pl.BlockSpec((1, CP), lambda i: (0, 0))],
                out_specs=pl.BlockSpec((M8, CP), lambda i: (0, 0))),
            compiler_params=cparams_arb,
        )(P, Wm, gamma_p, beta_p)
        return out[:M, :Cout].reshape(N, Ho, Wo, Cout)

    # ---- fallback: tiled two-pass path for large activations ---------------
    TM = _TM_MAX if M >= _TM_MAX else _round_up(M, 8)
    M_pad = _round_up(M, TM)
    grid_m = M_pad // TM
    if M_pad != M:
        P = jnp.pad(P, ((0, M_pad - M), (0, 0)))

    cparams_par = pltpu.CompilerParams(dimension_semantics=("parallel",),
                                       vmem_limit_bytes=_VMEM_LIMIT)

    # pass 1: tiled conv GEMM + per-tile partial BN stats
    y, stats = pl.pallas_call(
        _conv_stats_kernel,
        out_shape=(jax.ShapeDtypeStruct((M_pad, CP), jnp.float32),
                   jax.ShapeDtypeStruct((grid_m, 8, CP), jnp.float32)),
        grid_spec=pltpu.PrefetchScalarGridSpec(
            num_scalar_prefetch=0,
            grid=(grid_m,),
            in_specs=[pl.BlockSpec((TM, K), lambda i: (i, 0)),
                      pl.BlockSpec((K, CP), lambda i: (0, 0))],
            out_specs=(pl.BlockSpec((TM, CP), lambda i: (i, 0)),
                       pl.BlockSpec((1, 8, CP), lambda i: (i, 0, 0)))),
        compiler_params=cparams_par,
    )(P, Wm)

    # tiny XLA reduction: fold partial stats into BN scale / shift
    s1 = jnp.sum(stats[:, 0, :], axis=0)
    s2 = jnp.sum(stats[:, 1, :], axis=0)
    mean = s1 / M
    var = jnp.maximum(s2 / M - mean * mean, 0.0)
    scale = gamma_p[0] * jax.lax.rsqrt(var + eps)
    shift = beta_p[0] - mean * scale

    # pass 2: normalize + ReLU sweep (lane-dense (TM,128) stores)
    out = pl.pallas_call(
        _bn_relu_kernel,
        out_shape=jax.ShapeDtypeStruct((M_pad, CP), jnp.float32),
        grid_spec=pltpu.PrefetchScalarGridSpec(
            num_scalar_prefetch=0,
            grid=(grid_m,),
            in_specs=[pl.BlockSpec((TM, CP), lambda i: (i, 0)),
                      pl.BlockSpec((1, CP), lambda i: (0, 0)),
                      pl.BlockSpec((1, CP), lambda i: (0, 0))],
            out_specs=pl.BlockSpec((TM, CP), lambda i: (i, 0))),
        compiler_params=cparams_par,
    )(y, scale.reshape(1, CP), shift.reshape(1, CP))

    return out[:M, :Cout].reshape(N, Ho, Wo, Cout)


# ----------------------------------------------------------------------------
# Bilinear 2x upsample (nn.Upsample(scale_factor=2, mode='bilinear'),
# align_corners=False) -- static interpolation matrices, NHWC layout glue.
# ----------------------------------------------------------------------------
def _upsample_matrix(in_size, out_size):
    U = np.zeros((out_size, in_size), dtype=np.float32)
    scale = in_size / out_size
    for o in range(out_size):
        src = max((o + 0.5) * scale - 0.5, 0.0)
        i0 = min(int(np.floor(src)), in_size - 1)
        i1 = min(i0 + 1, in_size - 1)
        lam = src - i0
        U[o, i0] += 1.0 - lam
        U[o, i1] += lam
    return U


def upsample2x(x):
    N, H, W, C = x.shape
    Uh = jnp.asarray(_upsample_matrix(H, 2 * H))
    Uw = jnp.asarray(_upsample_matrix(W, 2 * W))
    return jnp.einsum('oh,pw,nhwc->nopc', Uh, Uw, x)


# ----------------------------------------------------------------------------
# Parameter init (deterministic, mimics PyTorch Conv2d default weight init;
# conv biases are omitted because they cancel under training-mode BatchNorm).
# ----------------------------------------------------------------------------
def init_conv(key, cout, cin):
    bound = 1.0 / np.sqrt(cin * 9)
    w = jax.random.uniform(key, (cout, cin, 3, 3), minval=-bound, maxval=bound)
    return w.astype(jnp.float32)


def init_bn(c):
    return jnp.ones((c,), jnp.float32), jnp.zeros((c,), jnp.float32)


def make_params(key):
    ks = jax.random.split(key, 8)
    p = {}
    p['conv1'] = init_conv(ks[0], 16, 1)
    p['conv2'] = init_conv(ks[1], 32, 16)
    p['conv3'] = init_conv(ks[2], 64, 32)
    p['conv4'] = init_conv(ks[3], 128, 64)
    p['deConv1'] = init_conv(ks[4], 64, 128)
    p['deConv2'] = init_conv(ks[5], 32, 64)
    # TODO(synk): the original module declares deConv3 = Conv2d(64, 32) and
    # applies batchnorm1(16ch) to its output, which is shape-inconsistent with
    # the forward data flow (32-channel input, deConv4 expects 32 channels).
    # We use Conv2d(32, 32) + a 32-channel BN (batchnorm2 params) so the
    # pipeline runs.
    p['deConv3'] = init_conv(ks[6], 32, 32)
    p['deConv4'] = init_conv(ks[7], 1, 32)
    p['bn1'] = init_bn(16)
    p['bn2'] = init_bn(32)
    p['bn3'] = init_bn(64)
    p['bn4'] = init_bn(128)
    p['bn8'] = init_bn(1)
    return p


# ----------------------------------------------------------------------------
# EncDec forward (NCHW at the boundary, NHWC internally, jit-compiled)
# ----------------------------------------------------------------------------
def encdec_forward(x, p):
    x = jnp.transpose(x, (0, 2, 3, 1))                       # NCHW -> NHWC once
    x = conv_bn_relu(x, p['conv1'], *p['bn1'], stride=2)     # (N, H/2,  W/2, 16)
    x = conv_bn_relu(x, p['conv2'], *p['bn2'], stride=2)     # (N, H/4,  W/4, 32)
    x = conv_bn_relu(x, p['conv3'], *p['bn3'], stride=2)     # (N, H/8,  W/8, 64)
    x = conv_bn_relu(x, p['conv4'], *p['bn4'], stride=2)     # (N, H/16, W/16,128)
    x = conv_bn_relu(upsample2x(x), p['deConv1'], *p['bn3'], stride=1)  # 64 ch
    x = conv_bn_relu(upsample2x(x), p['deConv2'], *p['bn2'], stride=1)  # 32 ch
    x = conv_bn_relu(upsample2x(x), p['deConv3'], *p['bn2'], stride=1)  # 32 ch
    x = conv_bn_relu(upsample2x(x), p['deConv4'], *p['bn8'], stride=1)  # 1 ch
    return jnp.transpose(x, (0, 3, 1, 2))                    # NHWC -> NCHW once


if __name__ == "__main__":
    key = jax.random.PRNGKey(0)
    kp, kx = jax.random.split(key)
    params = make_params(kp)
    x = jax.random.normal(kx, (2, 1, 16, 16), dtype=jnp.float32)

    fwd = jax.jit(encdec_forward)
    y = jax.block_until_ready(fwd(x, params))

    assert y.shape == (2, 1, 16, 16), y.shape
    assert bool(jnp.all(jnp.isfinite(y))), "non-finite output"
    print("KERNEL_OK")
</pallas_src>

<mosaic_0001>
module attributes {stable_mosaic.version = 11 : i64} {
  func.func @kernel(%arg0: i32, %arg1: memref<128x9xbf16, #tpu.memory_space<vmem>>, %arg2: memref<9x128xbf16, #tpu.memory_space<vmem>>, %arg3: memref<1x128xf32, #tpu.memory_space<vmem>>, %arg4: memref<1x128xf32, #tpu.memory_space<vmem>>, %arg5: memref<128x128xf32, #tpu.memory_space<vmem>>) attributes {dimension_semantics = [#tpu.dimension_semantics<arbitrary>], iteration_bounds = array<i64: 1>, scalar_prefetch = 0 : i64, scratch_operands = 0 : i64, tpu.core_type = #tpu.core_type<tc>, window_params = [{pipeline_mode = #tpu.pipeline_mode<synchronous>, transform_indices = @transform_0, window_bounds = array<i64: 128, 9>}, {pipeline_mode = #tpu.pipeline_mode<synchronous>, transform_indices = @transform_1, window_bounds = array<i64: 9, 128>}, {pipeline_mode = #tpu.pipeline_mode<synchronous>, transform_indices = @transform_2, window_bounds = array<i64: 1, 128>}, {pipeline_mode = #tpu.pipeline_mode<synchronous>, transform_indices = @transform_3, window_bounds = array<i64: 1, 128>}, {pipeline_mode = #tpu.pipeline_mode<synchronous>, transform_indices = @transform_4, window_bounds = array<i64: 128, 128>}]} {
    %c0 = arith.constant 0 : index
    %c0_0 = arith.constant 0 : index
    %0 = vector.load %arg1[%c0, %c0_0] : memref<128x9xbf16, #tpu.memory_space<vmem>>, vector<128x9xbf16>
    %c0_1 = arith.constant 0 : index
    %c0_2 = arith.constant 0 : index
    %1 = vector.load %arg2[%c0_1, %c0_2] : memref<9x128xbf16, #tpu.memory_space<vmem>>, vector<9x128xbf16>
    %cst = arith.constant dense<0.000000e+00> : vector<128x128xf32>
    %2 = tpu.matmul %0, %1, %cst {dimension_numbers = #tpu.dot_dimension_numbers<[1], [0], [0], [1], [0, 0, 1, 1], [], []>} : vector<128x9xbf16>, vector<9x128xbf16>, vector<128x128xf32> -> vector<128x128xf32>
    %cst_3 = arith.constant dense<0.000000e+00> : vector<128xf32>
    %3 = vector.multi_reduction <add>, %2, %cst_3 [0] : vector<128x128xf32> to vector<128xf32>
    %4 = vector.shape_cast %3 : vector<128xf32> to vector<1x128xf32>
    %5 = arith.mulf %2, %2 : vector<128x128xf32>
    %cst_4 = arith.constant dense<0.000000e+00> : vector<128xf32>
    %6 = vector.multi_reduction <add>, %5, %cst_4 [0] : vector<128x128xf32> to vector<128xf32>
    %7 = vector.shape_cast %6 : vector<128xf32> to vector<1x128xf32>
    %cst_5 = arith.constant 7.812500e-03 : f32
    %8 = vector.broadcast %cst_5 : f32 to vector<1x128xf32>
    %9 = arith.mulf %4, %8 : vector<1x128xf32>
    %cst_6 = arith.constant 7.812500e-03 : f32
    %10 = vector.broadcast %cst_6 : f32 to vector<1x128xf32>
    %11 = arith.mulf %7, %10 : vector<1x128xf32>
    %12 = arith.mulf %9, %9 : vector<1x128xf32>
    %13 = arith.subf %11, %12 : vector<1x128xf32>
    %cst_7 = arith.constant 0.000000e+00 : f32
    %14 = vector.broadcast %cst_7 : f32 to vector<1x128xf32>
    %15 = arith.maximumf %13, %14 : vector<1x128xf32>
    %c0_8 = arith.constant 0 : index
    %c0_9 = arith.constant 0 : index
    %16 = vector.load %arg3[%c0_8, %c0_9] : memref<1x128xf32, #tpu.memory_space<vmem>>, vector<1x128xf32>
    %cst_10 = arith.constant 9.99999974E-6 : f32
    %17 = vector.broadcast %cst_10 : f32 to vector<1x128xf32>
    %18 = arith.addf %15, %17 : vector<1x128xf32>
    %19 = math.rsqrt %18 : vector<1x128xf32>
    %20 = arith.mulf %16, %19 : vector<1x128xf32>
    %c0_11 = arith.constant 0 : index
    %c0_12 = arith.constant 0 : index
    %21 = vector.load %arg4[%c0_11, %c0_12] : memref<1x128xf32, #tpu.memory_space<vmem>>, vector<1x128xf32>
    %22 = arith.mulf %9, %20 : vector<1x128xf32>
    %23 = arith.subf %21, %22 : vector<1x128xf32>
    %24 = vector.broadcast %20 : vector<1x128xf32> to vector<128x128xf32>
    %25 = arith.mulf %2, %24 : vector<128x128xf32>
    %26 = vector.broadcast %23 : vector<1x128xf32> to vector<128x128xf32>
    %27 = arith.addf %25, %26 : vector<128x128xf32>
    %cst_13 = arith.constant 0.000000e+00 : f32
    %28 = vector.broadcast %cst_13 : f32 to vector<128x128xf32>
    %29 = arith.maximumf %27, %28 : vector<128x128xf32>
    %c0_14 = arith.constant 0 : index
    %c0_15 = arith.constant 0 : index
    %30 = vector.load %arg5[%c0_14, %c0_15] : memref<128x128xf32, #tpu.memory_space<vmem>>, vector<128x128xf32>
    tpu.vector_store %arg5[%c0_14, %c0_15], %29 {strides = array<i32>} : memref<128x128xf32, #tpu.memory_space<vmem>>, vector<128x128xf32>,
    return
  }
  func.func @transform_0(%arg0: i32) -> (i32, i32) {
    %c0_i32 = arith.constant 0 : i32
    %c0_i32_0 = arith.constant 0 : i32
    %c0_i32_1 = arith.constant 0 : i32
    return %c0_i32, %c0_i32_0 : i32, i32
  }
  func.func @transform_1(%arg0: i32) -> (i32, i32) {
    %c0_i32 = arith.constant 0 : i32
    %c0_i32_0 = arith.constant 0 : i32
    %c0_i32_1 = arith.constant 0 : i32
    return %c0_i32, %c0_i32_0 : i32, i32
  }
  func.func @transform_2(%arg0: i32) -> (i32, i32) {
    %c0_i32 = arith.constant 0 : i32
    %c0_i32_0 = arith.constant 0 : i32
    %c0_i32_1 = arith.constant 0 : i32
    return %c0_i32, %c0_i32_0 : i32, i32
  }
  func.func @transform_3(%arg0: i32) -> (i32, i32) {
    %c0_i32 = arith.constant 0 : i32
    %c0_i32_0 = arith.constant 0 : i32
    %c0_i32_1 = arith.constant 0 : i32
    return %c0_i32, %c0_i32_0 : i32, i32
  }
  func.func @transform_4(%arg0: i32) -> (i32, i32) {
    %c0_i32 = arith.constant 0 : i32
    %c0_i32_0 = arith.constant 0 : i32
    %c0_i32_1 = arith.constant 0 : i32
    return %c0_i32, %c0_i32_0 : i32, i32
  }
}

module attributes {stable_mosaic.version = 11 : i64} {
  func.func @kernel(%arg0: i32, %arg1: memref<32x144xbf16, #tpu.memory_space<vmem>>, %arg2: memref<144x128xbf16, #tpu.memory_space<vmem>>, %arg3: memref<1x128xf32, #tpu.memory_space<vmem>>, %arg4: memref<1x128xf32, #tpu.memory_space<vmem>>, %arg5: memref<32x128xf32, #tpu.memory_space<vmem>>) attributes {dimension_semantics = [#tpu.dimension_semantics<arbitrary>], iteration_bounds = array<i64: 1>, scalar_prefetch = 0 : i64, scratch_operands = 0 : i64, tpu.core_type = #tpu.core_type<tc>, window_params = [{pipeline_mode = #tpu.pipeline_mode<synchronous>, transform_indices = @transform_0, window_bounds = array<i64: 32, 144>}, {pipeline_mode = #tpu.pipeline_mode<synchronous>, transform_indices = @transform_1, window_bounds = array<i64: 144, 128>}, {pipeline_mode = #tpu.pipeline_mode<synchronous>, transform_indices = @transform_2, window_bounds = array<i64: 1, 128>}, {pipeline_mode = #tpu.pipeline_mode<synchronous>, transform_indices = @transform_3, window_bounds = array<i64: 1, 128>}, {pipeline_mode = #tpu.pipeline_mode<synchronous>, transform_indices = @transform_4, window_bounds = array<i64: 32, 128>}]} {
    %c0 = arith.constant 0 : index
    %c0_0 = arith.constant 0 : index
    %0 = vector.load %arg1[%c0, %c0_0] : memref<32x144xbf16, #tpu.memory_space<vmem>>, vector<32x144xbf16>
    %c0_1 = arith.constant 0 : index
    %c0_2 = arith.constant 0 : index
    %1 = vector.load %arg2[%c0_1, %c0_2] : memref<144x128xbf16, #tpu.memory_space<vmem>>, vector<144x128xbf16>
    %cst = arith.constant dense<0.000000e+00> : vector<32x128xf32>
    %2 = tpu.matmul %0, %1, %cst {dimension_numbers = #tpu.dot_dimension_numbers<[1], [0], [0], [1], [0, 0, 1, 1], [], []>} : vector<32x144xbf16>, vector<144x128xbf16>, vector<32x128xf32> -> vector<32x128xf32>
    %cst_3 = arith.constant dense<0.000000e+00> : vector<128xf32>
    %3 = vector.multi_reduction <add>, %2, %cst_3 [0] : vector<32x128xf32> to vector<128xf32>
    %4 = vector.shape_cast %3 : vector<128xf32> to vector<1x128xf32>
    %5 = arith.mulf %2, %2 : vector<32x128xf32>
    %cst_4 = arith.constant dense<0.000000e+00> : vector<128xf32>
    %6 = vector.multi_reduction <add>, %5, %cst_4 [0] : vector<32x128xf32> to vector<128xf32>
    %7 = vector.shape_cast %6 : vector<128xf32> to vector<1x128xf32>
    %cst_5 = arith.constant 3.125000e-02 : f32
    %8 = vector.broadcast %cst_5 : f32 to vector<1x128xf32>
    %9 = arith.mulf %4, %8 : vector<1x128xf32>
    %cst_6 = arith.constant 3.125000e-02 : f32
    %10 = vector.broadcast %cst_6 : f32 to vector<1x128xf32>
    %11 = arith.mulf %7, %10 : vector<1x128xf32>
    %12 = arith.mulf %9, %9 : vector<1x128xf32>
    %13 = arith.subf %11, %12 : vector<1x128xf32>
    %cst_7 = arith.constant 0.000000e+00 : f32
    %14 = vector.broadcast %cst_7 : f32 to vector<1x128xf32>
    %15 = arith.maximumf %13, %14 : vector<1x128xf32>
    %c0_8 = arith.constant 0 : index
    %c0_9 = arith.constant 0 : index
    %16 = vector.load %arg3[%c0_8, %c0_9] : memref<1x128xf32, #tpu.memory_space<vmem>>, vector<1x128xf32>
    %cst_10 = arith.constant 9.99999974E-6 : f32
    %17 = vector.broadcast %cst_10 : f32 to vector<1x128xf32>
    %18 = arith.addf %15, %17 : vector<1x128xf32>
    %19 = math.rsqrt %18 : vector<1x128xf32>
    %20 = arith.mulf %16, %19 : vector<1x128xf32>
    %c0_11 = arith.constant 0 : index
    %c0_12 = arith.constant 0 : index
    %21 = vector.load %arg4[%c0_11, %c0_12] : memref<1x128xf32, #tpu.memory_space<vmem>>, vector<1x128xf32>
    %22 = arith.mulf %9, %20 : vector<1x128xf32>
    %23 = arith.subf %21, %22 : vector<1x128xf32>
    %24 = vector.broadcast %20 : vector<1x128xf32> to vector<32x128xf32>
    %25 = arith.mulf %2, %24 : vector<32x128xf32>
    %26 = vector.broadcast %23 : vector<1x128xf32> to vector<32x128xf32>
    %27 = arith.addf %25, %26 : vector<32x128xf32>
    %cst_13 = arith.constant 0.000000e+00 : f32
    %28 = vector.broadcast %cst_13 : f32 to vector<32x128xf32>
    %29 = arith.maximumf %27, %28 : vector<32x128xf32>
    %c0_14 = arith.constant 0 : index
    %c0_15 = arith.constant 0 : index
    %30 = vector.load %arg5[%c0_14, %c0_15] : memref<32x128xf32, #tpu.memory_space<vmem>>, vector<32x128xf32>
    tpu.vector_store %arg5[%c0_14, %c0_15], %29 {strides = array<i32>} : memref<32x128xf32, #tpu.memory_space<vmem>>, vector<32x128xf32>,
    return
  }
  func.func @transform_0(%arg0: i32) -> (i32, i32) {
    %c0_i32 = arith.constant 0 : i32
    %c0_i32_0 = arith.constant 0 : i32
    %c0_i32_1 = arith.constant 0 : i32
    return %c0_i32, %c0_i32_0 : i32, i32
  }
  func.func @transform_1(%arg0: i32) -> (i32, i32) {
    %c0_i32 = arith.constant 0 : i32
    %c0_i32_0 = arith.constant 0 : i32
    %c0_i32_1 = arith.constant 0 : i32
    return %c0_i32, %c0_i32_0 : i32, i32
  }
  func.func @transform_2(%arg0: i32) -> (i32, i32) {
    %c0_i32 = arith.constant 0 : i32
    %c0_i32_0 = arith.constant 0 : i32
    %c0_i32_1 = arith.constant 0 : i32
    return %c0_i32, %c0_i32_0 : i32, i32
  }
  func.func @transform_3(%arg0: i32) -> (i32, i32) {
    %c0_i32 = arith.constant 0 : i32
    %c0_i32_0 = arith.constant 0 : i32
    %c0_i32_1 = arith.constant 0 : i32
    return %c0_i32, %c0_i32_0 : i32, i32
  }
  func.func @transform_4(%arg0: i32) -> (i32, i32) {
    %c0_i32 = arith.constant 0 : i32
    %c0_i32_0 = arith.constant 0 : i32
    %c0_i32_1 = arith.constant 0 : i32
    return %c0_i32, %c0_i32_0 : i32, i32
  }
}

module attributes {stable_mosaic.version = 11 : i64} {
  func.func @kernel(%arg0: i32, %arg1: memref<8x288xbf16, #tpu.memory_space<vmem>>, %arg2: memref<288x128xbf16, #tpu.memory_space<vmem>>, %arg3: memref<1x128xf32, #tpu.memory_space<vmem>>, %arg4: memref<1x128xf32, #tpu.memory_space<vmem>>, %arg5: memref<8x128xf32, #tpu.memory_space<vmem>>) attributes {dimension_semantics = [#tpu.dimension_semantics<arbitrary>], iteration_bounds = array<i64: 1>, scalar_prefetch = 0 : i64, scratch_operands = 0 : i64, tpu.core_type = #tpu.core_type<tc>, window_params = [{pipeline_mode = #tpu.pipeline_mode<synchronous>, transform_indices = @transform_0, window_bounds = array<i64: 8, 288>}, {pipeline_mode = #tpu.pipeline_mode<synchronous>, transform_indices = @transform_1, window_bounds = array<i64: 288, 128>}, {pipeline_mode = #tpu.pipeline_mode<synchronous>, transform_indices = @transform_2, window_bounds = array<i64: 1, 128>}, {pipeline_mode = #tpu.pipeline_mode<synchronous>, transform_indices = @transform_3, window_bounds = array<i64: 1, 128>}, {pipeline_mode = #tpu.pipeline_mode<synchronous>, transform_indices = @transform_4, window_bounds = array<i64: 8, 128>}]} {
    %c0 = arith.constant 0 : index
    %c0_0 = arith.constant 0 : index
    %0 = vector.load %arg1[%c0, %c0_0] : memref<8x288xbf16, #tpu.memory_space<vmem>>, vector<8x288xbf16>
    %c0_1 = arith.constant 0 : index
    %c0_2 = arith.constant 0 : index
    %1 = vector.load %arg2[%c0_1, %c0_2] : memref<288x128xbf16, #tpu.memory_space<vmem>>, vector<288x128xbf16>
    %cst = arith.constant dense<0.000000e+00> : vector<8x128xf32>
    %2 = tpu.matmul %0, %1, %cst {dimension_numbers = #tpu.dot_dimension_numbers<[1], [0], [0], [1], [0, 0, 1, 1], [], []>} : vector<8x288xbf16>, vector<288x128xbf16>, vector<8x128xf32> -> vector<8x128xf32>
    %cst_3 = arith.constant dense<0.000000e+00> : vector<128xf32>
    %3 = vector.multi_reduction <add>, %2, %cst_3 [0] : vector<8x128xf32> to vector<128xf32>
    %4 = vector.shape_cast %3 : vector<128xf32> to vector<1x128xf32>
    %5 = arith.mulf %2, %2 : vector<8x128xf32>
    %cst_4 = arith.constant dense<0.000000e+00> : vector<128xf32>
    %6 = vector.multi_reduction <add>, %5, %cst_4 [0] : vector<8x128xf32> to vector<128xf32>
    %7 = vector.shape_cast %6 : vector<128xf32> to vector<1x128xf32>
    %cst_5 = arith.constant 1.250000e-01 : f32
    %8 = vector.broadcast %cst_5 : f32 to vector<1x128xf32>
    %9 = arith.mulf %4, %8 : vector<1x128xf32>
    %cst_6 = arith.constant 1.250000e-01 : f32
    %10 = vector.broadcast %cst_6 : f32 to vector<1x128xf32>
    %11 = arith.mulf %7, %10 : vector<1x128xf32>
    %12 = arith.mulf %9, %9 : vector<1x128xf32>
    %13 = arith.subf %11, %12 : vector<1x128xf32>
    %cst_7 = arith.constant 0.000000e+00 : f32
    %14 = vector.broadcast %cst_7 : f32 to vector<1x128xf32>
    %15 = arith.maximumf %13, %14 : vector<1x128xf32>
    %c0_8 = arith.constant 0 : index
    %c0_9 = arith.constant 0 : index
    %16 = vector.load %arg3[%c0_8, %c0_9] : memref<1x128xf32, #tpu.memory_space<vmem>>, vector<1x128xf32>
    %cst_10 = arith.constant 9.99999974E-6 : f32
    %17 = vector.broadcast %cst_10 : f32 to vector<1x128xf32>
    %18 = arith.addf %15, %17 : vector<1x128xf32>
    %19 = math.rsqrt %18 : vector<1x128xf32>
    %20 = arith.mulf %16, %19 : vector<1x128xf32>
    %c0_11 = arith.constant 0 : index
    %c0_12 = arith.constant 0 : index
    %21 = vector.load %arg4[%c0_11, %c0_12] : memref<1x128xf32, #tpu.memory_space<vmem>>, vector<1x128xf32>
    %22 = arith.mulf %9, %20 : vector<1x128xf32>
    %23 = arith.subf %21, %22 : vector<1x128xf32>
    %24 = vector.broadcast %20 : vector<1x128xf32> to vector<8x128xf32>
    %25 = arith.mulf %2, %24 : vector<8x128xf32>
    %26 = vector.broadcast %23 : vector<1x128xf32> to vector<8x128xf32>
    %27 = arith.addf %25, %26 : vector<8x128xf32>
    %cst_13 = arith.constant 0.000000e+00 : f32
    %28 = vector.broadcast %cst_13 : f32 to vector<8x128xf32>
    %29 = arith.maximumf %27, %28 : vector<8x128xf32>
    %c0_14 = arith.constant 0 : index
    %c0_15 = arith.constant 0 : index
    %30 = vector.load %arg5[%c0_14, %c0_15] : memref<8x128xf32, #tpu.memory_space<vmem>>, vector<8x128xf32>
    tpu.vector_store %arg5[%c0_14, %c0_15], %29 {strides = array<i32>} : memref<8x128xf32, #tpu.memory_space<vmem>>, vector<8x128xf32>,
    return
  }
  func.func @transform_0(%arg0: i32) -> (i32, i32) {
    %c0_i32 = arith.constant 0 : i32
    %c0_i32_0 = arith.constant 0 : i32
    %c0_i32_1 = arith.constant 0 : i32
    return %c0_i32, %c0_i32_0 : i32, i32
  }
  func.func @transform_1(%arg0: i32) -> (i32, i32) {
    %c0_i32 = arith.constant 0 : i32
    %c0_i32_0 = arith.constant 0 : i32
    %c0_i32_1 = arith.constant 0 : i32
    return %c0_i32, %c0_i32_0 : i32, i32
  }
  func.func @transform_2(%arg0: i32) -> (i32, i32) {
    %c0_i32 = arith.constant 0 : i32
    %c0_i32_0 = arith.constant 0 : i32
    %c0_i32_1 = arith.constant 0 : i32
    return %c0_i32, %c0_i32_0 : i32, i32
  }
  func.func @transform_3(%arg0: i32) -> (i32, i32) {
    %c0_i32 = arith.constant 0 : i32
    %c0_i32_0 = arith.constant 0 : i32
    %c0_i32_1 = arith.constant 0 : i32
    return %c0_i32, %c0_i32_0 : i32, i32
  }
  func.func @transform_4(%arg0: i32) -> (i32, i32) {
    %c0_i32 = arith.constant 0 : i32
    %c0_i32_0 = arith.constant 0 : i32
    %c0_i32_1 = arith.constant 0 : i32
    return %c0_i32, %c0_i32_0 : i32, i32
  }
}

module attributes {stable_mosaic.version = 11 : i64} {
  func.func @kernel(%arg0: i32, %arg1: memref<8x576xbf16, #tpu.memory_space<vmem>>, %arg2: memref<576x128xbf16, #tpu.memory_space<vmem>>, %arg3: memref<1x128xf32, #tpu.memory_space<vmem>>, %arg4: memref<1x128xf32, #tpu.memory_space<vmem>>, %arg5: memref<8x128xf32, #tpu.memory_space<vmem>>) attributes {dimension_semantics = [#tpu.dimension_semantics<arbitrary>], iteration_bounds = array<i64: 1>, scalar_prefetch = 0 : i64, scratch_operands = 0 : i64, tpu.core_type = #tpu.core_type<tc>, window_params = [{pipeline_mode = #tpu.pipeline_mode<synchronous>, transform_indices = @transform_0, window_bounds = array<i64: 8, 576>}, {pipeline_mode = #tpu.pipeline_mode<synchronous>, transform_indices = @transform_1, window_bounds = array<i64: 576, 128>}, {pipeline_mode = #tpu.pipeline_mode<synchronous>, transform_indices = @transform_2, window_bounds = array<i64: 1, 128>}, {pipeline_mode = #tpu.pipeline_mode<synchronous>, transform_indices = @transform_3, window_bounds = array<i64: 1, 128>}, {pipeline_mode = #tpu.pipeline_mode<synchronous>, transform_indices = @transform_4, window_bounds = array<i64: 8, 128>}]} {
    %c0 = arith.constant 0 : index
    %c0_0 = arith.constant 0 : index
    %0 = vector.load %arg1[%c0, %c0_0] : memref<8x576xbf16, #tpu.memory_space<vmem>>, vector<8x576xbf16>
    %c0_1 = arith.constant 0 : index
    %c0_2 = arith.constant 0 : index
    %1 = vector.load %arg2[%c0_1, %c0_2] : memref<576x128xbf16, #tpu.memory_space<vmem>>, vector<576x128xbf16>
    %cst = arith.constant dense<0.000000e+00> : vector<8x128xf32>
    %2 = tpu.matmul %0, %1, %cst {dimension_numbers = #tpu.dot_dimension_numbers<[1], [0], [0], [1], [0, 0, 1, 1], [], []>} : vector<8x576xbf16>, vector<576x128xbf16>, vector<8x128xf32> -> vector<8x128xf32>
    %cst_3 = arith.constant dense<0.000000e+00> : vector<128xf32>
    %3 = vector.multi_reduction <add>, %2, %cst_3 [0] : vector<8x128xf32> to vector<128xf32>
    %4 = vector.shape_cast %3 : vector<128xf32> to vector<1x128xf32>
    %5 = arith.mulf %2, %2 : vector<8x128xf32>
    %cst_4 = arith.constant dense<0.000000e+00> : vector<128xf32>
    %6 = vector.multi_reduction <add>, %5, %cst_4 [0] : vector<8x128xf32> to vector<128xf32>
    %7 = vector.shape_cast %6 : vector<128xf32> to vector<1x128xf32>
    %cst_5 = arith.constant 5.000000e-01 : f32
    %8 = vector.broadcast %cst_5 : f32 to vector<1x128xf32>
    %9 = arith.mulf %4, %8 : vector<1x128xf32>
    %cst_6 = arith.constant 5.000000e-01 : f32
    %10 = vector.broadcast %cst_6 : f32 to vector<1x128xf32>
    %11 = arith.mulf %7, %10 : vector<1x128xf32>
    %12 = arith.mulf %9, %9 : vector<1x128xf32>
    %13 = arith.subf %11, %12 : vector<1x128xf32>
    %cst_7 = arith.constant 0.000000e+00 : f32
    %14 = vector.broadcast %cst_7 : f32 to vector<1x128xf32>
    %15 = arith.maximumf %13, %14 : vector<1x128xf32>
    %c0_8 = arith.constant 0 : index
    %c0_9 = arith.constant 0 : index
    %16 = vector.load %arg3[%c0_8, %c0_9] : memref<1x128xf32, #tpu.memory_space<vmem>>, vector<1x128xf32>
    %cst_10 = arith.constant 9.99999974E-6 : f32
    %17 = vector.broadcast %cst_10 : f32 to vector<1x128xf32>
    %18 = arith.addf %15, %17 : vector<1x128xf32>
    %19 = math.rsqrt %18 : vector<1x128xf32>
    %20 = arith.mulf %16, %19 : vector<1x128xf32>
    %c0_11 = arith.constant 0 : index
    %c0_12 = arith.constant 0 : index
    %21 = vector.load %arg4[%c0_11, %c0_12] : memref<1x128xf32, #tpu.memory_space<vmem>>, vector<1x128xf32>
    %22 = arith.mulf %9, %20 : vector<1x128xf32>
    %23 = arith.subf %21, %22 : vector<1x128xf32>
    %24 = vector.broadcast %20 : vector<1x128xf32> to vector<8x128xf32>
    %25 = arith.mulf %2, %24 : vector<8x128xf32>
    %26 = vector.broadcast %23 : vector<1x128xf32> to vector<8x128xf32>
    %27 = arith.addf %25, %26 : vector<8x128xf32>
    %cst_13 = arith.constant 0.000000e+00 : f32
    %28 = vector.broadcast %cst_13 : f32 to vector<8x128xf32>
    %29 = arith.maximumf %27, %28 : vector<8x128xf32>
    %c0_14 = arith.constant 0 : index
    %c0_15 = arith.constant 0 : index
    %30 = vector.load %arg5[%c0_14, %c0_15] : memref<8x128xf32, #tpu.memory_space<vmem>>, vector<8x128xf32>
    tpu.vector_store %arg5[%c0_14, %c0_15], %29 {strides = array<i32>} : memref<8x128xf32, #tpu.memory_space<vmem>>, vector<8x128xf32>,
    return
  }
  func.func @transform_0(%arg0: i32) -> (i32, i32) {
    %c0_i32 = arith.constant 0 : i32
    %c0_i32_0 = arith.constant 0 : i32
    %c0_i32_1 = arith.constant 0 : i32
    return %c0_i32, %c0_i32_0 : i32, i32
  }
  func.func @transform_1(%arg0: i32) -> (i32, i32) {
    %c0_i32 = arith.constant 0 : i32
    %c0_i32_0 = arith.constant 0 : i32
    %c0_i32_1 = arith.constant 0 : i32
    return %c0_i32, %c0_i32_0 : i32, i32
  }
  func.func @transform_2(%arg0: i32) -> (i32, i32) {
    %c0_i32 = arith.constant 0 : i32
    %c0_i32_0 = arith.constant 0 : i32
    %c0_i32_1 = arith.constant 0 : i32
    return %c0_i32, %c0_i32_0 : i32, i32
  }
  func.func @transform_3(%arg0: i32) -> (i32, i32) {
    %c0_i32 = arith.constant 0 : i32
    %c0_i32_0 = arith.constant 0 : i32
    %c0_i32_1 = arith.constant 0 : i32
    return %c0_i32, %c0_i32_0 : i32, i32
  }
  func.func @transform_4(%arg0: i32) -> (i32, i32) {
    %c0_i32 = arith.constant 0 : i32
    %c0_i32_0 = arith.constant 0 : i32
    %c0_i32_1 = arith.constant 0 : i32
    return %c0_i32, %c0_i32_0 : i32, i32
  }
}

module attributes {stable_mosaic.version = 11 : i64} {
  func.func @kernel(%arg0: i32, %arg1: memref<8x1152xbf16, #tpu.memory_space<vmem>>, %arg2: memref<1152x128xbf16, #tpu.memory_space<vmem>>, %arg3: memref<1x128xf32, #tpu.memory_space<vmem>>, %arg4: memref<1x128xf32, #tpu.memory_space<vmem>>, %arg5: memref<8x128xf32, #tpu.memory_space<vmem>>) attributes {dimension_semantics = [#tpu.dimension_semantics<arbitrary>], iteration_bounds = array<i64: 1>, scalar_prefetch = 0 : i64, scratch_operands = 0 : i64, tpu.core_type = #tpu.core_type<tc>, window_params = [{pipeline_mode = #tpu.pipeline_mode<synchronous>, transform_indices = @transform_0, window_bounds = array<i64: 8, 1152>}, {pipeline_mode = #tpu.pipeline_mode<synchronous>, transform_indices = @transform_1, window_bounds = array<i64: 1152, 128>}, {pipeline_mode = #tpu.pipeline_mode<synchronous>, transform_indices = @transform_2, window_bounds = array<i64: 1, 128>}, {pipeline_mode = #tpu.pipeline_mode<synchronous>, transform_indices = @transform_3, window_bounds = array<i64: 1, 128>}, {pipeline_mode = #tpu.pipeline_mode<synchronous>, transform_indices = @transform_4, window_bounds = array<i64: 8, 128>}]} {
    %c0 = arith.constant 0 : index
    %c0_0 = arith.constant 0 : index
    %0 = vector.load %arg1[%c0, %c0_0] : memref<8x1152xbf16, #tpu.memory_space<vmem>>, vector<8x1152xbf16>
    %c0_1 = arith.constant 0 : index
    %c0_2 = arith.constant 0 : index
    %1 = vector.load %arg2[%c0_1, %c0_2] : memref<1152x128xbf16, #tpu.memory_space<vmem>>, vector<1152x128xbf16>
    %cst = arith.constant dense<0.000000e+00> : vector<8x128xf32>
    %2 = tpu.matmul %0, %1, %cst {dimension_numbers = #tpu.dot_dimension_numbers<[1], [0], [0], [1], [0, 0, 1, 1], [], []>} : vector<8x1152xbf16>, vector<1152x128xbf16>, vector<8x128xf32> -> vector<8x128xf32>
    %cst_3 = arith.constant dense<0.000000e+00> : vector<128xf32>
    %3 = vector.multi_reduction <add>, %2, %cst_3 [0] : vector<8x128xf32> to vector<128xf32>
    %4 = vector.shape_cast %3 : vector<128xf32> to vector<1x128xf32>
    %5 = arith.mulf %2, %2 : vector<8x128xf32>
    %cst_4 = arith.constant dense<0.000000e+00> : vector<128xf32>
    %6 = vector.multi_reduction <add>, %5, %cst_4 [0] : vector<8x128xf32> to vector<128xf32>
    %7 = vector.shape_cast %6 : vector<128xf32> to vector<1x128xf32>
    %cst_5 = arith.constant 1.250000e-01 : f32
    %8 = vector.broadcast %cst_5 : f32 to vector<1x128xf32>
    %9 = arith.mulf %4, %8 : vector<1x128xf32>
    %cst_6 = arith.constant 1.250000e-01 : f32
    %10 = vector.broadcast %cst_6 : f32 to vector<1x128xf32>
    %11 = arith.mulf %7, %10 : vector<1x128xf32>
    %12 = arith.mulf %9, %9 : vector<1x128xf32>
    %13 = arith.subf %11, %12 : vector<1x128xf32>
    %cst_7 = arith.constant 0.000000e+00 : f32
    %14 = vector.broadcast %cst_7 : f32 to vector<1x128xf32>
    %15 = arith.maximumf %13, %14 : vector<1x128xf32>
    %c0_8 = arith.constant 0 : index
    %c0_9 = arith.constant 0 : index
    %16 = vector.load %arg3[%c0_8, %c0_9] : memref<1x128xf32, #tpu.memory_space<vmem>>, vector<1x128xf32>
    %cst_10 = arith.constant 9.99999974E-6 : f32
    %17 = vector.broadcast %cst_10 : f32 to vector<1x128xf32>
    %18 = arith.addf %15, %17 : vector<1x128xf32>
    %19 = math.rsqrt %18 : vector<1x128xf32>
    %20 = arith.mulf %16, %19 : vector<1x128xf32>
    %c0_11 = arith.constant 0 : index
    %c0_12 = arith.constant 0 : index
    %21 = vector.load %arg4[%c0_11, %c0_12] : memref<1x128xf32, #tpu.memory_space<vmem>>, vector<1x128xf32>
    %22 = arith.mulf %9, %20 : vector<1x128xf32>
    %23 = arith.subf %21, %22 : vector<1x128xf32>
    %24 = vector.broadcast %20 : vector<1x128xf32> to vector<8x128xf32>
    %25 = arith.mulf %2, %24 : vector<8x128xf32>
    %26 = vector.broadcast %23 : vector<1x128xf32> to vector<8x128xf32>
    %27 = arith.addf %25, %26 : vector<8x128xf32>
    %cst_13 = arith.constant 0.000000e+00 : f32
    %28 = vector.broadcast %cst_13 : f32 to vector<8x128xf32>
    %29 = arith.maximumf %27, %28 : vector<8x128xf32>
    %c0_14 = arith.constant 0 : index
    %c0_15 = arith.constant 0 : index
    %30 = vector.load %arg5[%c0_14, %c0_15] : memref<8x128xf32, #tpu.memory_space<vmem>>, vector<8x128xf32>
    tpu.vector_store %arg5[%c0_14, %c0_15], %29 {strides = array<i32>} : memref<8x128xf32, #tpu.memory_space<vmem>>, vector<8x128xf32>,
    return
  }
  func.func @transform_0(%arg0: i32) -> (i32, i32) {
    %c0_i32 = arith.constant 0 : i32
    %c0_i32_0 = arith.constant 0 : i32
    %c0_i32_1 = arith.constant 0 : i32
    return %c0_i32, %c0_i32_0 : i32, i32
  }
  func.func @transform_1(%arg0: i32) -> (i32, i32) {
    %c0_i32 = arith.constant 0 : i32
    %c0_i32_0 = arith.constant 0 : i32
    %c0_i32_1 = arith.constant 0 : i32
    return %c0_i32, %c0_i32_0 : i32, i32
  }
  func.func @transform_2(%arg0: i32) -> (i32, i32) {
    %c0_i32 = arith.constant 0 : i32
    %c0_i32_0 = arith.constant 0 : i32
    %c0_i32_1 = arith.constant 0 : i32
    return %c0_i32, %c0_i32_0 : i32, i32
  }
  func.func @transform_3(%arg0: i32) -> (i32, i32) {
    %c0_i32 = arith.constant 0 : i32
    %c0_i32_0 = arith.constant 0 : i32
    %c0_i32_1 = arith.constant 0 : i32
    return %c0_i32, %c0_i32_0 : i32, i32
  }
  func.func @transform_4(%arg0: i32) -> (i32, i32) {
    %c0_i32 = arith.constant 0 : i32
    %c0_i32_0 = arith.constant 0 : i32
    %c0_i32_1 = arith.constant 0 : i32
    return %c0_i32, %c0_i32_0 : i32, i32
  }
}

module attributes {stable_mosaic.version = 11 : i64} {
  func.func @kernel(%arg0: i32, %arg1: memref<32x576xbf16, #tpu.memory_space<vmem>>, %arg2: memref<576x128xbf16, #tpu.memory_space<vmem>>, %arg3: memref<1x128xf32, #tpu.memory_space<vmem>>, %arg4: memref<1x128xf32, #tpu.memory_space<vmem>>, %arg5: memref<32x128xf32, #tpu.memory_space<vmem>>) attributes {dimension_semantics = [#tpu.dimension_semantics<arbitrary>], iteration_bounds = array<i64: 1>, scalar_prefetch = 0 : i64, scratch_operands = 0 : i64, tpu.core_type = #tpu.core_type<tc>, window_params = [{pipeline_mode = #tpu.pipeline_mode<synchronous>, transform_indices = @transform_0, window_bounds = array<i64: 32, 576>}, {pipeline_mode = #tpu.pipeline_mode<synchronous>, transform_indices = @transform_1, window_bounds = array<i64: 576, 128>}, {pipeline_mode = #tpu.pipeline_mode<synchronous>, transform_indices = @transform_2, window_bounds = array<i64: 1, 128>}, {pipeline_mode = #tpu.pipeline_mode<synchronous>, transform_indices = @transform_3, window_bounds = array<i64: 1, 128>}, {pipeline_mode = #tpu.pipeline_mode<synchronous>, transform_indices = @transform_4, window_bounds = array<i64: 32, 128>}]} {
    %c0 = arith.constant 0 : index
    %c0_0 = arith.constant 0 : index
    %0 = vector.load %arg1[%c0, %c0_0] : memref<32x576xbf16, #tpu.memory_space<vmem>>, vector<32x576xbf16>
    %c0_1 = arith.constant 0 : index
    %c0_2 = arith.constant 0 : index
    %1 = vector.load %arg2[%c0_1, %c0_2] : memref<576x128xbf16, #tpu.memory_space<vmem>>, vector<576x128xbf16>
    %cst = arith.constant dense<0.000000e+00> : vector<32x128xf32>
    %2 = tpu.matmul %0, %1, %cst {dimension_numbers = #tpu.dot_dimension_numbers<[1], [0], [0], [1], [0, 0, 1, 1], [], []>} : vector<32x576xbf16>, vector<576x128xbf16>, vector<32x128xf32> -> vector<32x128xf32>
    %cst_3 = arith.constant dense<0.000000e+00> : vector<128xf32>
    %3 = vector.multi_reduction <add>, %2, %cst_3 [0] : vector<32x128xf32> to vector<128xf32>
    %4 = vector.shape_cast %3 : vector<128xf32> to vector<1x128xf32>
    %5 = arith.mulf %2, %2 : vector<32x128xf32>
    %cst_4 = arith.constant dense<0.000000e+00> : vector<128xf32>
    %6 = vector.multi_reduction <add>, %5, %cst_4 [0] : vector<32x128xf32> to vector<128xf32>
    %7 = vector.shape_cast %6 : vector<128xf32> to vector<1x128xf32>
    %cst_5 = arith.constant 3.125000e-02 : f32
    %8 = vector.broadcast %cst_5 : f32 to vector<1x128xf32>
    %9 = arith.mulf %4, %8 : vector<1x128xf32>
    %cst_6 = arith.constant 3.125000e-02 : f32
    %10 = vector.broadcast %cst_6 : f32 to vector<1x128xf32>
    %11 = arith.mulf %7, %10 : vector<1x128xf32>
    %12 = arith.mulf %9, %9 : vector<1x128xf32>
    %13 = arith.subf %11, %12 : vector<1x128xf32>
    %cst_7 = arith.constant 0.000000e+00 : f32
    %14 = vector.broadcast %cst_7 : f32 to vector<1x128xf32>
    %15 = arith.maximumf %13, %14 : vector<1x128xf32>
    %c0_8 = arith.constant 0 : index
    %c0_9 = arith.constant 0 : index
    %16 = vector.load %arg3[%c0_8, %c0_9] : memref<1x128xf32, #tpu.memory_space<vmem>>, vector<1x128xf32>
    %cst_10 = arith.constant 9.99999974E-6 : f32
    %17 = vector.broadcast %cst_10 : f32 to vector<1x128xf32>
    %18 = arith.addf %15, %17 : vector<1x128xf32>
    %19 = math.rsqrt %18 : vector<1x128xf32>
    %20 = arith.mulf %16, %19 : vector<1x128xf32>
    %c0_11 = arith.constant 0 : index
    %c0_12 = arith.constant 0 : index
    %21 = vector.load %arg4[%c0_11, %c0_12] : memref<1x128xf32, #tpu.memory_space<vmem>>, vector<1x128xf32>
    %22 = arith.mulf %9, %20 : vector<1x128xf32>
    %23 = arith.subf %21, %22 : vector<1x128xf32>
    %24 = vector.broadcast %20 : vector<1x128xf32> to vector<32x128xf32>
    %25 = arith.mulf %2, %24 : vector<32x128xf32>
    %26 = vector.broadcast %23 : vector<1x128xf32> to vector<32x128xf32>
    %27 = arith.addf %25, %26 : vector<32x128xf32>
    %cst_13 = arith.constant 0.000000e+00 : f32
    %28 = vector.broadcast %cst_13 : f32 to vector<32x128xf32>
    %29 = arith.maximumf %27, %28 : vector<32x128xf32>
    %c0_14 = arith.constant 0 : index
    %c0_15 = arith.constant 0 : index
    %30 = vector.load %arg5[%c0_14, %c0_15] : memref<32x128xf32, #tpu.memory_space<vmem>>, vector<32x128xf32>
    tpu.vector_store %arg5[%c0_14, %c0_15], %29 {strides = array<i32>} : memref<32x128xf32, #tpu.memory_space<vmem>>, vector<32x128xf32>,
    return
  }
  func.func @transform_0(%arg0: i32) -> (i32, i32) {
    %c0_i32 = arith.constant 0 : i32
    %c0_i32_0 = arith.constant 0 : i32
    %c0_i32_1 = arith.constant 0 : i32
    return %c0_i32, %c0_i32_0 : i32, i32
  }
  func.func @transform_1(%arg0: i32) -> (i32, i32) {
    %c0_i32 = arith.constant 0 : i32
    %c0_i32_0 = arith.constant 0 : i32
    %c0_i32_1 = arith.constant 0 : i32
    return %c0_i32, %c0_i32_0 : i32, i32
  }
  func.func @transform_2(%arg0: i32) -> (i32, i32) {
    %c0_i32 = arith.constant 0 : i32
    %c0_i32_0 = arith.constant 0 : i32
    %c0_i32_1 = arith.constant 0 : i32
    return %c0_i32, %c0_i32_0 : i32, i32
  }
  func.func @transform_3(%arg0: i32) -> (i32, i32) {
    %c0_i32 = arith.constant 0 : i32
    %c0_i32_0 = arith.constant 0 : i32
    %c0_i32_1 = arith.constant 0 : i32
    return %c0_i32, %c0_i32_0 : i32, i32
  }
  func.func @transform_4(%arg0: i32) -> (i32, i32) {
    %c0_i32 = arith.constant 0 : i32
    %c0_i32_0 = arith.constant 0 : i32
    %c0_i32_1 = arith.constant 0 : i32
    return %c0_i32, %c0_i32_0 : i32, i32
  }
}

module attributes {stable_mosaic.version = 11 : i64} {
  func.func @kernel(%arg0: i32, %arg1: memref<128x288xbf16, #tpu.memory_space<vmem>>, %arg2: memref<288x128xbf16, #tpu.memory_space<vmem>>, %arg3: memref<1x128xf32, #tpu.memory_space<vmem>>, %arg4: memref<1x128xf32, #tpu.memory_space<vmem>>, %arg5: memref<128x128xf32, #tpu.memory_space<vmem>>) attributes {dimension_semantics = [#tpu.dimension_semantics<arbitrary>], iteration_bounds = array<i64: 1>, scalar_prefetch = 0 : i64, scratch_operands = 0 : i64, tpu.core_type = #tpu.core_type<tc>, window_params = [{pipeline_mode = #tpu.pipeline_mode<synchronous>, transform_indices = @transform_0, window_bounds = array<i64: 128, 288>}, {pipeline_mode = #tpu.pipeline_mode<synchronous>, transform_indices = @transform_1, window_bounds = array<i64: 288, 128>}, {pipeline_mode = #tpu.pipeline_mode<synchronous>, transform_indices = @transform_2, window_bounds = array<i64: 1, 128>}, {pipeline_mode = #tpu.pipeline_mode<synchronous>, transform_indices = @transform_3, window_bounds = array<i64: 1, 128>}, {pipeline_mode = #tpu.pipeline_mode<synchronous>, transform_indices = @transform_4, window_bounds = array<i64: 128, 128>}]} {
    %c0 = arith.constant 0 : index
    %c0_0 = arith.constant 0 : index
    %0 = vector.load %arg1[%c0, %c0_0] : memref<128x288xbf16, #tpu.memory_space<vmem>>, vector<128x288xbf16>
    %c0_1 = arith.constant 0 : index
    %c0_2 = arith.constant 0 : index
    %1 = vector.load %arg2[%c0_1, %c0_2] : memref<288x128xbf16, #tpu.memory_space<vmem>>, vector<288x128xbf16>
    %cst = arith.constant dense<0.000000e+00> : vector<128x128xf32>
    %2 = tpu.matmul %0, %1, %cst {dimension_numbers = #tpu.dot_dimension_numbers<[1], [0], [0], [1], [0, 0, 1, 1], [], []>} : vector<128x288xbf16>, vector<288x128xbf16>, vector<128x128xf32> -> vector<128x128xf32>
    %cst_3 = arith.constant dense<0.000000e+00> : vector<128xf32>
    %3 = vector.multi_reduction <add>, %2, %cst_3 [0] : vector<128x128xf32> to vector<128xf32>
    %4 = vector.shape_cast %3 : vector<128xf32> to vector<1x128xf32>
    %5 = arith.mulf %2, %2 : vector<128x128xf32>
    %cst_4 = arith.constant dense<0.000000e+00> : vector<128xf32>
    %6 = vector.multi_reduction <add>, %5, %cst_4 [0] : vector<128x128xf32> to vector<128xf32>
    %7 = vector.shape_cast %6 : vector<128xf32> to vector<1x128xf32>
    %cst_5 = arith.constant 7.812500e-03 : f32
    %8 = vector.broadcast %cst_5 : f32 to vector<1x128xf32>
    %9 = arith.mulf %4, %8 : vector<1x128xf32>
    %cst_6 = arith.constant 7.812500e-03 : f32
    %10 = vector.broadcast %cst_6 : f32 to vector<1x128xf32>
    %11 = arith.mulf %7, %10 : vector<1x128xf32>
    %12 = arith.mulf %9, %9 : vector<1x128xf32>
    %13 = arith.subf %11, %12 : vector<1x128xf32>
    %cst_7 = arith.constant 0.000000e+00 : f32
    %14 = vector.broadcast %cst_7 : f32 to vector<1x128xf32>
    %15 = arith.maximumf %13, %14 : vector<1x128xf32>
    %c0_8 = arith.constant 0 : index
    %c0_9 = arith.constant 0 : index
    %16 = vector.load %arg3[%c0_8, %c0_9] : memref<1x128xf32, #tpu.memory_space<vmem>>, vector<1x128xf32>
    %cst_10 = arith.constant 9.99999974E-6 : f32
    %17 = vector.broadcast %cst_10 : f32 to vector<1x128xf32>
    %18 = arith.addf %15, %17 : vector<1x128xf32>
    %19 = math.rsqrt %18 : vector<1x128xf32>
    %20 = arith.mulf %16, %19 : vector<1x128xf32>
    %c0_11 = arith.constant 0 : index
    %c0_12 = arith.constant 0 : index
    %21 = vector.load %arg4[%c0_11, %c0_12] : memref<1x128xf32, #tpu.memory_space<vmem>>, vector<1x128xf32>
    %22 = arith.mulf %9, %20 : vector<1x128xf32>
    %23 = arith.subf %21, %22 : vector<1x128xf32>
    %24 = vector.broadcast %20 : vector<1x128xf32> to vector<128x128xf32>
    %25 = arith.mulf %2, %24 : vector<128x128xf32>
    %26 = vector.broadcast %23 : vector<1x128xf32> to vector<128x128xf32>
    %27 = arith.addf %25, %26 : vector<128x128xf32>
    %cst_13 = arith.constant 0.000000e+00 : f32
    %28 = vector.broadcast %cst_13 : f32 to vector<128x128xf32>
    %29 = arith.maximumf %27, %28 : vector<128x128xf32>
    %c0_14 = arith.constant 0 : index
    %c0_15 = arith.constant 0 : index
    %30 = vector.load %arg5[%c0_14, %c0_15] : memref<128x128xf32, #tpu.memory_space<vmem>>, vector<128x128xf32>
    tpu.vector_store %arg5[%c0_14, %c0_15], %29 {strides = array<i32>} : memref<128x128xf32, #tpu.memory_space<vmem>>, vector<128x128xf32>,
    return
  }
  func.func @transform_0(%arg0: i32) -> (i32, i32) {
    %c0_i32 = arith.constant 0 : i32
    %c0_i32_0 = arith.constant 0 : i32
    %c0_i32_1 = arith.constant 0 : i32
    return %c0_i32, %c0_i32_0 : i32, i32
  }
  func.func @transform_1(%arg0: i32) -> (i32, i32) {
    %c0_i32 = arith.constant 0 : i32
    %c0_i32_0 = arith.constant 0 : i32
    %c0_i32_1 = arith.constant 0 : i32
    return %c0_i32, %c0_i32_0 : i32, i32
  }
  func.func @transform_2(%arg0: i32) -> (i32, i32) {
    %c0_i32 = arith.constant 0 : i32
    %c0_i32_0 = arith.constant 0 : i32
    %c0_i32_1 = arith.constant 0 : i32
    return %c0_i32, %c0_i32_0 : i32, i32
  }
  func.func @transform_3(%arg0: i32) -> (i32, i32) {
    %c0_i32 = arith.constant 0 : i32
    %c0_i32_0 = arith.constant 0 : i32
    %c0_i32_1 = arith.constant 0 : i32
    return %c0_i32, %c0_i32_0 : i32, i32
  }
  func.func @transform_4(%arg0: i32) -> (i32, i32) {
    %c0_i32 = arith.constant 0 : i32
    %c0_i32_0 = arith.constant 0 : i32
    %c0_i32_1 = arith.constant 0 : i32
    return %c0_i32, %c0_i32_0 : i32, i32
  }
}

module attributes {stable_mosaic.version = 11 : i64} {
  func.func @kernel(%arg0: i32, %arg1: memref<512x288xbf16, #tpu.memory_space<vmem>>, %arg2: memref<288x128xbf16, #tpu.memory_space<vmem>>, %arg3: memref<1x128xf32, #tpu.memory_space<vmem>>, %arg4: memref<1x128xf32, #tpu.memory_space<vmem>>, %arg5: memref<512x128xf32, #tpu.memory_space<vmem>>) attributes {dimension_semantics = [#tpu.dimension_semantics<arbitrary>], iteration_bounds = array<i64: 1>, scalar_prefetch = 0 : i64, scratch_operands = 0 : i64, tpu.core_type = #tpu.core_type<tc>, window_params = [{pipeline_mode = #tpu.pipeline_mode<synchronous>, transform_indices = @transform_0, window_bounds = array<i64: 512, 288>}, {pipeline_mode = #tpu.pipeline_mode<synchronous>, transform_indices = @transform_1, window_bounds = array<i64: 288, 128>}, {pipeline_mode = #tpu.pipeline_mode<synchronous>, transform_indices = @transform_2, window_bounds = array<i64: 1, 128>}, {pipeline_mode = #tpu.pipeline_mode<synchronous>, transform_indices = @transform_3, window_bounds = array<i64: 1, 128>}, {pipeline_mode = #tpu.pipeline_mode<synchronous>, transform_indices = @transform_4, window_bounds = array<i64: 512, 128>}]} {
    %c0 = arith.constant 0 : index
    %c0_0 = arith.constant 0 : index
    %0 = vector.load %arg1[%c0, %c0_0] : memref<512x288xbf16, #tpu.memory_space<vmem>>, vector<512x288xbf16>
    %c0_1 = arith.constant 0 : index
    %c0_2 = arith.constant 0 : index
    %1 = vector.load %arg2[%c0_1, %c0_2] : memref<288x128xbf16, #tpu.memory_space<vmem>>, vector<288x128xbf16>
    %cst = arith.constant dense<0.000000e+00> : vector<512x128xf32>
    %2 = tpu.matmul %0, %1, %cst {dimension_numbers = #tpu.dot_dimension_numbers<[1], [0], [0], [1], [0, 0, 1, 1], [], []>} : vector<512x288xbf16>, vector<288x128xbf16>, vector<512x128xf32> -> vector<512x128xf32>
    %cst_3 = arith.constant dense<0.000000e+00> : vector<128xf32>
    %3 = vector.multi_reduction <add>, %2, %cst_3 [0] : vector<512x128xf32> to vector<128xf32>
    %4 = vector.shape_cast %3 : vector<128xf32> to vector<1x128xf32>
    %5 = arith.mulf %2, %2 : vector<512x128xf32>
    %cst_4 = arith.constant dense<0.000000e+00> : vector<128xf32>
    %6 = vector.multi_reduction <add>, %5, %cst_4 [0] : vector<512x128xf32> to vector<128xf32>
    %7 = vector.shape_cast %6 : vector<128xf32> to vector<1x128xf32>
    %cst_5 = arith.constant 0.001953125 : f32
    %8 = vector.broadcast %cst_5 : f32 to vector<1x128xf32>
    %9 = arith.mulf %4, %8 : vector<1x128xf32>
    %cst_6 = arith.constant 0.001953125 : f32
    %10 = vector.broadcast %cst_6 : f32 to vector<1x128xf32>
    %11 = arith.mulf %7, %10 : vector<1x128xf32>
    %12 = arith.mulf %9, %9 : vector<1x128xf32>
    %13 = arith.subf %11, %12 : vector<1x128xf32>
    %cst_7 = arith.constant 0.000000e+00 : f32
    %14 = vector.broadcast %cst_7 : f32 to vector<1x128xf32>
    %15 = arith.maximumf %13, %14 : vector<1x128xf32>
    %c0_8 = arith.constant 0 : index
    %c0_9 = arith.constant 0 : index
    %16 = vector.load %arg3[%c0_8, %c0_9] : memref<1x128xf32, #tpu.memory_space<vmem>>, vector<1x128xf32>
    %cst_10 = arith.constant 9.99999974E-6 : f32
    %17 = vector.broadcast %cst_10 : f32 to vector<1x128xf32>
    %18 = arith.addf %15, %17 : vector<1x128xf32>
    %19 = math.rsqrt %18 : vector<1x128xf32>
    %20 = arith.mulf %16, %19 : vector<1x128xf32>
    %c0_11 = arith.constant 0 : index
    %c0_12 = arith.constant 0 : index
    %21 = vector.load %arg4[%c0_11, %c0_12] : memref<1x128xf32, #tpu.memory_space<vmem>>, vector<1x128xf32>
    %22 = arith.mulf %9, %20 : vector<1x128xf32>
    %23 = arith.subf %21, %22 : vector<1x128xf32>
    %24 = vector.broadcast %20 : vector<1x128xf32> to vector<512x128xf32>
    %25 = arith.mulf %2, %24 : vector<512x128xf32>
    %26 = vector.broadcast %23 : vector<1x128xf32> to vector<512x128xf32>
    %27 = arith.addf %25, %26 : vector<512x128xf32>
    %cst_13 = arith.constant 0.000000e+00 : f32
    %28 = vector.broadcast %cst_13 : f32 to vector<512x128xf32>
    %29 = arith.maximumf %27, %28 : vector<512x128xf32>
    %c0_14 = arith.constant 0 : index
    %c0_15 = arith.constant 0 : index
    %30 = vector.load %arg5[%c0_14, %c0_15] : memref<512x128xf32, #tpu.memory_space<vmem>>, vector<512x128xf32>
    tpu.vector_store %arg5[%c0_14, %c0_15], %29 {strides = array<i32>} : memref<512x128xf32, #tpu.memory_space<vmem>>, vector<512x128xf32>,
    return
  }
  func.func @transform_0(%arg0: i32) -> (i32, i32) {
    %c0_i32 = arith.constant 0 : i32
    %c0_i32_0 = arith.constant 0 : i32
    %c0_i32_1 = arith.constant 0 : i32
    return %c0_i32, %c0_i32_0 : i32, i32
  }
  func.func @transform_1(%arg0: i32) -> (i32, i32) {
    %c0_i32 = arith.constant 0 : i32
    %c0_i32_0 = arith.constant 0 : i32
    %c0_i32_1 = arith.constant 0 : i32
    return %c0_i32, %c0_i32_0 : i32, i32
  }
  func.func @transform_2(%arg0: i32) -> (i32, i32) {
    %c0_i32 = arith.constant 0 : i32
    %c0_i32_0 = arith.constant 0 : i32
    %c0_i32_1 = arith.constant 0 : i32
    return %c0_i32, %c0_i32_0 : i32, i32
  }
  func.func @transform_3(%arg0: i32) -> (i32, i32) {
    %c0_i32 = arith.constant 0 : i32
    %c0_i32_0 = arith.constant 0 : i32
    %c0_i32_1 = arith.constant 0 : i32
    return %c0_i32, %c0_i32_0 : i32, i32
  }
  func.func @transform_4(%arg0: i32) -> (i32, i32) {
    %c0_i32 = arith.constant 0 : i32
    %c0_i32_0 = arith.constant 0 : i32
    %c0_i32_1 = arith.constant 0 : i32
    return %c0_i32, %c0_i32_0 : i32, i32
  }
}

</mosaic_0001>

<llo_original>
// kernel: encdec_forward.8
$region0: #{encdec_forward.8}
  #allocation0 [shape = 'u32[]', space=smem, size = 0x4, offset = 0x4, fixed_abs, tag = 'smem constant byte address 0x4 - core index']
  #allocation1 [shape = 'u32[144,128]{1,0:T(1,128)}', space=vmem, size = 0x12000, scoped, tag = 'internal scratch']
  %s0 = inlined_call_operand.vmem [shape: bf16[128,9], index: 0, kind: input, shape index: {}]
  %s1 = inlined_call_operand.vmem [shape: bf16[9,128], index: 1, kind: input, shape index: {}]
  %s2 = inlined_call_operand.vmem [shape: f32[1,128], index: 2, kind: input, shape index: {}]
  %s3 = inlined_call_operand.vmem [shape: f32[1,128], index: 3, kind: input, shape index: {}]
  %s4 = inlined_call_operand.vmem [shape: f32[128,128], index: 4, kind: output, shape index: {}]
  %s5 = sld [smem:[#allocation0]]
  $region26: #{encdec_forward.8} parent=0
    _
  %s7 = ssub.s32 1, %s5
  %s8 = scalar_select 0, %s7, %s5
  // Predicated region
  $region2: #{encdec_forward.8} parent=0 // pred_check
    _
  $region3: #{encdec_forward.8} parent=0 // pred_check_branch
    %10 = sbr.rel (0) target = $region5
  $region4: #{encdec_forward.8} parent=0 // pred_region
    _
  $region5: #{encdec_forward.8} parent=0 // pred_fallthru
    _
  // Predicated region
  $region6: #{encdec_forward.8} parent=0 // pred_check
    _
  $region7: #{encdec_forward.8} parent=0 // pred_check_branch
    %12 = sbr.rel (0) target = $region9
  $region8: #{encdec_forward.8} parent=0 // pred_region
    _
  $region9: #{encdec_forward.8} parent=0 // pred_fallthru
    _
  // Predicated region
  $region10: #{encdec_forward.8} parent=0 // pred_check
    _
  $region11: #{encdec_forward.8} parent=0 // pred_check_branch
    %14 = sbr.rel (0) target = $region13
  $region12: #{encdec_forward.8} parent=0 // pred_region
    _
  $region13: #{encdec_forward.8} parent=0 // pred_fallthru
    _
  // Predicated region
  $region14: #{encdec_forward.8} parent=0 // pred_check
    _
  $region15: #{encdec_forward.8} parent=0 // pred_check_branch
    %16 = sbr.rel (0) target = $region17
  $region16: #{encdec_forward.8} parent=0 // pred_region
    _
  $region17: #{encdec_forward.8} parent=0 // pred_fallthru
    _
  %v18 = vld [vmem:[%s0] sm:$0xf]
  %v19 = vld [vmem:[%s0 + $0x4] sm:$0xf]
  %v20 = vld [vmem:[%s0 + $0x8] sm:$0xf]
  %v21 = vld [vmem:[%s0 + $0xc] sm:$0xf]
  %v22 = vld [vmem:[%s0 + $0x10] sm:$0xf]
  %v23 = vld [vmem:[%s0 + $0x14] sm:$0xf]
  %v24 = vld [vmem:[%s0 + $0x18] sm:$0xf]
  %v25 = vld [vmem:[%s0 + $0x1c] sm:$0xf]
  %v26 = vld [vmem:[%s0 + $0x20] sm:$0xf]
  %v27 = vld [vmem:[%s0 + $0x24] sm:$0xf]
  %v28 = vld [vmem:[%s0 + $0x28] sm:$0xf]
  %v29 = vld [vmem:[%s0 + $0x2c] sm:$0xf]
  %v30 = vld [vmem:[%s0 + $0x30] sm:$0xf]
  %v31 = vld [vmem:[%s0 + $0x34] sm:$0xf]
  %v32 = vld [vmem:[%s0 + $0x38] sm:$0xf]
  %v33 = vld [vmem:[%s0 + $0x3c] sm:$0xf]
  %v34 = vld [vmem:[%s1] sm:$0xf]
  %v35 = vld [vmem:[%s1 + $0x4] sm:$0x1]
  %v52 = vunpack.c.l.b16 %v18
  %v53 = vunpack.c.l.b16 %v19
  %v54 = vunpack.c.l.b16 %v20
  %v55 = vunpack.c.l.b16 %v21
  %v56 = vunpack.c.l.b16 %v22
  %v57 = vunpack.c.l.b16 %v23
  %v58 = vunpack.c.l.b16 %v24
  %v59 = vunpack.c.l.b16 %v25
  %v60 = vunpack.c.l.b16 %v26
  %v61 = vunpack.c.l.b16 %v27
  %v62 = vunpack.c.l.b16 %v28
  %v63 = vunpack.c.l.b16 %v29
  %v64 = vunpack.c.l.b16 %v30
  %v65 = vunpack.c.l.b16 %v31
  %v66 = vunpack.c.l.b16 %v32
  %v67 = vunpack.c.l.b16 %v33
  %v68 = vpack.c.b16 %v53, %v52
  %v69 = vpack.c.b16 %v55, %v54
  %v70 = vpack.c.b16 %v57, %v56
  %v71 = vpack.c.b16 %v59, %v58
  %v72 = vpack.c.b16 %v61, %v60
  %v73 = vpack.c.b16 %v63, %v62
  %v74 = vpack.c.b16 %v65, %v64
  %v75 = vpack.c.b16 %v67, %v66
  %v78 = vunpack.c.l.b16 %v34
  %v79 = vunpack.c.l.b16 %v35
  %v80 = vpack.c.b16 %v79, %v78
  %vm81 = vcmask 72704
  %v83 = vsel %vm81, %v68, 0
  %v86 = vsel %vm81, %v69, 0
  %v89 = vsel %vm81, %v70, 0
  %v92 = vsel %vm81, %v71, 0
  %v95 = vsel %vm81, %v72, 0
  %v98 = vsel %vm81, %v73, 0
  %v101 = vsel %vm81, %v74, 0
  %v104 = vsel %vm81, %v75, 0
  %vm106 = vcmask 1043456
  %vm107 = vcmask 1044480
  %v108 = vsel %vm106, 4294967295, 65535
  %v109 = vsel %vm107, %v108, 0
  %v111 = vand.u32 %v80, %v109
  %113 = vmatprep.subr.bf16.mxu0 0
  %114 = vmatpush1.bf16.msra.mxu0 0
  %115 = vmatprep.subr.bf16.mxu0 0
  %116 = vmatpush1.bf16.msra.mxu0 0
  %117 = vmatprep.subr.bf16.mxu0 0
  %118 = vmatpush1.bf16.msra.mxu0 0
  %119 = vmatprep.subr.bf16.mxu0 0
  %120 = vmatpush1.bf16.msra.mxu0 0
  %121 = vmatprep.subr.bf16.mxu0 0
  %122 = vmatpush1.bf16.msra.mxu0 0
  %123 = vmatprep.subr.bf16.mxu0 0
  %124 = vmatpush1.bf16.msra.mxu0 0
  %125 = vmatprep.subr.bf16.mxu0 0
  %126 = vmatpush1.bf16.msra.mxu0 0
  %127 = vmatprep.subr.bf16.mxu0 0
  %128 = vmatpush1.bf16.msra.mxu0 %v111
  %129 = vmatprep.subr.bf16.mxu0 0
  %130 = vmatpush2.bf16.msra.mxu0 0
  %131 = vmatprep.subr.bf16.mxu0 0
  %132 = vmatpush2.bf16.msra.mxu0 0
  %133 = vmatprep.subr.bf16.mxu0 0
  %134 = vmatpush2.bf16.msra.mxu0 0
  %135 = vmatprep.subr.bf16.mxu0 0
  %136 = vmatpush2.bf16.msra.mxu0 0
  %137 = vmatprep.subr.bf16.mxu0 0
  %138 = vmatpush2.bf16.msra.mxu0 0
  %139 = vmatprep.subr.bf16.mxu0 0
  %140 = vmatpush2.bf16.msra.mxu0 0
  %141 = vmatprep.subr.bf16.mxu0 0
  %142 = vmatpush2.bf16.msra.mxu0 0
  %143 = vmatprep.subr.bf16.mxu0 0
  %144 = vmatpush2.bf16.msra.mxu0 0
  %145 = vmatprep.mubr.bf16.mxu0 0
  %146 = vmatmul.mubr.bf16.gmra.mxu0 %v83
  %v147 = vpop.f32.mrf.mxu0
  %v148 = vadd.f32 0.0, %v147
  %v149 = vpop.f32.mrf.mxu0
  %v150 = vpop.f32.mrf.mxu0
  %v151 = vadd.f32 0.0, %v150
  %v152 = vpop.f32.mrf.mxu0
  %153 = vmatprep.mubr.bf16.mxu0 0
  %154 = vmatmul.mubr.bf16.gmra.mxu0 %v86
  %v155 = vpop.f32.mrf.mxu0
  %v156 = vadd.f32 0.0, %v155
  %v157 = vpop.f32.mrf.mxu0
  %v158 = vpop.f32.mrf.mxu0
  %v159 = vadd.f32 0.0, %v158
  %v160 = vpop.f32.mrf.mxu0
  %161 = vmatprep.mubr.bf16.mxu0 0
  %162 = vmatmul.mubr.bf16.gmra.mxu0 %v89
  %v163 = vpop.f32.mrf.mxu0
  %v164 = vadd.f32 0.0, %v163
  %v165 = vpop.f32.mrf.mxu0
  %v166 = vpop.f32.mrf.mxu0
  %v167 = vadd.f32 0.0, %v166
  %v168 = vpop.f32.mrf.mxu0
  %169 = vmatprep.mubr.bf16.mxu0 0
  %170 = vmatmul.mubr.bf16.gmra.mxu0 %v92
  %v171 = vpop.f32.mrf.mxu0
  %v172 = vadd.f32 0.0, %v171
  %v173 = vpop.f32.mrf.mxu0
  %v174 = vpop.f32.mrf.mxu0
  %v175 = vadd.f32 0.0, %v174
  %v176 = vpop.f32.mrf.mxu0
  %177 = vmatprep.mubr.bf16.mxu0 0
  %178 = vmatmul.mubr.bf16.gmra.mxu0 %v95
  %v179 = vpop.f32.mrf.mxu0
  %v180 = vadd.f32 0.0, %v179
  %v181 = vpop.f32.mrf.mxu0
  %v182 = vpop.f32.mrf.mxu0
  %v183 = vadd.f32 0.0, %v182
  %v184 = vpop.f32.mrf.mxu0
  %185 = vmatprep.mubr.bf16.mxu0 0
  %186 = vmatmul.mubr.bf16.gmra.mxu0 %v98
  %v187 = vpop.f32.mrf.mxu0
  %v188 = vadd.f32 0.0, %v187
  %v189 = vpop.f32.mrf.mxu0
  %v190 = vpop.f32.mrf.mxu0
  %v191 = vadd.f32 0.0, %v190
  %v192 = vpop.f32.mrf.mxu0
  %193 = vmatprep.mubr.bf16.mxu0 0
  %194 = vmatmul.mubr.bf16.gmra.mxu0 %v101
  %v195 = vpop.f32.mrf.mxu0
  %v196 = vadd.f32 0.0, %v195
  %v197 = vpop.f32.mrf.mxu0
  %v198 = vpop.f32.mrf.mxu0
  %v199 = vadd.f32 0.0, %v198
  %v200 = vpop.f32.mrf.mxu0
  %201 = vmatprep.mubr.bf16.mxu0 0
  %202 = vmatmul.mubr.bf16.gmra.mxu0 %v104
  %v203 = vpop.f32.mrf.mxu0
  %v204 = vadd.f32 0.0, %v203
  %v205 = vpop.f32.mrf.mxu0
  %v206 = vpop.f32.mrf.mxu0
  %v207 = vadd.f32 0.0, %v206
  %v208 = vpop.f32.mrf.mxu0
  %209 = vdwg.mxu0
  %v210 = vadd.f32 %v148, %v151
  %v211 = vadd.f32 %v210, %v156
  %v212 = vadd.f32 %v211, %v159
  %v213 = vadd.f32 %v212, %v164
  %v214 = vadd.f32 %v213, %v167
  %v215 = vadd.f32 %v214, %v172
  %v216 = vadd.f32 %v215, %v175
  %v217 = vadd.f32 %v216, %v180
  %v218 = vadd.f32 %v217, %v183
  %v219 = vadd.f32 %v218, %v188
  %v220 = vadd.f32 %v219, %v191
  %v221 = vadd.f32 %v220, %v196
  %v222 = vadd.f32 %v221, %v199
  %v223 = vadd.f32 %v222, %v204
  %v224 = vadd.f32 %v223, %v207
  %v225 = vrot.slane %v224, 4
  %v226 = vadd.f32 %v224, %v225
  %v227 = vrot.slane %v226, 2
  %v228 = vadd.f32 %v226, %v227
  %v229 = vrot.slane %v228, 1
  %v230 = vadd.f32 %v228, %v229
  %v231 = vmul.f32 %v148, %v148
  %v232 = vmul.f32 %v151, %v151
  %v233 = vmul.f32 %v156, %v156
  %v234 = vmul.f32 %v159, %v159
  %v235 = vmul.f32 %v164, %v164
  %v236 = vmul.f32 %v167, %v167
  %v237 = vmul.f32 %v172, %v172
  %v238 = vmul.f32 %v175, %v175
  %v239 = vmul.f32 %v180, %v180
  %v240 = vmul.f32 %v183, %v183
  %v241 = vmul.f32 %v188, %v188
  %v242 = vmul.f32 %v191, %v191
  %v243 = vmul.f32 %v196, %v196
  %v244 = vmul.f32 %v199, %v199
  %v245 = vmul.f32 %v204, %v204
  %v246 = vmul.f32 %v207, %v207
  %v247 = vadd.f32 %v231, %v232
  %v248 = vadd.f32 %v247, %v233
  %v249 = vadd.f32 %v248, %v234
  %v250 = vadd.f32 %v249, %v235
  %v251 = vadd.f32 %v250, %v236
  %v252 = vadd.f32 %v251, %v237
  %v253 = vadd.f32 %v252, %v238
  %v254 = vadd.f32 %v253, %v239
  %v255 = vadd.f32 %v254, %v240
  %v256 = vadd.f32 %v255, %v241
  %v257 = vadd.f32 %v256, %v242
  %v258 = vadd.f32 %v257, %v243
  %v259 = vadd.f32 %v258, %v244
  %v260 = vadd.f32 %v259, %v245
  %v261 = vadd.f32 %v260, %v246
  %v262 = vrot.slane %v261, 4
  %v263 = vadd.f32 %v261, %v262
  %v264 = vrot.slane %v263, 2
  %v265 = vadd.f32 %v263, %v264
  %v266 = vrot.slane %v265, 1
  %v267 = vadd.f32 %v265, %v266
  %v268 = vmul.f32 %v230, 0.0078125
  %v269 = vmul.f32 %v267, 0.0078125
  %v270 = vmul.f32 %v268, %v268
  %v271 = vsub.f32 %v269, %v270
  %v272 = vmax.f32 %v271, 0.0
  %v273 = vld [vmem:[%s2] sm:$0x1]
  %v274 = vadd.f32 %v272, 1e-05
  %v275 = vrsqrt.pop %v274
  %v276 = vmul.f32 %v273, %v275
  %v277 = vld [vmem:[%s3] sm:$0x1]
  %v278 = vmul.f32 %v268, %v276
  %v279 = vsub.f32 %v277, %v278
  %v281 = vlaneseq
  %v282 = vshrl.u32 %v281, 7
  %v283 = vsub.s32 0, %v282
  %v284 = vrot.slane %v276, %v283
  %v286 = vmul.f32 %v148, %v284
  %v287 = vmul.f32 %v151, %v284
  %v288 = vmul.f32 %v156, %v284
  %v289 = vmul.f32 %v159, %v284
  %v290 = vmul.f32 %v164, %v284
  %v291 = vmul.f32 %v167, %v284
  %v292 = vmul.f32 %v172, %v284
  %v293 = vmul.f32 %v175, %v284
  %v294 = vmul.f32 %v180, %v284
  %v295 = vmul.f32 %v183, %v284
  %v296 = vmul.f32 %v188, %v284
  %v297 = vmul.f32 %v191, %v284
  %v298 = vmul.f32 %v196, %v284
  %v299 = vmul.f32 %v199, %v284
  %v300 = vmul.f32 %v204, %v284
  %v301 = vmul.f32 %v207, %v284
  %v303 = vlaneseq
  %v304 = vshrl.u32 %v303, 7
  %v305 = vsub.s32 0, %v304
  %v306 = vrot.slane %v279, %v305
  %v308 = vadd.f32 %v286, %v306
  %v309 = vadd.f32 %v287, %v306
  %v310 = vadd.f32 %v288, %v306
  %v311 = vadd.f32 %v289, %v306
  %v312 = vadd.f32 %v290, %v306
  %v313 = vadd.f32 %v291, %v306
  %v314 = vadd.f32 %v292, %v306
  %v315 = vadd.f32 %v293, %v306
  %v316 = vadd.f32 %v294, %v306
  %v317 = vadd.f32 %v295, %v306
  %v318 = vadd.f32 %v296, %v306
  %v319 = vadd.f32 %v297, %v306
  %v320 = vadd.f32 %v298, %v306
  %v321 = vadd.f32 %v299, %v306
  %v322 = vadd.f32 %v300, %v306
  %v323 = vadd.f32 %v301, %v306
  %v324 = vmax.f32 %v308, 0.0
  %v325 = vmax.f32 %v309, 0.0
  %v326 = vmax.f32 %v310, 0.0
  %v327 = vmax.f32 %v311, 0.0
  %v328 = vmax.f32 %v312, 0.0
  %v329 = vmax.f32 %v313, 0.0
  %v330 = vmax.f32 %v314, 0.0
  %v331 = vmax.f32 %v315, 0.0
  %v332 = vmax.f32 %v316, 0.0
  %v333 = vmax.f32 %v317, 0.0
  %v334 = vmax.f32 %v318, 0.0
  %v335 = vmax.f32 %v319, 0.0
  %v336 = vmax.f32 %v320, 0.0
  %v337 = vmax.f32 %v321, 0.0
  %v338 = vmax.f32 %v322, 0.0
  %v339 = vmax.f32 %v323, 0.0
  %340 = vst [vmem:[%s4] sm:$0xff] %v324
  %341 = vst [vmem:[%s4 + $0x8] sm:$0xff] %v325
  %342 = vst [vmem:[%s4 + $0x10] sm:$0xff] %v326
  %343 = vst [vmem:[%s4 + $0x18] sm:$0xff] %v327
  %344 = vst [vmem:[%s4 + $0x20] sm:$0xff] %v328
  %345 = vst [vmem:[%s4 + $0x28] sm:$0xff] %v329
  %346 = vst [vmem:[%s4 + $0x30] sm:$0xff] %v330
  %347 = vst [vmem:[%s4 + $0x38] sm:$0xff] %v331
  %348 = vst [vmem:[%s4 + $0x40] sm:$0xff] %v332
  %349 = vst [vmem:[%s4 + $0x48] sm:$0xff] %v333
  %350 = vst [vmem:[%s4 + $0x50] sm:$0xff] %v334
  %351 = vst [vmem:[%s4 + $0x58] sm:$0xff] %v335
  %352 = vst [vmem:[%s4 + $0x60] sm:$0xff] %v336
  %353 = vst [vmem:[%s4 + $0x68] sm:$0xff] %v337
  %354 = vst [vmem:[%s4 + $0x70] sm:$0xff] %v338
  %355 = vst [vmem:[%s4 + $0x78] sm:$0xff] %v339
  // Predicated region
  $region18: #{encdec_forward.8} parent=0 // pred_check
    _
  $region19: #{encdec_forward.8} parent=0 // pred_check_branch
    %357 = sbr.rel (0) target = $region21
  $region20: #{encdec_forward.8} parent=0 // pred_region
    _
  $region21: #{encdec_forward.8} parent=0 // pred_fallthru
    _
  // Predicated region
  $region22: #{encdec_forward.8} parent=0 // pred_check
    _
  $region23: #{encdec_forward.8} parent=0 // pred_check_branch
    %359 = sbr.rel (0) target = $region25
  $region24: #{encdec_forward.8} parent=0 // pred_region
    _
  $region25: #{encdec_forward.8} parent=0 // pred_fallthru
    _

// kernel: encdec_forward.9
$region0: #{encdec_forward.9}
  #allocation0 [shape = 'u32[]', space=smem, size = 0x4, offset = 0x4, fixed_abs, tag = 'smem constant byte address 0x4 - core index']
  #allocation1 [shape = 'u32[144,128]{1,0:T(1,128)}', space=vmem, size = 0x12000, scoped, tag = 'internal scratch']
  %s0 = inlined_call_operand.vmem [shape: bf16[32,144], index: 0, kind: input, shape index: {}]
  %s1 = inlined_call_operand.vmem [shape: bf16[144,128], index: 1, kind: input, shape index: {}]
  %s2 = inlined_call_operand.vmem [shape: f32[1,128], index: 2, kind: input, shape index: {}]
  %s3 = inlined_call_operand.vmem [shape: f32[1,128], index: 3, kind: input, shape index: {}]
  %s4 = inlined_call_operand.vmem [shape: f32[32,128], index: 4, kind: output, shape index: {}]
  %s5 = sld [smem:[#allocation0]]
  $region26: #{encdec_forward.9} parent=0
    _
  %s7 = ssub.s32 1, %s5
  %s8 = scalar_select 0, %s7, %s5
  // Predicated region
  $region2: #{encdec_forward.9} parent=0 // pred_check
    _
  $region3: #{encdec_forward.9} parent=0 // pred_check_branch
    %10 = sbr.rel (0) target = $region5
  $region4: #{encdec_forward.9} parent=0 // pred_region
    _
  $region5: #{encdec_forward.9} parent=0 // pred_fallthru
    _
  // Predicated region
  $region6: #{encdec_forward.9} parent=0 // pred_check
    _
  $region7: #{encdec_forward.9} parent=0 // pred_check_branch
    %12 = sbr.rel (0) target = $region9
  $region8: #{encdec_forward.9} parent=0 // pred_region
    _
  $region9: #{encdec_forward.9} parent=0 // pred_fallthru
    _
  // Predicated region
  $region10: #{encdec_forward.9} parent=0 // pred_check
    _
  $region11: #{encdec_forward.9} parent=0 // pred_check_branch
    %14 = sbr.rel (0) target = $region13
  $region12: #{encdec_forward.9} parent=0 // pred_region
    _
  $region13: #{encdec_forward.9} parent=0 // pred_fallthru
    _
  // Predicated region
  $region14: #{encdec_forward.9} parent=0 // pred_check
    _
  $region15: #{encdec_forward.9} parent=0 // pred_check_branch
    %16 = sbr.rel (0) target = $region17
  $region16: #{encdec_forward.9} parent=0 // pred_region
    _
  $region17: #{encdec_forward.9} parent=0 // pred_fallthru
    _
  %v18 = vld [vmem:[%s0] sm:$0xff]
  %v19 = vld [vmem:[%s0 + $0x8] sm:$0xff]
  %v20 = vld [vmem:[%s0 + $0x10] sm:$0xff]
  %v21 = vld [vmem:[%s0 + $0x18] sm:$0xff]
  %v22 = vld [vmem:[%s1] sm:$0xf]
  %v23 = vld [vmem:[%s1 + $0x4] sm:$0xf]
  %v24 = vld [vmem:[%s1 + $0x8] sm:$0xf]
  %v25 = vld [vmem:[%s1 + $0xc] sm:$0xf]
  %v26 = vld [vmem:[%s1 + $0x10] sm:$0xf]
  %v27 = vld [vmem:[%s1 + $0x14] sm:$0xf]
  %v28 = vld [vmem:[%s1 + $0x18] sm:$0xf]
  %v29 = vld [vmem:[%s1 + $0x1c] sm:$0xf]
  %v30 = vld [vmem:[%s1 + $0x20] sm:$0xf]
  %v31 = vld [vmem:[%s1 + $0x24] sm:$0xf]
  %v32 = vld [vmem:[%s1 + $0x28] sm:$0xf]
  %v33 = vld [vmem:[%s1 + $0x2c] sm:$0xf]
  %v34 = vld [vmem:[%s1 + $0x30] sm:$0xf]
  %v35 = vld [vmem:[%s1 + $0x34] sm:$0xf]
  %v36 = vld [vmem:[%s1 + $0x38] sm:$0xf]
  %v37 = vld [vmem:[%s1 + $0x3c] sm:$0xf]
  %v38 = vld [vmem:[%s1 + $0x40] sm:$0xf]
  %v39 = vld [vmem:[%s1 + $0x44] sm:$0xf]
  %v44 = vunpack.c.l.b16 %v18
  %v45 = vunpack.c.h.b16 %v18
  %v46 = vunpack.c.l.b16 %v19
  %v47 = vunpack.c.h.b16 %v19
  %v48 = vunpack.c.l.b16 %v20
  %v49 = vunpack.c.h.b16 %v20
  %v50 = vunpack.c.l.b16 %v21
  %v51 = vunpack.c.h.b16 %v21
  %v52 = vpack.c.b16 %v46, %v44
  %v53 = vpack.c.b16 %v47, %v45
  %v54 = vpack.c.b16 %v50, %v48
  %v55 = vpack.c.b16 %v51, %v49
  %v76 = vunpack.c.l.b16 %v22
  %v77 = vunpack.c.l.b16 %v23
  %v78 = vunpack.c.l.b16 %v24
  %v79 = vunpack.c.l.b16 %v25
  %v80 = vunpack.c.l.b16 %v26
  %v81 = vunpack.c.l.b16 %v27
  %v82 = vunpack.c.l.b16 %v28
  %v83 = vunpack.c.l.b16 %v29
  %v84 = vunpack.c.l.b16 %v30
  %v85 = vunpack.c.l.b16 %v31
  %v86 = vunpack.c.l.b16 %v32
  %v87 = vunpack.c.l.b16 %v33
  %v88 = vunpack.c.l.b16 %v34
  %v89 = vunpack.c.l.b16 %v35
  %v90 = vunpack.c.l.b16 %v36
  %v91 = vunpack.c.l.b16 %v37
  %v92 = vunpack.c.l.b16 %v38
  %v93 = vunpack.c.l.b16 %v39
  %v94 = vpack.c.b16 %v77, %v76
  %v95 = vpack.c.b16 %v79, %v78
  %v96 = vpack.c.b16 %v81, %v80
  %v97 = vpack.c.b16 %v83, %v82
  %v98 = vpack.c.b16 %v85, %v84
  %v99 = vpack.c.b16 %v87, %v86
  %v100 = vpack.c.b16 %v89, %v88
  %v101 = vpack.c.b16 %v91, %v90
  %v102 = vpack.c.b16 %v93, %v92
  %vm112 = vcmask 130048
  %v114 = vsel %vm112, %v53, 0
  %v117 = vsel %vm112, %v55, 0
  %119 = vmatprep.subr.bf16.mxu0 0
  %120 = vmatpush1.bf16.msra.mxu0 %v101
  %121 = vmatprep.subr.bf16.mxu0 0
  %122 = vmatpush1.bf16.msra.mxu0 %v100
  %123 = vmatprep.subr.bf16.mxu0 0
  %124 = vmatpush1.bf16.msra.mxu0 %v99
  %125 = vmatprep.subr.bf16.mxu0 0
  %126 = vmatpush1.bf16.msra.mxu0 %v98
  %127 = vmatprep.subr.bf16.mxu0 0
  %128 = vmatpush1.bf16.msra.mxu0 %v97
  %129 = vmatprep.subr.bf16.mxu0 0
  %130 = vmatpush1.bf16.msra.mxu0 %v96
  %131 = vmatprep.subr.bf16.mxu0 0
  %132 = vmatpush1.bf16.msra.mxu0 %v95
  %133 = vmatprep.subr.bf16.mxu0 0
  %134 = vmatpush1.bf16.msra.mxu0 %v94
  %135 = vmatprep.subr.bf16.mxu0 0
  %136 = vmatpush2.bf16.msra.mxu0 0
  %137 = vmatprep.subr.bf16.mxu0 0
  %138 = vmatpush2.bf16.msra.mxu0 0
  %139 = vmatprep.subr.bf16.mxu0 0
  %140 = vmatpush2.bf16.msra.mxu0 0
  %141 = vmatprep.subr.bf16.mxu0 0
  %142 = vmatpush2.bf16.msra.mxu0 0
  %143 = vmatprep.subr.bf16.mxu0 0
  %144 = vmatpush2.bf16.msra.mxu0 0
  %145 = vmatprep.subr.bf16.mxu0 0
  %146 = vmatpush2.bf16.msra.mxu0 0
  %147 = vmatprep.subr.bf16.mxu0 0
  %148 = vmatpush2.bf16.msra.mxu0 0
  %149 = vmatprep.subr.bf16.mxu0 0
  %150 = vmatpush2.bf16.msra.mxu0 %v102
  %151 = vmatprep.mubr.bf16.mxu0 %v114
  %152 = vmatmul.mubr.bf16.gmra.mxu0 %v52
  %v153 = vpop.f32.mrf.mxu0
  %v154 = vadd.f32 0.0, %v153
  %v155 = vpop.f32.mrf.mxu0
  %v156 = vpop.f32.mrf.mxu0
  %v157 = vadd.f32 0.0, %v156
  %v158 = vpop.f32.mrf.mxu0
  %159 = vmatprep.mubr.bf16.mxu0 %v117
  %160 = vmatmul.mubr.bf16.gmra.mxu0 %v54
  %v161 = vpop.f32.mrf.mxu0
  %v162 = vadd.f32 0.0, %v161
  %v163 = vpop.f32.mrf.mxu0
  %v164 = vpop.f32.mrf.mxu0
  %v165 = vadd.f32 0.0, %v164
  %v166 = vpop.f32.mrf.mxu0
  %167 = vdwg.mxu0
  %v168 = vadd.f32 %v154, %v157
  %v169 = vadd.f32 %v168, %v162
  %v170 = vadd.f32 %v169, %v165
  %v171 = vrot.slane %v170, 4
  %v172 = vadd.f32 %v170, %v171
  %v173 = vrot.slane %v172, 2
  %v174 = vadd.f32 %v172, %v173
  %v175 = vrot.slane %v174, 1
  %v176 = vadd.f32 %v174, %v175
  %v177 = vmul.f32 %v154, %v154
  %v178 = vmul.f32 %v157, %v157
  %v179 = vmul.f32 %v162, %v162
  %v180 = vmul.f32 %v165, %v165
  %v181 = vadd.f32 %v177, %v178
  %v182 = vadd.f32 %v181, %v179
  %v183 = vadd.f32 %v182, %v180
  %v184 = vrot.slane %v183, 4
  %v185 = vadd.f32 %v183, %v184
  %v186 = vrot.slane %v185, 2
  %v187 = vadd.f32 %v185, %v186
  %v188 = vrot.slane %v187, 1
  %v189 = vadd.f32 %v187, %v188
  %v190 = vmul.f32 %v176, 0.03125
  %v191 = vmul.f32 %v189, 0.03125
  %v192 = vmul.f32 %v190, %v190
  %v193 = vsub.f32 %v191, %v192
  %v194 = vmax.f32 %v193, 0.0
  %v195 = vld [vmem:[%s2] sm:$0x1]
  %v196 = vadd.f32 %v194, 1e-05
  %v197 = vrsqrt.pop %v196
  %v198 = vmul.f32 %v195, %v197
  %v199 = vld [vmem:[%s3] sm:$0x1]
  %v200 = vmul.f32 %v190, %v198
  %v201 = vsub.f32 %v199, %v200
  %v203 = vlaneseq
  %v204 = vshrl.u32 %v203, 7
  %v205 = vsub.s32 0, %v204
  %v206 = vrot.slane %v198, %v205
  %v208 = vmul.f32 %v154, %v206
  %v209 = vmul.f32 %v157, %v206
  %v210 = vmul.f32 %v162, %v206
  %v211 = vmul.f32 %v165, %v206
  %v213 = vlaneseq
  %v214 = vshrl.u32 %v213, 7
  %v215 = vsub.s32 0, %v214
  %v216 = vrot.slane %v201, %v215
  %v218 = vadd.f32 %v208, %v216
  %v219 = vadd.f32 %v209, %v216
  %v220 = vadd.f32 %v210, %v216
  %v221 = vadd.f32 %v211, %v216
  %v222 = vmax.f32 %v218, 0.0
  %v223 = vmax.f32 %v219, 0.0
  %v224 = vmax.f32 %v220, 0.0
  %v225 = vmax.f32 %v221, 0.0
  %226 = vst [vmem:[%s4] sm:$0xff] %v222
  %227 = vst [vmem:[%s4 + $0x8] sm:$0xff] %v223
  %228 = vst [vmem:[%s4 + $0x10] sm:$0xff] %v224
  %229 = vst [vmem:[%s4 + $0x18] sm:$0xff] %v225
  // Predicated region
  $region18: #{encdec_forward.9} parent=0 // pred_check
    _
  $region19: #{encdec_forward.9} parent=0 // pred_check_branch
    %231 = sbr.rel (0) target = $region21
  $region20: #{encdec_forward.9} parent=0 // pred_region
    _
  $region21: #{encdec_forward.9} parent=0 // pred_fallthru
    _
  // Predicated region
  $region22: #{encdec_forward.9} parent=0 // pred_check
    _
  $region23: #{encdec_forward.9} parent=0 // pred_check_branch
    %233 = sbr.rel (0) target = $region25
  $region24: #{encdec_forward.9} parent=0 // pred_region
    _
  $region25: #{encdec_forward.9} parent=0 // pred_fallthru
    _

// kernel: encdec_forward.10
$region0: #{encdec_forward.10}
  #allocation0 [shape = 'u32[]', space=smem, size = 0x4, offset = 0x4, fixed_abs, tag = 'smem constant byte address 0x4 - core index']
  #allocation1 [shape = 'u32[144,128]{1,0:T(1,128)}', space=vmem, size = 0x12000, scoped, tag = 'internal scratch']
  %s0 = inlined_call_operand.vmem [shape: bf16[8,288], index: 0, kind: input, shape index: {}]
  %s1 = inlined_call_operand.vmem [shape: bf16[288,128], index: 1, kind: input, shape index: {}]
  %s2 = inlined_call_operand.vmem [shape: f32[1,128], index: 2, kind: input, shape index: {}]
  %s3 = inlined_call_operand.vmem [shape: f32[1,128], index: 3, kind: input, shape index: {}]
  %s4 = inlined_call_operand.vmem [shape: f32[8,128], index: 4, kind: output, shape index: {}]
  %s5 = sld [smem:[#allocation0]]
  $region26: #{encdec_forward.10} parent=0
    _
  %s7 = ssub.s32 1, %s5
  %s8 = scalar_select 0, %s7, %s5
  // Predicated region
  $region2: #{encdec_forward.10} parent=0 // pred_check
    _
  $region3: #{encdec_forward.10} parent=0 // pred_check_branch
    %10 = sbr.rel (0) target = $region5
  $region4: #{encdec_forward.10} parent=0 // pred_region
    _
  $region5: #{encdec_forward.10} parent=0 // pred_fallthru
    _
  // Predicated region
  $region6: #{encdec_forward.10} parent=0 // pred_check
    _
  $region7: #{encdec_forward.10} parent=0 // pred_check_branch
    %12 = sbr.rel (0) target = $region9
  $region8: #{encdec_forward.10} parent=0 // pred_region
    _
  $region9: #{encdec_forward.10} parent=0 // pred_fallthru
    _
  // Predicated region
  $region10: #{encdec_forward.10} parent=0 // pred_check
    _
  $region11: #{encdec_forward.10} parent=0 // pred_check_branch
    %14 = sbr.rel (0) target = $region13
  $region12: #{encdec_forward.10} parent=0 // pred_region
    _
  $region13: #{encdec_forward.10} parent=0 // pred_fallthru
    _
  // Predicated region
  $region14: #{encdec_forward.10} parent=0 // pred_check
    _
  $region15: #{encdec_forward.10} parent=0 // pred_check_branch
    %16 = sbr.rel (0) target = $region17
  $region16: #{encdec_forward.10} parent=0 // pred_region
    _
  $region17: #{encdec_forward.10} parent=0 // pred_fallthru
    _
  %v18 = vld [vmem:[%s0] sm:$0xff]
  %v19 = vld [vmem:[%s0 + $0x8] sm:$0xf]
  %v20 = vld [vmem:[%s1] sm:$0xf]
  %v21 = vld [vmem:[%s1 + $0x4] sm:$0xf]
  %v22 = vld [vmem:[%s1 + $0x8] sm:$0xf]
  %v23 = vld [vmem:[%s1 + $0xc] sm:$0xf]
  %v24 = vld [vmem:[%s1 + $0x10] sm:$0xf]
  %v25 = vld [vmem:[%s1 + $0x14] sm:$0xf]
  %v26 = vld [vmem:[%s1 + $0x18] sm:$0xf]
  %v27 = vld [vmem:[%s1 + $0x1c] sm:$0xf]
  %v28 = vld [vmem:[%s1 + $0x20] sm:$0xf]
  %v29 = vld [vmem:[%s1 + $0x24] sm:$0xf]
  %v30 = vld [vmem:[%s1 + $0x28] sm:$0xf]
  %v31 = vld [vmem:[%s1 + $0x2c] sm:$0xf]
  %v32 = vld [vmem:[%s1 + $0x30] sm:$0xf]
  %v33 = vld [vmem:[%s1 + $0x34] sm:$0xf]
  %v34 = vld [vmem:[%s1 + $0x38] sm:$0xf]
  %v35 = vld [vmem:[%s1 + $0x3c] sm:$0xf]
  %v36 = vld [vmem:[%s1 + $0x40] sm:$0xf]
  %v37 = vld [vmem:[%s1 + $0x44] sm:$0xf]
  %v38 = vld [vmem:[%s1 + $0x48] sm:$0xf]
  %v39 = vld [vmem:[%s1 + $0x4c] sm:$0xf]
  %v40 = vld [vmem:[%s1 + $0x50] sm:$0xf]
  %v41 = vld [vmem:[%s1 + $0x54] sm:$0xf]
  %v42 = vld [vmem:[%s1 + $0x58] sm:$0xf]
  %v43 = vld [vmem:[%s1 + $0x5c] sm:$0xf]
  %v44 = vld [vmem:[%s1 + $0x60] sm:$0xf]
  %v45 = vld [vmem:[%s1 + $0x64] sm:$0xf]
  %v46 = vld [vmem:[%s1 + $0x68] sm:$0xf]
  %v47 = vld [vmem:[%s1 + $0x6c] sm:$0xf]
  %v48 = vld [vmem:[%s1 + $0x70] sm:$0xf]
  %v49 = vld [vmem:[%s1 + $0x74] sm:$0xf]
  %v50 = vld [vmem:[%s1 + $0x78] sm:$0xf]
  %v51 = vld [vmem:[%s1 + $0x7c] sm:$0xf]
  %v52 = vld [vmem:[%s1 + $0x80] sm:$0xf]
  %v53 = vld [vmem:[%s1 + $0x84] sm:$0xf]
  %v54 = vld [vmem:[%s1 + $0x88] sm:$0xf]
  %v55 = vld [vmem:[%s1 + $0x8c] sm:$0xf]
  %v58 = vunpack.c.l.b16 %v18
  %v59 = vunpack.c.h.b16 %v18
  %v60 = vunpack.c.l.b16 %v19
  %v61 = vpack.c.b16 %v58, %v58
  %v62 = vpack.c.b16 %v59, %v59
  %v63 = vpack.c.b16 %v60, %v60
  %v102 = vunpack.c.l.b16 %v20
  %v103 = vunpack.c.l.b16 %v21
  %v104 = vunpack.c.l.b16 %v22
  %v105 = vunpack.c.l.b16 %v23
  %v106 = vunpack.c.l.b16 %v24
  %v107 = vunpack.c.l.b16 %v25
  %v108 = vunpack.c.l.b16 %v26
  %v109 = vunpack.c.l.b16 %v27
  %v110 = vunpack.c.l.b16 %v28
  %v111 = vunpack.c.l.b16 %v29
  %v112 = vunpack.c.l.b16 %v30
  %v113 = vunpack.c.l.b16 %v31
  %v114 = vunpack.c.l.b16 %v32
  %v115 = vunpack.c.l.b16 %v33
  %v116 = vunpack.c.l.b16 %v34
  %v117 = vunpack.c.l.b16 %v35
  %v118 = vunpack.c.l.b16 %v36
  %v119 = vunpack.c.l.b16 %v37
  %v120 = vunpack.c.l.b16 %v38
  %v121 = vunpack.c.l.b16 %v39
  %v122 = vunpack.c.l.b16 %v40
  %v123 = vunpack.c.l.b16 %v41
  %v124 = vunpack.c.l.b16 %v42
  %v125 = vunpack.c.l.b16 %v43
  %v126 = vunpack.c.l.b16 %v44
  %v127 = vunpack.c.l.b16 %v45
  %v128 = vunpack.c.l.b16 %v46
  %v129 = vunpack.c.l.b16 %v47
  %v130 = vunpack.c.l.b16 %v48
  %v131 = vunpack.c.l.b16 %v49
  %v132 = vunpack.c.l.b16 %v50
  %v133 = vunpack.c.l.b16 %v51
  %v134 = vunpack.c.l.b16 %v52
  %v135 = vunpack.c.l.b16 %v53
  %v136 = vunpack.c.l.b16 %v54
  %v137 = vunpack.c.l.b16 %v55
  %v138 = vpack.c.b16 %v103, %v102
  %v139 = vpack.c.b16 %v105, %v104
  %v140 = vpack.c.b16 %v107, %v106
  %v141 = vpack.c.b16 %v109, %v108
  %v142 = vpack.c.b16 %v111, %v110
  %v143 = vpack.c.b16 %v113, %v112
  %v144 = vpack.c.b16 %v115, %v114
  %v145 = vpack.c.b16 %v117, %v116
  %v146 = vpack.c.b16 %v119, %v118
  %v147 = vpack.c.b16 %v121, %v120
  %v148 = vpack.c.b16 %v123, %v122
  %v149 = vpack.c.b16 %v125, %v124
  %v150 = vpack.c.b16 %v127, %v126
  %v151 = vpack.c.b16 %v129, %v128
  %v152 = vpack.c.b16 %v131, %v130
  %v153 = vpack.c.b16 %v133, %v132
  %v154 = vpack.c.b16 %v135, %v134
  %v155 = vpack.c.b16 %v137, %v136
  %vm174 = vcmask 261120
  %v176 = vsel %vm174, %v63, 0
  %178 = vmatprep.subr.bf16.mxu0 0
  %179 = vmatpush1.bf16.msra.mxu0 %v145
  %180 = vmatprep.subr.bf16.mxu0 0
  %181 = vmatpush1.bf16.msra.mxu0 %v144
  %182 = vmatprep.subr.bf16.mxu0 0
  %183 = vmatpush1.bf16.msra.mxu0 %v143
  %184 = vmatprep.subr.bf16.mxu0 0
  %185 = vmatpush1.bf16.msra.mxu0 %v142
  %186 = vmatprep.subr.bf16.mxu0 0
  %187 = vmatpush1.bf16.msra.mxu0 %v141
  %188 = vmatprep.subr.bf16.mxu0 0
  %189 = vmatpush1.bf16.msra.mxu0 %v140
  %190 = vmatprep.subr.bf16.mxu0 0
  %191 = vmatpush1.bf16.msra.mxu0 %v139
  %192 = vmatprep.subr.bf16.mxu0 0
  %193 = vmatpush1.bf16.msra.mxu0 %v138
  %194 = vmatprep.subr.bf16.mxu0 0
  %195 = vmatpush2.bf16.msra.mxu0 %v153
  %196 = vmatprep.subr.bf16.mxu0 0
  %197 = vmatpush2.bf16.msra.mxu0 %v152
  %198 = vmatprep.subr.bf16.mxu0 0
  %199 = vmatpush2.bf16.msra.mxu0 %v151
  %200 = vmatprep.subr.bf16.mxu0 0
  %201 = vmatpush2.bf16.msra.mxu0 %v150
  %202 = vmatprep.subr.bf16.mxu0 0
  %203 = vmatpush2.bf16.msra.mxu0 %v149
  %204 = vmatprep.subr.bf16.mxu0 0
  %205 = vmatpush2.bf16.msra.mxu0 %v148
  %206 = vmatprep.subr.bf16.mxu0 0
  %207 = vmatpush2.bf16.msra.mxu0 %v147
  %208 = vmatprep.subr.bf16.mxu0 0
  %209 = vmatpush2.bf16.msra.mxu0 %v146
  %210 = vmatprep.mubr.bf16.mxu0 %v62
  %211 = vmatmul.mubr.bf16.gmra.mxu0 %v61
  %v212 = vpop.f32.mrf.mxu0
  %v213 = vadd.f32 0.0, %v212
  %v214 = vpop.f32.mrf.mxu0
  %v215 = vpop.f32.mrf.mxu0
  %v216 = vpop.f32.mrf.mxu0
  %217 = vdwg.mxu0
  %218 = vmatprep.subr.bf16.mxu0 0
  %219 = vmatpush1.bf16.msra.mxu0 0
  %220 = vmatprep.subr.bf16.mxu0 0
  %221 = vmatpush1.bf16.msra.mxu0 0
  %222 = vmatprep.subr.bf16.mxu0 0
  %223 = vmatpush1.bf16.msra.mxu0 0
  %224 = vmatprep.subr.bf16.mxu0 0
  %225 = vmatpush1.bf16.msra.mxu0 0
  %226 = vmatprep.subr.bf16.mxu0 0
  %227 = vmatpush1.bf16.msra.mxu0 0
  %228 = vmatprep.subr.bf16.mxu0 0
  %229 = vmatpush1.bf16.msra.mxu0 0
  %230 = vmatprep.subr.bf16.mxu0 0
  %231 = vmatpush1.bf16.msra.mxu0 %v155
  %232 = vmatprep.subr.bf16.mxu0 0
  %233 = vmatpush1.bf16.msra.mxu0 %v154
  %234 = vmatprep.subr.bf16.mxu0 0
  %235 = vmatpush2.bf16.msra.mxu0 0
  %236 = vmatprep.subr.bf16.mxu0 0
  %237 = vmatpush2.bf16.msra.mxu0 0
  %238 = vmatprep.subr.bf16.mxu0 0
  %239 = vmatpush2.bf16.msra.mxu0 0
  %240 = vmatprep.subr.bf16.mxu0 0
  %241 = vmatpush2.bf16.msra.mxu0 0
  %242 = vmatprep.subr.bf16.mxu0 0
  %243 = vmatpush2.bf16.msra.mxu0 0
  %244 = vmatprep.subr.bf16.mxu0 0
  %245 = vmatpush2.bf16.msra.mxu0 0
  %246 = vmatprep.subr.bf16.mxu0 0
  %247 = vmatpush2.bf16.msra.mxu0 0
  %248 = vmatprep.subr.bf16.mxu0 0
  %249 = vmatpush2.bf16.msra.mxu0 0
  %250 = vmatprep.mubr.bf16.mxu0 0
  %251 = vmatmul.mubr.bf16.gmra.mxu0 %v176
  %v252 = vpop.f32.mrf.mxu0
  %v253 = vadd.f32 %v213, %v252
  %v254 = vpop.f32.mrf.mxu0
  %v255 = vpop.f32.mrf.mxu0
  %v256 = vpop.f32.mrf.mxu0
  %257 = vdwg.mxu0
  %v258 = vrot.slane %v253, 4
  %v259 = vadd.f32 %v253, %v258
  %v260 = vrot.slane %v259, 2
  %v261 = vadd.f32 %v259, %v260
  %v262 = vrot.slane %v261, 1
  %v263 = vadd.f32 %v261, %v262
  %v264 = vmul.f32 %v253, %v253
  %v265 = vrot.slane %v264, 4
  %v266 = vadd.f32 %v264, %v265
  %v267 = vrot.slane %v266, 2
  %v268 = vadd.f32 %v266, %v267
  %v269 = vrot.slane %v268, 1
  %v270 = vadd.f32 %v268, %v269
  %v271 = vmul.f32 %v263, 0.125
  %v272 = vmul.f32 %v270, 0.125
  %v273 = vmul.f32 %v271, %v271
  %v274 = vsub.f32 %v272, %v273
  %v275 = vmax.f32 %v274, 0.0
  %v276 = vld [vmem:[%s2] sm:$0x1]
  %v277 = vadd.f32 %v275, 1e-05
  %v278 = vrsqrt.pop %v277
  %v279 = vmul.f32 %v276, %v278
  %v280 = vld [vmem:[%s3] sm:$0x1]
  %v281 = vmul.f32 %v271, %v279
  %v282 = vsub.f32 %v280, %v281
  %v284 = vlaneseq
  %v285 = vshrl.u32 %v284, 7
  %v286 = vsub.s32 0, %v285
  %v287 = vrot.slane %v279, %v286
  %v289 = vmul.f32 %v253, %v287
  %v291 = vlaneseq
  %v292 = vshrl.u32 %v291, 7
  %v293 = vsub.s32 0, %v292
  %v294 = vrot.slane %v282, %v293
  %v296 = vadd.f32 %v289, %v294
  %v297 = vmax.f32 %v296, 0.0
  %298 = vst [vmem:[%s4] sm:$0xff] %v297
  // Predicated region
  $region18: #{encdec_forward.10} parent=0 // pred_check
    _
  $region19: #{encdec_forward.10} parent=0 // pred_check_branch
    %300 = sbr.rel (0) target = $region21
  $region20: #{encdec_forward.10} parent=0 // pred_region
    _
  $region21: #{encdec_forward.10} parent=0 // pred_fallthru
    _
  // Predicated region
  $region22: #{encdec_forward.10} parent=0 // pred_check
    _
  $region23: #{encdec_forward.10} parent=0 // pred_check_branch
    %302 = sbr.rel (0) target = $region25
  $region24: #{encdec_forward.10} parent=0 // pred_region
    _
  $region25: #{encdec_forward.10} parent=0 // pred_fallthru
    _

// kernel: encdec_forward.11
$region0: #{encdec_forward.11}
  #allocation0 [shape = 'u32[]', space=smem, size = 0x4, offset = 0x4, fixed_abs, tag = 'smem constant byte address 0x4 - core index']
  #allocation1 [shape = 'u32[144,128]{1,0:T(1,128)}', space=vmem, size = 0x12000, scoped, tag = 'internal scratch']
  %s0 = inlined_call_operand.vmem [shape: bf16[8,576], index: 0, kind: input, shape index: {}]
  %s1 = inlined_call_operand.vmem [shape: bf16[576,128], index: 1, kind: input, shape index: {}]
  %s2 = inlined_call_operand.vmem [shape: f32[1,128], index: 2, kind: input, shape index: {}]
  %s3 = inlined_call_operand.vmem [shape: f32[1,128], index: 3, kind: input, shape index: {}]
  %s4 = inlined_call_operand.vmem [shape: f32[8,128], index: 4, kind: output, shape index: {}]
  %s5 = sld [smem:[#allocation0]]
  $region26: #{encdec_forward.11} parent=0
    _
  %s7 = ssub.s32 1, %s5
  %s8 = scalar_select 0, %s7, %s5
  // Predicated region
  $region2: #{encdec_forward.11} parent=0 // pred_check
    _
  $region3: #{encdec_forward.11} parent=0 // pred_check_branch
    %10 = sbr.rel (0) target = $region5
  $region4: #{encdec_forward.11} parent=0 // pred_region
    _
  $region5: #{encdec_forward.11} parent=0 // pred_fallthru
    _
  // Predicated region
  $region6: #{encdec_forward.11} parent=0 // pred_check
    _
  $region7: #{encdec_forward.11} parent=0 // pred_check_branch
    %12 = sbr.rel (0) target = $region9
  $region8: #{encdec_forward.11} parent=0 // pred_region
    _
  $region9: #{encdec_forward.11} parent=0 // pred_fallthru
    _
  // Predicated region
  $region10: #{encdec_forward.11} parent=0 // pred_check
    _
  $region11: #{encdec_forward.11} parent=0 // pred_check_branch
    %14 = sbr.rel (0) target = $region13
  $region12: #{encdec_forward.11} parent=0 // pred_region
    _
  $region13: #{encdec_forward.11} parent=0 // pred_fallthru
    _
  // Predicated region
  $region14: #{encdec_forward.11} parent=0 // pred_check
    _
  $region15: #{encdec_forward.11} parent=0 // pred_check_branch
    %16 = sbr.rel (0) target = $region17
  $region16: #{encdec_forward.11} parent=0 // pred_region
    _
  $region17: #{encdec_forward.11} parent=0 // pred_fallthru
    _
  %v18 = vld [vmem:[%s0] sm:$0xff]
  %v19 = vld [vmem:[%s0 + $0x8] sm:$0xff]
  %v20 = vld [vmem:[%s0 + $0x10] sm:$0xf]
  %v21 = vld [vmem:[%s1] sm:$0xf]
  %v22 = vld [vmem:[%s1 + $0x4] sm:$0xf]
  %v23 = vld [vmem:[%s1 + $0x8] sm:$0xf]
  %v24 = vld [vmem:[%s1 + $0xc] sm:$0xf]
  %v25 = vld [vmem:[%s1 + $0x10] sm:$0xf]
  %v26 = vld [vmem:[%s1 + $0x14] sm:$0xf]
  %v27 = vld [vmem:[%s1 + $0x18] sm:$0xf]
  %v28 = vld [vmem:[%s1 + $0x1c] sm:$0xf]
  %v29 = vld [vmem:[%s1 + $0x20] sm:$0xf]
  %v30 = vld [vmem:[%s1 + $0x24] sm:$0xf]
  %v31 = vld [vmem:[%s1 + $0x28] sm:$0xf]
  %v32 = vld [vmem:[%s1 + $0x2c] sm:$0xf]
  %v33 = vld [vmem:[%s1 + $0x30] sm:$0xf]
  %v34 = vld [vmem:[%s1 + $0x34] sm:$0xf]
  %v35 = vld [vmem:[%s1 + $0x38] sm:$0xf]
  %v36 = vld [vmem:[%s1 + $0x3c] sm:$0xf]
  %v37 = vld [vmem:[%s1 + $0x40] sm:$0xf]
  %v38 = vld [vmem:[%s1 + $0x44] sm:$0xf]
  %v39 = vld [vmem:[%s1 + $0x48] sm:$0xf]
  %v40 = vld [vmem:[%s1 + $0x4c] sm:$0xf]
  %v41 = vld [vmem:[%s1 + $0x50] sm:$0xf]
  %v42 = vld [vmem:[%s1 + $0x54] sm:$0xf]
  %v43 = vld [vmem:[%s1 + $0x58] sm:$0xf]
  %v44 = vld [vmem:[%s1 + $0x5c] sm:$0xf]
  %v45 = vld [vmem:[%s1 + $0x60] sm:$0xf]
  %v46 = vld [vmem:[%s1 + $0x64] sm:$0xf]
  %v47 = vld [vmem:[%s1 + $0x68] sm:$0xf]
  %v48 = vld [vmem:[%s1 + $0x6c] sm:$0xf]
  %v49 = vld [vmem:[%s1 + $0x70] sm:$0xf]
  %v50 = vld [vmem:[%s1 + $0x74] sm:$0xf]
  %v51 = vld [vmem:[%s1 + $0x78] sm:$0xf]
  %v52 = vld [vmem:[%s1 + $0x7c] sm:$0xf]
  %v53 = vld [vmem:[%s1 + $0x80] sm:$0xf]
  %v54 = vld [vmem:[%s1 + $0x84] sm:$0xf]
  %v55 = vld [vmem:[%s1 + $0x88] sm:$0xf]
  %v56 = vld [vmem:[%s1 + $0x8c] sm:$0xf]
  %v57 = vld [vmem:[%s1 + $0x90] sm:$0xf]
  %v58 = vld [vmem:[%s1 + $0x94] sm:$0xf]
  %v59 = vld [vmem:[%s1 + $0x98] sm:$0xf]
  %v60 = vld [vmem:[%s1 + $0x9c] sm:$0xf]
  %v61 = vld [vmem:[%s1 + $0xa0] sm:$0xf]
  %v62 = vld [vmem:[%s1 + $0xa4] sm:$0xf]
  %v63 = vld [vmem:[%s1 + $0xa8] sm:$0xf]
  %v64 = vld [vmem:[%s1 + $0xac] sm:$0xf]
  %v65 = vld [vmem:[%s1 + $0xb0] sm:$0xf]
  %v66 = vld [vmem:[%s1 + $0xb4] sm:$0xf]
  %v67 = vld [vmem:[%s1 + $0xb8] sm:$0xf]
  %v68 = vld [vmem:[%s1 + $0xbc] sm:$0xf]
  %v69 = vld [vmem:[%s1 + $0xc0] sm:$0xf]
  %v70 = vld [vmem:[%s1 + $0xc4] sm:$0xf]
  %v71 = vld [vmem:[%s1 + $0xc8] sm:$0xf]
  %v72 = vld [vmem:[%s1 + $0xcc] sm:$0xf]
  %v73 = vld [vmem:[%s1 + $0xd0] sm:$0xf]
  %v74 = vld [vmem:[%s1 + $0xd4] sm:$0xf]
  %v75 = vld [vmem:[%s1 + $0xd8] sm:$0xf]
  %v76 = vld [vmem:[%s1 + $0xdc] sm:$0xf]
  %v77 = vld [vmem:[%s1 + $0xe0] sm:$0xf]
  %v78 = vld [vmem:[%s1 + $0xe4] sm:$0xf]
  %v79 = vld [vmem:[%s1 + $0xe8] sm:$0xf]
  %v80 = vld [vmem:[%s1 + $0xec] sm:$0xf]
  %v81 = vld [vmem:[%s1 + $0xf0] sm:$0xf]
  %v82 = vld [vmem:[%s1 + $0xf4] sm:$0xf]
  %v83 = vld [vmem:[%s1 + $0xf8] sm:$0xf]
  %v84 = vld [vmem:[%s1 + $0xfc] sm:$0xf]
  %v85 = vld [vmem:[%s1 + $0x100] sm:$0xf]
  %v86 = vld [vmem:[%s1 + $0x104] sm:$0xf]
  %v87 = vld [vmem:[%s1 + $0x108] sm:$0xf]
  %v88 = vld [vmem:[%s1 + $0x10c] sm:$0xf]
  %v89 = vld [vmem:[%s1 + $0x110] sm:$0xf]
  %v90 = vld [vmem:[%s1 + $0x114] sm:$0xf]
  %v91 = vld [vmem:[%s1 + $0x118] sm:$0xf]
  %v92 = vld [vmem:[%s1 + $0x11c] sm:$0xf]
  %v96 = vunpack.c.l.b16 %v18
  %v97 = vunpack.c.h.b16 %v18
  %v98 = vunpack.c.l.b16 %v19
  %v99 = vunpack.c.h.b16 %v19
  %v100 = vunpack.c.l.b16 %v20
  %v101 = vpack.c.b16 %v96, %v96
  %v102 = vpack.c.b16 %v97, %v97
  %v103 = vpack.c.b16 %v98, %v98
  %v104 = vpack.c.b16 %v99, %v99
  %v105 = vpack.c.b16 %v100, %v100
  %v182 = vunpack.c.l.b16 %v21
  %v183 = vunpack.c.l.b16 %v22
  %v184 = vunpack.c.l.b16 %v23
  %v185 = vunpack.c.l.b16 %v24
  %v186 = vunpack.c.l.b16 %v25
  %v187 = vunpack.c.l.b16 %v26
  %v188 = vunpack.c.l.b16 %v27
  %v189 = vunpack.c.l.b16 %v28
  %v190 = vunpack.c.l.b16 %v29
  %v191 = vunpack.c.l.b16 %v30
  %v192 = vunpack.c.l.b16 %v31
  %v193 = vunpack.c.l.b16 %v32
  %v194 = vunpack.c.l.b16 %v33
  %v195 = vunpack.c.l.b16 %v34
  %v196 = vunpack.c.l.b16 %v35
  %v197 = vunpack.c.l.b16 %v36
  %v198 = vunpack.c.l.b16 %v37
  %v199 = vunpack.c.l.b16 %v38
  %v200 = vunpack.c.l.b16 %v39
  %v201 = vunpack.c.l.b16 %v40
  %v202 = vunpack.c.l.b16 %v41
  %v203 = vunpack.c.l.b16 %v42
  %v204 = vunpack.c.l.b16 %v43
  %v205 = vunpack.c.l.b16 %v44
  %v206 = vunpack.c.l.b16 %v45
  %v207 = vunpack.c.l.b16 %v46
  %v208 = vunpack.c.l.b16 %v47
  %v209 = vunpack.c.l.b16 %v48
  %v210 = vunpack.c.l.b16 %v49
  %v211 = vunpack.c.l.b16 %v50
  %v212 = vunpack.c.l.b16 %v51
  %v213 = vunpack.c.l.b16 %v52
  %v214 = vunpack.c.l.b16 %v53
  %v215 = vunpack.c.l.b16 %v54
  %v216 = vunpack.c.l.b16 %v55
  %v217 = vunpack.c.l.b16 %v56
  %v218 = vunpack.c.l.b16 %v57
  %v219 = vunpack.c.l.b16 %v58
  %v220 = vunpack.c.l.b16 %v59
  %v221 = vunpack.c.l.b16 %v60
  %v222 = vunpack.c.l.b16 %v61
  %v223 = vunpack.c.l.b16 %v62
  %v224 = vunpack.c.l.b16 %v63
  %v225 = vunpack.c.l.b16 %v64
  %v226 = vunpack.c.l.b16 %v65
  %v227 = vunpack.c.l.b16 %v66
  %v228 = vunpack.c.l.b16 %v67
  %v229 = vunpack.c.l.b16 %v68
  %v230 = vunpack.c.l.b16 %v69
  %v231 = vunpack.c.l.b16 %v70
  %v232 = vunpack.c.l.b16 %v71
  %v233 = vunpack.c.l.b16 %v72
  %v234 = vunpack.c.l.b16 %v73
  %v235 = vunpack.c.l.b16 %v74
  %v236 = vunpack.c.l.b16 %v75
  %v237 = vunpack.c.l.b16 %v76
  %v238 = vunpack.c.l.b16 %v77
  %v239 = vunpack.c.l.b16 %v78
  %v240 = vunpack.c.l.b16 %v79
  %v241 = vunpack.c.l.b16 %v80
  %v242 = vunpack.c.l.b16 %v81
  %v243 = vunpack.c.l.b16 %v82
  %v244 = vunpack.c.l.b16 %v83
  %v245 = vunpack.c.l.b16 %v84
  %v246 = vunpack.c.l.b16 %v85
  %v247 = vunpack.c.l.b16 %v86
  %v248 = vunpack.c.l.b16 %v87
  %v249 = vunpack.c.l.b16 %v88
  %v250 = vunpack.c.l.b16 %v89
  %v251 = vunpack.c.l.b16 %v90
  %v252 = vunpack.c.l.b16 %v91
  %v253 = vunpack.c.l.b16 %v92
  %v254 = vpack.c.b16 %v183, %v182
  %v255 = vpack.c.b16 %v185, %v184
  %v256 = vpack.c.b16 %v187, %v186
  %v257 = vpack.c.b16 %v189, %v188
  %v258 = vpack.c.b16 %v191, %v190
  %v259 = vpack.c.b16 %v193, %v192
  %v260 = vpack.c.b16 %v195, %v194
  %v261 = vpack.c.b16 %v197, %v196
  %v262 = vpack.c.b16 %v199, %v198
  %v263 = vpack.c.b16 %v201, %v200
  %v264 = vpack.c.b16 %v203, %v202
  %v265 = vpack.c.b16 %v205, %v204
  %v266 = vpack.c.b16 %v207, %v206
  %v267 = vpack.c.b16 %v209, %v208
  %v268 = vpack.c.b16 %v211, %v210
  %v269 = vpack.c.b16 %v213, %v212
  %v270 = vpack.c.b16 %v215, %v214
  %v271 = vpack.c.b16 %v217, %v216
  %v272 = vpack.c.b16 %v219, %v218
  %v273 = vpack.c.b16 %v221, %v220
  %v274 = vpack.c.b16 %v223, %v222
  %v275 = vpack.c.b16 %v225, %v224
  %v276 = vpack.c.b16 %v227, %v226
  %v277 = vpack.c.b16 %v229, %v228
  %v278 = vpack.c.b16 %v231, %v230
  %v279 = vpack.c.b16 %v233, %v232
  %v280 = vpack.c.b16 %v235, %v234
  %v281 = vpack.c.b16 %v237, %v236
  %v282 = vpack.c.b16 %v239, %v238
  %v283 = vpack.c.b16 %v241, %v240
  %v284 = vpack.c.b16 %v243, %v242
  %v285 = vpack.c.b16 %v245, %v244
  %v286 = vpack.c.b16 %v247, %v246
  %v287 = vpack.c.b16 %v249, %v248
  %v288 = vpack.c.b16 %v251, %v250
  %v289 = vpack.c.b16 %v253, %v252
  %vm326 = vcmask 523264
  %v328 = vsel %vm326, %v105, 0
  %330 = vmatprep.subr.bf16.mxu0 0
  %331 = vmatpush1.bf16.msra.mxu0 %v261
  %332 = vmatprep.subr.bf16.mxu0 0
  %333 = vmatpush1.bf16.msra.mxu0 %v260
  %334 = vmatprep.subr.bf16.mxu0 0
  %335 = vmatpush1.bf16.msra.mxu0 %v259
  %336 = vmatprep.subr.bf16.mxu0 0
  %337 = vmatpush1.bf16.msra.mxu0 %v258
  %338 = vmatprep.subr.bf16.mxu0 0
  %339 = vmatpush1.bf16.msra.mxu0 %v257
  %340 = vmatprep.subr.bf16.mxu0 0
  %341 = vmatpush1.bf16.msra.mxu0 %v256
  %342 = vmatprep.subr.bf16.mxu0 0
  %343 = vmatpush1.bf16.msra.mxu0 %v255
  %344 = vmatprep.subr.bf16.mxu0 0
  %345 = vmatpush1.bf16.msra.mxu0 %v254
  %346 = vmatprep.subr.bf16.mxu0 0
  %347 = vmatpush2.bf16.msra.mxu0 %v269
  %348 = vmatprep.subr.bf16.mxu0 0
  %349 = vmatpush2.bf16.msra.mxu0 %v268
  %350 = vmatprep.subr.bf16.mxu0 0
  %351 = vmatpush2.bf16.msra.mxu0 %v267
  %352 = vmatprep.subr.bf16.mxu0 0
  %353 = vmatpush2.bf16.msra.mxu0 %v266
  %354 = vmatprep.subr.bf16.mxu0 0
  %355 = vmatpush2.bf16.msra.mxu0 %v265
  %356 = vmatprep.subr.bf16.mxu0 0
  %357 = vmatpush2.bf16.msra.mxu0 %v264
  %358 = vmatprep.subr.bf16.mxu0 0
  %359 = vmatpush2.bf16.msra.mxu0 %v263
  %360 = vmatprep.subr.bf16.mxu0 0
  %361 = vmatpush2.bf16.msra.mxu0 %v262
  %362 = vmatprep.mubr.bf16.mxu0 %v102
  %363 = vmatmul.mubr.bf16.gmra.mxu0 %v101
  %v364 = vpop.f32.mrf.mxu0
  %v365 = vadd.f32 0.0, %v364
  %v366 = vpop.f32.mrf.mxu0
  %v367 = vpop.f32.mrf.mxu0
  %v368 = vpop.f32.mrf.mxu0
  %369 = vdwg.mxu0
  %370 = vmatprep.subr.bf16.mxu0 0
  %371 = vmatpush1.bf16.msra.mxu0 %v277
  %372 = vmatprep.subr.bf16.mxu0 0
  %373 = vmatpush1.bf16.msra.mxu0 %v276
  %374 = vmatprep.subr.bf16.mxu0 0
  %375 = vmatpush1.bf16.msra.mxu0 %v275
  %376 = vmatprep.subr.bf16.mxu0 0
  %377 = vmatpush1.bf16.msra.mxu0 %v274
  %378 = vmatprep.subr.bf16.mxu0 0
  %379 = vmatpush1.bf16.msra.mxu0 %v273
  %380 = vmatprep.subr.bf16.mxu0 0
  %381 = vmatpush1.bf16.msra.mxu0 %v272
  %382 = vmatprep.subr.bf16.mxu0 0
  %383 = vmatpush1.bf16.msra.mxu0 %v271
  %384 = vmatprep.subr.bf16.mxu0 0
  %385 = vmatpush1.bf16.msra.mxu0 %v270
  %386 = vmatprep.subr.bf16.mxu0 0
  %387 = vmatpush2.bf16.msra.mxu0 %v285
  %388 = vmatprep.subr.bf16.mxu0 0
  %389 = vmatpush2.bf16.msra.mxu0 %v284
  %390 = vmatprep.subr.bf16.mxu0 0
  %391 = vmatpush2.bf16.msra.mxu0 %v283
  %392 = vmatprep.subr.bf16.mxu0 0
  %393 = vmatpush2.bf16.msra.mxu0 %v282
  %394 = vmatprep.subr.bf16.mxu0 0
  %395 = vmatpush2.bf16.msra.mxu0 %v281
  %396 = vmatprep.subr.bf16.mxu0 0
  %397 = vmatpush2.bf16.msra.mxu0 %v280
  %398 = vmatprep.subr.bf16.mxu0 0
  %399 = vmatpush2.bf16.msra.mxu0 %v279
  %400 = vmatprep.subr.bf16.mxu0 0
  %401 = vmatpush2.bf16.msra.mxu0 %v278
  %402 = vmatprep.mubr.bf16.mxu0 %v104
  %403 = vmatmul.mubr.bf16.gmra.mxu0 %v103
  %v404 = vpop.f32.mrf.mxu0
  %v405 = vadd.f32 %v365, %v404
  %v406 = vpop.f32.mrf.mxu0
  %v407 = vpop.f32.mrf.mxu0
  %v408 = vpop.f32.mrf.mxu0
  %409 = vdwg.mxu0
  %410 = vmatprep.subr.bf16.mxu0 0
  %411 = vmatpush1.bf16.msra.mxu0 0
  %412 = vmatprep.subr.bf16.mxu0 0
  %413 = vmatpush1.bf16.msra.mxu0 0
  %414 = vmatprep.subr.bf16.mxu0 0
  %415 = vmatpush1.bf16.msra.mxu0 0
  %416 = vmatprep.subr.bf16.mxu0 0
  %417 = vmatpush1.bf16.msra.mxu0 0
  %418 = vmatprep.subr.bf16.mxu0 0
  %419 = vmatpush1.bf16.msra.mxu0 %v289
  %420 = vmatprep.subr.bf16.mxu0 0
  %421 = vmatpush1.bf16.msra.mxu0 %v288
  %422 = vmatprep.subr.bf16.mxu0 0
  %423 = vmatpush1.bf16.msra.mxu0 %v287
  %424 = vmatprep.subr.bf16.mxu0 0
  %425 = vmatpush1.bf16.msra.mxu0 %v286
  %426 = vmatprep.subr.bf16.mxu0 0
  %427 = vmatpush2.bf16.msra.mxu0 0
  %428 = vmatprep.subr.bf16.mxu0 0
  %429 = vmatpush2.bf16.msra.mxu0 0
  %430 = vmatprep.subr.bf16.mxu0 0
  %431 = vmatpush2.bf16.msra.mxu0 0
  %432 = vmatprep.subr.bf16.mxu0 0
  %433 = vmatpush2.bf16.msra.mxu0 0
  %434 = vmatprep.subr.bf16.mxu0 0
  %435 = vmatpush2.bf16.msra.mxu0 0
  %436 = vmatprep.subr.bf16.mxu0 0
  %437 = vmatpush2.bf16.msra.mxu0 0
  %438 = vmatprep.subr.bf16.mxu0 0
  %439 = vmatpush2.bf16.msra.mxu0 0
  %440 = vmatprep.subr.bf16.mxu0 0
  %441 = vmatpush2.bf16.msra.mxu0 0
  %442 = vmatprep.mubr.bf16.mxu0 0
  %443 = vmatmul.mubr.bf16.gmra.mxu0 %v328
  %v444 = vpop.f32.mrf.mxu0
  %v445 = vadd.f32 %v405, %v444
  %v446 = vpop.f32.mrf.mxu0
  %v447 = vpop.f32.mrf.mxu0
  %v448 = vpop.f32.mrf.mxu0
  %449 = vdwg.mxu0
  %v450 = vrot.slane %v445, 4
  %v451 = vadd.f32 %v445, %v450
  %v452 = vrot.slane %v451, 2
  %v453 = vadd.f32 %v451, %v452
  %v454 = vrot.slane %v453, 1
  %v455 = vadd.f32 %v453, %v454
  %v456 = vmul.f32 %v445, %v445
  %v457 = vrot.slane %v456, 4
  %v458 = vadd.f32 %v456, %v457
  %v459 = vrot.slane %v458, 2
  %v460 = vadd.f32 %v458, %v459
  %v461 = vrot.slane %v460, 1
  %v462 = vadd.f32 %v460, %v461
  %v463 = vmul.f32 %v455, 0.5
  %v464 = vmul.f32 %v462, 0.5
  %v465 = vmul.f32 %v463, %v463
  %v466 = vsub.f32 %v464, %v465
  %v467 = vmax.f32 %v466, 0.0
  %v468 = vld [vmem:[%s2] sm:$0x1]
  %v469 = vadd.f32 %v467, 1e-05
  %v470 = vrsqrt.pop %v469
  %v471 = vmul.f32 %v468, %v470
  %v472 = vld [vmem:[%s3] sm:$0x1]
  %v473 = vmul.f32 %v463, %v471
  %v474 = vsub.f32 %v472, %v473
  %v476 = vlaneseq
  %v477 = vshrl.u32 %v476, 7
  %v478 = vsub.s32 0, %v477
  %v479 = vrot.slane %v471, %v478
  %v481 = vmul.f32 %v445, %v479
  %v483 = vlaneseq
  %v484 = vshrl.u32 %v483, 7
  %v485 = vsub.s32 0, %v484
  %v486 = vrot.slane %v474, %v485
  %v488 = vadd.f32 %v481, %v486
  %v489 = vmax.f32 %v488, 0.0
  %490 = vst [vmem:[%s4] sm:$0xff] %v489
  // Predicated region
  $region18: #{encdec_forward.11} parent=0 // pred_check
    _
  $region19: #{encdec_forward.11} parent=0 // pred_check_branch
    %492 = sbr.rel (0) target = $region21
  $region20: #{encdec_forward.11} parent=0 // pred_region
    _
  $region21: #{encdec_forward.11} parent=0 // pred_fallthru
    _
  // Predicated region
  $region22: #{encdec_forward.11} parent=0 // pred_check
    _
  $region23: #{encdec_forward.11} parent=0 // pred_check_branch
    %494 = sbr.rel (0) target = $region25
  $region24: #{encdec_forward.11} parent=0 // pred_region
    _
  $region25: #{encdec_forward.11} parent=0 // pred_fallthru
    _

// kernel: encdec_forward.12
$region0: #{encdec_forward.12}
  #allocation0 [shape = 'u32[]', space=smem, size = 0x4, offset = 0x4, fixed_abs, tag = 'smem constant byte address 0x4 - core index']
  #allocation1 [shape = 'u32[144,128]{1,0:T(1,128)}', space=vmem, size = 0x12000, scoped, tag = 'internal scratch']
  %s0 = inlined_call_operand.vmem [shape: bf16[8,1152], index: 0, kind: input, shape index: {}]
  %s1 = inlined_call_operand.vmem [shape: bf16[1152,128], index: 1, kind: input, shape index: {}]
  %s2 = inlined_call_operand.vmem [shape: f32[1,128], index: 2, kind: input, shape index: {}]
  %s3 = inlined_call_operand.vmem [shape: f32[1,128], index: 3, kind: input, shape index: {}]
  %s4 = inlined_call_operand.vmem [shape: f32[8,128], index: 4, kind: output, shape index: {}]
  %s5 = sld [smem:[#allocation0]]
  $region26: #{encdec_forward.12} parent=0
    _
  %s7 = ssub.s32 1, %s5
  %s8 = scalar_select 0, %s7, %s5
  // Predicated region
  $region2: #{encdec_forward.12} parent=0 // pred_check
    _
  $region3: #{encdec_forward.12} parent=0 // pred_check_branch
    %10 = sbr.rel (0) target = $region5
  $region4: #{encdec_forward.12} parent=0 // pred_region
    _
  $region5: #{encdec_forward.12} parent=0 // pred_fallthru
    _
  // Predicated region
  $region6: #{encdec_forward.12} parent=0 // pred_check
    _
  $region7: #{encdec_forward.12} parent=0 // pred_check_branch
    %12 = sbr.rel (0) target = $region9
  $region8: #{encdec_forward.12} parent=0 // pred_region
    _
  $region9: #{encdec_forward.12} parent=0 // pred_fallthru
    _
  // Predicated region
  $region10: #{encdec_forward.12} parent=0 // pred_check
    _
  $region11: #{encdec_forward.12} parent=0 // pred_check_branch
    %14 = sbr.rel (0) target = $region13
  $region12: #{encdec_forward.12} parent=0 // pred_region
    _
  $region13: #{encdec_forward.12} parent=0 // pred_fallthru
    _
  // Predicated region
  $region14: #{encdec_forward.12} parent=0 // pred_check
    _
  $region15: #{encdec_forward.12} parent=0 // pred_check_branch
    %16 = sbr.rel (0) target = $region17
  $region16: #{encdec_forward.12} parent=0 // pred_region
    _
  $region17: #{encdec_forward.12} parent=0 // pred_fallthru
    _
  %v18 = vld [vmem:[%s0] sm:$0xff]
  %v19 = vld [vmem:[%s0 + $0x8] sm:$0xff]
  %v20 = vld [vmem:[%s0 + $0x10] sm:$0xff]
  %v21 = vld [vmem:[%s0 + $0x18] sm:$0xff]
  %v22 = vld [vmem:[%s0 + $0x20] sm:$0xf]
  %v23 = vld [vmem:[%s1] sm:$0xf]
  %v24 = vld [vmem:[%s1 + $0x4] sm:$0xf]
  %v25 = vld [vmem:[%s1 + $0x8] sm:$0xf]
  %v26 = vld [vmem:[%s1 + $0xc] sm:$0xf]
  %v27 = vld [vmem:[%s1 + $0x10] sm:$0xf]
  %v28 = vld [vmem:[%s1 + $0x14] sm:$0xf]
  %v29 = vld [vmem:[%s1 + $0x18] sm:$0xf]
  %v30 = vld [vmem:[%s1 + $0x1c] sm:$0xf]
  %v31 = vld [vmem:[%s1 + $0x20] sm:$0xf]
  %v32 = vld [vmem:[%s1 + $0x24] sm:$0xf]
  %v33 = vld [vmem:[%s1 + $0x28] sm:$0xf]
  %v34 = vld [vmem:[%s1 + $0x2c] sm:$0xf]
  %v35 = vld [vmem:[%s1 + $0x30] sm:$0xf]
  %v36 = vld [vmem:[%s1 + $0x34] sm:$0xf]
  %v37 = vld [vmem:[%s1 + $0x38] sm:$0xf]
  %v38 = vld [vmem:[%s1 + $0x3c] sm:$0xf]
  %v39 = vld [vmem:[%s1 + $0x40] sm:$0xf]
  %v40 = vld [vmem:[%s1 + $0x44] sm:$0xf]
  %v41 = vld [vmem:[%s1 + $0x48] sm:$0xf]
  %v42 = vld [vmem:[%s1 + $0x4c] sm:$0xf]
  %v43 = vld [vmem:[%s1 + $0x50] sm:$0xf]
  %v44 = vld [vmem:[%s1 + $0x54] sm:$0xf]
  %v45 = vld [vmem:[%s1 + $0x58] sm:$0xf]
  %v46 = vld [vmem:[%s1 + $0x5c] sm:$0xf]
  %v47 = vld [vmem:[%s1 + $0x60] sm:$0xf]
  %v48 = vld [vmem:[%s1 + $0x64] sm:$0xf]
  %v49 = vld [vmem:[%s1 + $0x68] sm:$0xf]
  %v50 = vld [vmem:[%s1 + $0x6c] sm:$0xf]
  %v51 = vld [vmem:[%s1 + $0x70] sm:$0xf]
  %v52 = vld [vmem:[%s1 + $0x74] sm:$0xf]
  %v53 = vld [vmem:[%s1 + $0x78] sm:$0xf]
  %v54 = vld [vmem:[%s1 + $0x7c] sm:$0xf]
  %v55 = vld [vmem:[%s1 + $0x80] sm:$0xf]
  %v56 = vld [vmem:[%s1 + $0x84] sm:$0xf]
  %v57 = vld [vmem:[%s1 + $0x88] sm:$0xf]
  %v58 = vld [vmem:[%s1 + $0x8c] sm:$0xf]
  %v59 = vld [vmem:[%s1 + $0x90] sm:$0xf]
  %v60 = vld [vmem:[%s1 + $0x94] sm:$0xf]
  %v61 = vld [vmem:[%s1 + $0x98] sm:$0xf]
  %v62 = vld [vmem:[%s1 + $0x9c] sm:$0xf]
  %v63 = vld [vmem:[%s1 + $0xa0] sm:$0xf]
  %v64 = vld [vmem:[%s1 + $0xa4] sm:$0xf]
  %v65 = vld [vmem:[%s1 + $0xa8] sm:$0xf]
  %v66 = vld [vmem:[%s1 + $0xac] sm:$0xf]
  %v67 = vld [vmem:[%s1 + $0xb0] sm:$0xf]
  %v68 = vld [vmem:[%s1 + $0xb4] sm:$0xf]
  %v69 = vld [vmem:[%s1 + $0xb8] sm:$0xf]
  %v70 = vld [vmem:[%s1 + $0xbc] sm:$0xf]
  %v71 = vld [vmem:[%s1 + $0xc0] sm:$0xf]
  %v72 = vld [vmem:[%s1 + $0xc4] sm:$0xf]
  %v73 = vld [vmem:[%s1 + $0xc8] sm:$0xf]
  %v74 = vld [vmem:[%s1 + $0xcc] sm:$0xf]
  %v75 = vld [vmem:[%s1 + $0xd0] sm:$0xf]
  %v76 = vld [vmem:[%s1 + $0xd4] sm:$0xf]
  %v77 = vld [vmem:[%s1 + $0xd8] sm:$0xf]
  %v78 = vld [vmem:[%s1 + $0xdc] sm:$0xf]
  %v79 = vld [vmem:[%s1 + $0xe0] sm:$0xf]
  %v80 = vld [vmem:[%s1 + $0xe4] sm:$0xf]
  %v81 = vld [vmem:[%s1 + $0xe8] sm:$0xf]
  %v82 = vld [vmem:[%s1 + $0xec] sm:$0xf]
  %v83 = vld [vmem:[%s1 + $0xf0] sm:$0xf]
  %v84 = vld [vmem:[%s1 + $0xf4] sm:$0xf]
  %v85 = vld [vmem:[%s1 + $0xf8] sm:$0xf]
  %v86 = vld [vmem:[%s1 + $0xfc] sm:$0xf]
  %v87 = vld [vmem:[%s1 + $0x100] sm:$0xf]
  %v88 = vld [vmem:[%s1 + $0x104] sm:$0xf]
  %v89 = vld [vmem:[%s1 + $0x108] sm:$0xf]
  %v90 = vld [vmem:[%s1 + $0x10c] sm:$0xf]
  %v91 = vld [vmem:[%s1 + $0x110] sm:$0xf]
  %v92 = vld [vmem:[%s1 + $0x114] sm:$0xf]
  %v93 = vld [vmem:[%s1 + $0x118] sm:$0xf]
  %v94 = vld [vmem:[%s1 + $0x11c] sm:$0xf]
  %v95 = vld [vmem:[%s1 + $0x120] sm:$0xf]
  %v96 = vld [vmem:[%s1 + $0x124] sm:$0xf]
  %v97 = vld [vmem:[%s1 + $0x128] sm:$0xf]
  %v98 = vld [vmem:[%s1 + $0x12c] sm:$0xf]
  %v99 = vld [vmem:[%s1 + $0x130] sm:$0xf]
  %v100 = vld [vmem:[%s1 + $0x134] sm:$0xf]
  %v101 = vld [vmem:[%s1 + $0x138] sm:$0xf]
  %v102 = vld [vmem:[%s1 + $0x13c] sm:$0xf]
  %v103 = vld [vmem:[%s1 + $0x140] sm:$0xf]
  %v104 = vld [vmem:[%s1 + $0x144] sm:$0xf]
  %v105 = vld [vmem:[%s1 + $0x148] sm:$0xf]
  %v106 = vld [vmem:[%s1 + $0x14c] sm:$0xf]
  %v107 = vld [vmem:[%s1 + $0x150] sm:$0xf]
  %v108 = vld [vmem:[%s1 + $0x154] sm:$0xf]
  %v109 = vld [vmem:[%s1 + $0x158] sm:$0xf]
  %v110 = vld [vmem:[%s1 + $0x15c] sm:$0xf]
  %v111 = vld [vmem:[%s1 + $0x160] sm:$0xf]
  %v112 = vld [vmem:[%s1 + $0x164] sm:$0xf]
  %v113 = vld [vmem:[%s1 + $0x168] sm:$0xf]
  %v114 = vld [vmem:[%s1 + $0x16c] sm:$0xf]
  %v115 = vld [vmem:[%s1 + $0x170] sm:$0xf]
  %v116 = vld [vmem:[%s1 + $0x174] sm:$0xf]
  %v117 = vld [vmem:[%s1 + $0x178] sm:$0xf]
  %v118 = vld [vmem:[%s1 + $0x17c] sm:$0xf]
  %v119 = vld [vmem:[%s1 + $0x180] sm:$0xf]
  %v120 = vld [vmem:[%s1 + $0x184] sm:$0xf]
  %v121 = vld [vmem:[%s1 + $0x188] sm:$0xf]
  %v122 = vld [vmem:[%s1 + $0x18c] sm:$0xf]
  %v123 = vld [vmem:[%s1 + $0x190] sm:$0xf]
  %v124 = vld [vmem:[%s1 + $0x194] sm:$0xf]
  %v125 = vld [vmem:[%s1 + $0x198] sm:$0xf]
  %v126 = vld [vmem:[%s1 + $0x19c] sm:$0xf]
  %v127 = vld [vmem:[%s1 + $0x1a0] sm:$0xf]
  %v128 = vld [vmem:[%s1 + $0x1a4] sm:$0xf]
  %v129 = vld [vmem:[%s1 + $0x1a8] sm:$0xf]
  %v130 = vld [vmem:[%s1 + $0x1ac] sm:$0xf]
  %v131 = vld [vmem:[%s1 + $0x1b0] sm:$0xf]
  %v132 = vld [vmem:[%s1 + $0x1b4] sm:$0xf]
  %v133 = vld [vmem:[%s1 + $0x1b8] sm:$0xf]
  %v134 = vld [vmem:[%s1 + $0x1bc] sm:$0xf]
  %v135 = vld [vmem:[%s1 + $0x1c0] sm:$0xf]
  %v136 = vld [vmem:[%s1 + $0x1c4] sm:$0xf]
  %v137 = vld [vmem:[%s1 + $0x1c8] sm:$0xf]
  %v138 = vld [vmem:[%s1 + $0x1cc] sm:$0xf]
  %v139 = vld [vmem:[%s1 + $0x1d0] sm:$0xf]
  %v140 = vld [vmem:[%s1 + $0x1d4] sm:$0xf]
  %v141 = vld [vmem:[%s1 + $0x1d8] sm:$0xf]
  %v142 = vld [vmem:[%s1 + $0x1dc] sm:$0xf]
  %v143 = vld [vmem:[%s1 + $0x1e0] sm:$0xf]
  %v144 = vld [vmem:[%s1 + $0x1e4] sm:$0xf]
  %v145 = vld [vmem:[%s1 + $0x1e8] sm:$0xf]
  %v146 = vld [vmem:[%s1 + $0x1ec] sm:$0xf]
  %v147 = vld [vmem:[%s1 + $0x1f0] sm:$0xf]
  %v148 = vld [vmem:[%s1 + $0x1f4] sm:$0xf]
  %v149 = vld [vmem:[%s1 + $0x1f8] sm:$0xf]
  %v150 = vld [vmem:[%s1 + $0x1fc] sm:$0xf]
  %v151 = vld [vmem:[%s1 + $0x200] sm:$0xf]
  %v152 = vld [vmem:[%s1 + $0x204] sm:$0xf]
  %v153 = vld [vmem:[%s1 + $0x208] sm:$0xf]
  %v154 = vld [vmem:[%s1 + $0x20c] sm:$0xf]
  %v155 = vld [vmem:[%s1 + $0x210] sm:$0xf]
  %v156 = vld [vmem:[%s1 + $0x214] sm:$0xf]
  %v157 = vld [vmem:[%s1 + $0x218] sm:$0xf]
  %v158 = vld [vmem:[%s1 + $0x21c] sm:$0xf]
  %v159 = vld [vmem:[%s1 + $0x220] sm:$0xf]
  %v160 = vld [vmem:[%s1 + $0x224] sm:$0xf]
  %v161 = vld [vmem:[%s1 + $0x228] sm:$0xf]
  %v162 = vld [vmem:[%s1 + $0x22c] sm:$0xf]
  %v163 = vld [vmem:[%s1 + $0x230] sm:$0xf]
  %v164 = vld [vmem:[%s1 + $0x234] sm:$0xf]
  %v165 = vld [vmem:[%s1 + $0x238] sm:$0xf]
  %v166 = vld [vmem:[%s1 + $0x23c] sm:$0xf]
  %v172 = vunpack.c.l.b16 %v18
  %v173 = vunpack.c.h.b16 %v18
  %v174 = vunpack.c.l.b16 %v19
  %v175 = vunpack.c.h.b16 %v19
  %v176 = vunpack.c.l.b16 %v20
  %v177 = vunpack.c.h.b16 %v20
  %v178 = vunpack.c.l.b16 %v21
  %v179 = vunpack.c.h.b16 %v21
  %v180 = vunpack.c.l.b16 %v22
  %v181 = vpack.c.b16 %v172, %v172
  %v182 = vpack.c.b16 %v173, %v173
  %v183 = vpack.c.b16 %v174, %v174
  %v184 = vpack.c.b16 %v175, %v175
  %v185 = vpack.c.b16 %v176, %v176
  %v186 = vpack.c.b16 %v177, %v177
  %v187 = vpack.c.b16 %v178, %v178
  %v188 = vpack.c.b16 %v179, %v179
  %v189 = vpack.c.b16 %v180, %v180
  %v343 = vunpack.c.l.b16 %v23
  %v344 = vunpack.c.l.b16 %v24
  %v345 = vunpack.c.l.b16 %v25
  %v346 = vunpack.c.l.b16 %v26
  %v347 = vunpack.c.l.b16 %v27
  %v348 = vunpack.c.l.b16 %v28
  %v349 = vunpack.c.l.b16 %v29
  %v350 = vunpack.c.l.b16 %v30
  %v351 = vunpack.c.l.b16 %v31
  %v352 = vunpack.c.l.b16 %v32
  %v353 = vunpack.c.l.b16 %v33
  %v354 = vunpack.c.l.b16 %v34
  %v355 = vunpack.c.l.b16 %v35
  %v356 = vunpack.c.l.b16 %v36
  %v357 = vunpack.c.l.b16 %v37
  %v358 = vunpack.c.l.b16 %v38
  %v359 = vunpack.c.l.b16 %v39
  %v360 = vunpack.c.l.b16 %v40
  %v361 = vunpack.c.l.b16 %v41
  %v362 = vunpack.c.l.b16 %v42
  %v363 = vunpack.c.l.b16 %v43
  %v364 = vunpack.c.l.b16 %v44
  %v365 = vunpack.c.l.b16 %v45
  %v366 = vunpack.c.l.b16 %v46
  %v367 = vunpack.c.l.b16 %v47
  %v368 = vunpack.c.l.b16 %v48
  %v369 = vunpack.c.l.b16 %v49
  %v370 = vunpack.c.l.b16 %v50
  %v371 = vunpack.c.l.b16 %v51
  %v372 = vunpack.c.l.b16 %v52
  %v373 = vunpack.c.l.b16 %v53
  %v374 = vunpack.c.l.b16 %v54
  %v375 = vunpack.c.l.b16 %v55
  %v376 = vunpack.c.l.b16 %v56
  %v377 = vunpack.c.l.b16 %v57
  %v378 = vunpack.c.l.b16 %v58
  %v379 = vunpack.c.l.b16 %v59
  %v380 = vunpack.c.l.b16 %v60
  %v381 = vunpack.c.l.b16 %v61
  %v382 = vunpack.c.l.b16 %v62
  %v383 = vunpack.c.l.b16 %v63
  %v384 = vunpack.c.l.b16 %v64
  %v385 = vunpack.c.l.b16 %v65
  %v386 = vunpack.c.l.b16 %v66
  %v387 = vunpack.c.l.b16 %v67
  %v388 = vunpack.c.l.b16 %v68
  %v389 = vunpack.c.l.b16 %v69
  %v390 = vunpack.c.l.b16 %v70
  %v391 = vunpack.c.l.b16 %v71
  %v392 = vunpack.c.l.b16 %v72
  %v393 = vunpack.c.l.b16 %v73
  %v394 = vunpack.c.l.b16 %v74
  %v395 = vunpack.c.l.b16 %v75
  %v396 = vunpack.c.l.b16 %v76
  %v397 = vunpack.c.l.b16 %v77
  %v398 = vunpack.c.l.b16 %v78
  %v399 = vunpack.c.l.b16 %v79
  %v400 = vunpack.c.l.b16 %v80
  %v401 = vunpack.c.l.b16 %v81
  %v402 = vunpack.c.l.b16 %v82
  %v403 = vunpack.c.l.b16 %v83
  %v404 = vunpack.c.l.b16 %v84
  %v405 = vunpack.c.l.b16 %v85
  %v406 = vunpack.c.l.b16 %v86
  %v407 = vunpack.c.l.b16 %v87
  %v408 = vunpack.c.l.b16 %v88
  %v409 = vunpack.c.l.b16 %v89
  %v410 = vunpack.c.l.b16 %v90
  %v411 = vunpack.c.l.b16 %v91
  %v412 = vunpack.c.l.b16 %v92
  %v413 = vunpack.c.l.b16 %v93
  %v414 = vunpack.c.l.b16 %v94
  %v415 = vunpack.c.l.b16 %v95
  %v416 = vunpack.c.l.b16 %v96
  %v417 = vunpack.c.l.b16 %v97
  %v418 = vunpack.c.l.b16 %v98
  %v419 = vunpack.c.l.b16 %v99
  %v420 = vunpack.c.l.b16 %v100
  %v421 = vunpack.c.l.b16 %v101
  %v422 = vunpack.c.l.b16 %v102
  %v423 = vunpack.c.l.b16 %v103
  %v424 = vunpack.c.l.b16 %v104
  %v425 = vunpack.c.l.b16 %v105
  %v426 = vunpack.c.l.b16 %v106
  %v427 = vunpack.c.l.b16 %v107
  %v428 = vunpack.c.l.b16 %v108
  %v429 = vunpack.c.l.b16 %v109
  %v430 = vunpack.c.l.b16 %v110
  %v431 = vunpack.c.l.b16 %v111
  %v432 = vunpack.c.l.b16 %v112
  %v433 = vunpack.c.l.b16 %v113
  %v434 = vunpack.c.l.b16 %v114
  %v435 = vunpack.c.l.b16 %v115
  %v436 = vunpack.c.l.b16 %v116
  %v437 = vunpack.c.l.b16 %v117
  %v438 = vunpack.c.l.b16 %v118
  %v439 = vunpack.c.l.b16 %v119
  %v440 = vunpack.c.l.b16 %v120
  %v441 = vunpack.c.l.b16 %v121
  %v442 = vunpack.c.l.b16 %v122
  %v443 = vunpack.c.l.b16 %v123
  %v444 = vunpack.c.l.b16 %v124
  %v445 = vunpack.c.l.b16 %v125
  %v446 = vunpack.c.l.b16 %v126
  %v447 = vunpack.c.l.b16 %v127
  %v448 = vunpack.c.l.b16 %v128
  %v449 = vunpack.c.l.b16 %v129
  %v450 = vunpack.c.l.b16 %v130
  %v451 = vunpack.c.l.b16 %v131
  %v452 = vunpack.c.l.b16 %v132
  %v453 = vunpack.c.l.b16 %v133
  %v454 = vunpack.c.l.b16 %v134
  %v455 = vunpack.c.l.b16 %v135
  %v456 = vunpack.c.l.b16 %v136
  %v457 = vunpack.c.l.b16 %v137
  %v458 = vunpack.c.l.b16 %v138
  %v459 = vunpack.c.l.b16 %v139
  %v460 = vunpack.c.l.b16 %v140
  %v461 = vunpack.c.l.b16 %v141
  %v462 = vunpack.c.l.b16 %v142
  %v463 = vunpack.c.l.b16 %v143
  %v464 = vunpack.c.l.b16 %v144
  %v465 = vunpack.c.l.b16 %v145
  %v466 = vunpack.c.l.b16 %v146
  %v467 = vunpack.c.l.b16 %v147
  %v468 = vunpack.c.l.b16 %v148
  %v469 = vunpack.c.l.b16 %v149
  %v470 = vunpack.c.l.b16 %v150
  %v471 = vunpack.c.l.b16 %v151
  %v472 = vunpack.c.l.b16 %v152
  %v473 = vunpack.c.l.b16 %v153
  %v474 = vunpack.c.l.b16 %v154
  %v475 = vunpack.c.l.b16 %v155
  %v476 = vunpack.c.l.b16 %v156
  %v477 = vunpack.c.l.b16 %v157
  %v478 = vunpack.c.l.b16 %v158
  %v479 = vunpack.c.l.b16 %v159
  %v480 = vunpack.c.l.b16 %v160
  %v481 = vunpack.c.l.b16 %v161
  %v482 = vunpack.c.l.b16 %v162
  %v483 = vunpack.c.l.b16 %v163
  %v484 = vunpack.c.l.b16 %v164
  %v485 = vunpack.c.l.b16 %v165
  %v486 = vunpack.c.l.b16 %v166
  %v487 = vpack.c.b16 %v344, %v343
  %v488 = vpack.c.b16 %v346, %v345
  %v489 = vpack.c.b16 %v348, %v347
  %v490 = vpack.c.b16 %v350, %v349
  %v491 = vpack.c.b16 %v352, %v351
  %v492 = vpack.c.b16 %v354, %v353
  %v493 = vpack.c.b16 %v356, %v355
  %v494 = vpack.c.b16 %v358, %v357
  %v495 = vpack.c.b16 %v360, %v359
  %v496 = vpack.c.b16 %v362, %v361
  %v497 = vpack.c.b16 %v364, %v363
  %v498 = vpack.c.b16 %v366, %v365
  %v499 = vpack.c.b16 %v368, %v367
  %v500 = vpack.c.b16 %v370, %v369
  %v501 = vpack.c.b16 %v372, %v371
  %v502 = vpack.c.b16 %v374, %v373
  %v503 = vpack.c.b16 %v376, %v375
  %v504 = vpack.c.b16 %v378, %v377
  %v505 = vpack.c.b16 %v380, %v379
  %v506 = vpack.c.b16 %v382, %v381
  %v507 = vpack.c.b16 %v384, %v383
  %v508 = vpack.c.b16 %v386, %v385
  %v509 = vpack.c.b16 %v388, %v387
  %v510 = vpack.c.b16 %v390, %v389
  %v511 = vpack.c.b16 %v392, %v391
  %v512 = vpack.c.b16 %v394, %v393
  %v513 = vpack.c.b16 %v396, %v395
  %v514 = vpack.c.b16 %v398, %v397
  %v515 = vpack.c.b16 %v400, %v399
  %v516 = vpack.c.b16 %v402, %v401
  %v517 = vpack.c.b16 %v404, %v403
  %v518 = vpack.c.b16 %v406, %v405
  %v519 = vpack.c.b16 %v408, %v407
  %v520 = vpack.c.b16 %v410, %v409
  %v521 = vpack.c.b16 %v412, %v411
  %v522 = vpack.c.b16 %v414, %v413
  %v523 = vpack.c.b16 %v416, %v415
  %v524 = vpack.c.b16 %v418, %v417
  %v525 = vpack.c.b16 %v420, %v419
  %v526 = vpack.c.b16 %v422, %v421
  %v527 = vpack.c.b16 %v424, %v423
  %v528 = vpack.c.b16 %v426, %v425
  %v529 = vpack.c.b16 %v428, %v427
  %v530 = vpack.c.b16 %v430, %v429
  %v531 = vpack.c.b16 %v432, %v431
  %v532 = vpack.c.b16 %v434, %v433
  %v533 = vpack.c.b16 %v436, %v435
  %v534 = vpack.c.b16 %v438, %v437
  %v535 = vpack.c.b16 %v440, %v439
  %v536 = vpack.c.b16 %v442, %v441
  %v537 = vpack.c.b16 %v444, %v443
  %v538 = vpack.c.b16 %v446, %v445
  %v539 = vpack.c.b16 %v448, %v447
  %v540 = vpack.c.b16 %v450, %v449
  %v541 = vpack.c.b16 %v452, %v451
  %v542 = vpack.c.b16 %v454, %v453
  %v543 = vpack.c.b16 %v456, %v455
  %v544 = vpack.c.b16 %v458, %v457
  %v545 = vpack.c.b16 %v460, %v459
  %v546 = vpack.c.b16 %v462, %v461
  %v547 = vpack.c.b16 %v464, %v463
  %v548 = vpack.c.b16 %v466, %v465
  %v549 = vpack.c.b16 %v468, %v467
  %v550 = vpack.c.b16 %v470, %v469
  %v551 = vpack.c.b16 %v472, %v471
  %v552 = vpack.c.b16 %v474, %v473
  %v553 = vpack.c.b16 %v476, %v475
  %v554 = vpack.c.b16 %v478, %v477
  %v555 = vpack.c.b16 %v480, %v479
  %v556 = vpack.c.b16 %v482, %v481
  %v557 = vpack.c.b16 %v484, %v483
  %v558 = vpack.c.b16 %v486, %v485
  %631 = vmatprep.subr.bf16.mxu0 0
  %632 = vmatpush1.bf16.msra.mxu0 %v494
  %633 = vmatprep.subr.bf16.mxu0 0
  %634 = vmatpush1.bf16.msra.mxu0 %v493
  %635 = vmatprep.subr.bf16.mxu0 0
  %636 = vmatpush1.bf16.msra.mxu0 %v492
  %637 = vmatprep.subr.bf16.mxu0 0
  %638 = vmatpush1.bf16.msra.mxu0 %v491
  %639 = vmatprep.subr.bf16.mxu0 0
  %640 = vmatpush1.bf16.msra.mxu0 %v490
  %641 = vmatprep.subr.bf16.mxu0 0
  %642 = vmatpush1.bf16.msra.mxu0 %v489
  %643 = vmatprep.subr.bf16.mxu0 0
  %644 = vmatpush1.bf16.msra.mxu0 %v488
  %645 = vmatprep.subr.bf16.mxu0 0
  %646 = vmatpush1.bf16.msra.mxu0 %v487
  %647 = vmatprep.subr.bf16.mxu0 0
  %648 = vmatpush2.bf16.msra.mxu0 %v502
  %649 = vmatprep.subr.bf16.mxu0 0
  %650 = vmatpush2.bf16.msra.mxu0 %v501
  %651 = vmatprep.subr.bf16.mxu0 0
  %652 = vmatpush2.bf16.msra.mxu0 %v500
  %653 = vmatprep.subr.bf16.mxu0 0
  %654 = vmatpush2.bf16.msra.mxu0 %v499
  %655 = vmatprep.subr.bf16.mxu0 0
  %656 = vmatpush2.bf16.msra.mxu0 %v498
  %657 = vmatprep.subr.bf16.mxu0 0
  %658 = vmatpush2.bf16.msra.mxu0 %v497
  %659 = vmatprep.subr.bf16.mxu0 0
  %660 = vmatpush2.bf16.msra.mxu0 %v496
  %661 = vmatprep.subr.bf16.mxu0 0
  %662 = vmatpush2.bf16.msra.mxu0 %v495
  %663 = vmatprep.mubr.bf16.mxu0 %v182
  %664 = vmatmul.mubr.bf16.gmra.mxu0 %v181
  %v665 = vpop.f32.mrf.mxu0
  %v666 = vadd.f32 0.0, %v665
  %v667 = vpop.f32.mrf.mxu0
  %v668 = vpop.f32.mrf.mxu0
  %v669 = vpop.f32.mrf.mxu0
  %670 = vdwg.mxu0
  %671 = vmatprep.subr.bf16.mxu0 0
  %672 = vmatpush1.bf16.msra.mxu0 %v510
  %673 = vmatprep.subr.bf16.mxu0 0
  %674 = vmatpush1.bf16.msra.mxu0 %v509
  %675 = vmatprep.subr.bf16.mxu0 0
  %676 = vmatpush1.bf16.msra.mxu0 %v508
  %677 = vmatprep.subr.bf16.mxu0 0
  %678 = vmatpush1.bf16.msra.mxu0 %v507
  %679 = vmatprep.subr.bf16.mxu0 0
  %680 = vmatpush1.bf16.msra.mxu0 %v506
  %681 = vmatprep.subr.bf16.mxu0 0
  %682 = vmatpush1.bf16.msra.mxu0 %v505
  %683 = vmatprep.subr.bf16.mxu0 0
  %684 = vmatpush1.bf16.msra.mxu0 %v504
  %685 = vmatprep.subr.bf16.mxu0 0
  %686 = vmatpush1.bf16.msra.mxu0 %v503
  %687 = vmatprep.subr.bf16.mxu0 0
  %688 = vmatpush2.bf16.msra.mxu0 %v518
  %689 = vmatprep.subr.bf16.mxu0 0
  %690 = vmatpush2.bf16.msra.mxu0 %v517
  %691 = vmatprep.subr.bf16.mxu0 0
  %692 = vmatpush2.bf16.msra.mxu0 %v516
  %693 = vmatprep.subr.bf16.mxu0 0
  %694 = vmatpush2.bf16.msra.mxu0 %v515
  %695 = vmatprep.subr.bf16.mxu0 0
  %696 = vmatpush2.bf16.msra.mxu0 %v514
  %697 = vmatprep.subr.bf16.mxu0 0
  %698 = vmatpush2.bf16.msra.mxu0 %v513
  %699 = vmatprep.subr.bf16.mxu0 0
  %700 = vmatpush2.bf16.msra.mxu0 %v512
  %701 = vmatprep.subr.bf16.mxu0 0
  %702 = vmatpush2.bf16.msra.mxu0 %v511
  %703 = vmatprep.mubr.bf16.mxu0 %v184
  %704 = vmatmul.mubr.bf16.gmra.mxu0 %v183
  %v705 = vpop.f32.mrf.mxu0
  %v706 = vadd.f32 %v666, %v705
  %v707 = vpop.f32.mrf.mxu0
  %v708 = vpop.f32.mrf.mxu0
  %v709 = vpop.f32.mrf.mxu0
  %710 = vdwg.mxu0
  %711 = vmatprep.subr.bf16.mxu0 0
  %712 = vmatpush1.bf16.msra.mxu0 %v526
  %713 = vmatprep.subr.bf16.mxu0 0
  %714 = vmatpush1.bf16.msra.mxu0 %v525
  %715 = vmatprep.subr.bf16.mxu0 0
  %716 = vmatpush1.bf16.msra.mxu0 %v524
  %717 = vmatprep.subr.bf16.mxu0 0
  %718 = vmatpush1.bf16.msra.mxu0 %v523
  %719 = vmatprep.subr.bf16.mxu0 0
  %720 = vmatpush1.bf16.msra.mxu0 %v522
  %721 = vmatprep.subr.bf16.mxu0 0
  %722 = vmatpush1.bf16.msra.mxu0 %v521
  %723 = vmatprep.subr.bf16.mxu0 0
  %724 = vmatpush1.bf16.msra.mxu0 %v520
  %725 = vmatprep.subr.bf16.mxu0 0
  %726 = vmatpush1.bf16.msra.mxu0 %v519
  %727 = vmatprep.subr.bf16.mxu0 0
  %728 = vmatpush2.bf16.msra.mxu0 %v534
  %729 = vmatprep.subr.bf16.mxu0 0
  %730 = vmatpush2.bf16.msra.mxu0 %v533
  %731 = vmatprep.subr.bf16.mxu0 0
  %732 = vmatpush2.bf16.msra.mxu0 %v532
  %733 = vmatprep.subr.bf16.mxu0 0
  %734 = vmatpush2.bf16.msra.mxu0 %v531
  %735 = vmatprep.subr.bf16.mxu0 0
  %736 = vmatpush2.bf16.msra.mxu0 %v530
  %737 = vmatprep.subr.bf16.mxu0 0
  %738 = vmatpush2.bf16.msra.mxu0 %v529
  %739 = vmatprep.subr.bf16.mxu0 0
  %740 = vmatpush2.bf16.msra.mxu0 %v528
  %741 = vmatprep.subr.bf16.mxu0 0
  %742 = vmatpush2.bf16.msra.mxu0 %v527
  %743 = vmatprep.mubr.bf16.mxu0 %v186
  %744 = vmatmul.mubr.bf16.gmra.mxu0 %v185
  %v745 = vpop.f32.mrf.mxu0
  %v746 = vadd.f32 %v706, %v745
  %v747 = vpop.f32.mrf.mxu0
  %v748 = vpop.f32.mrf.mxu0
  %v749 = vpop.f32.mrf.mxu0
  %750 = vdwg.mxu0
  %751 = vmatprep.subr.bf16.mxu0 0
  %752 = vmatpush1.bf16.msra.mxu0 %v542
  %753 = vmatprep.subr.bf16.mxu0 0
  %754 = vmatpush1.bf16.msra.mxu0 %v541
  %755 = vmatprep.subr.bf16.mxu0 0
  %756 = vmatpush1.bf16.msra.mxu0 %v540
  %757 = vmatprep.subr.bf16.mxu0 0
  %758 = vmatpush1.bf16.msra.mxu0 %v539
  %759 = vmatprep.subr.bf16.mxu0 0
  %760 = vmatpush1.bf16.msra.mxu0 %v538
  %761 = vmatprep.subr.bf16.mxu0 0
  %762 = vmatpush1.bf16.msra.mxu0 %v537
  %763 = vmatprep.subr.bf16.mxu0 0
  %764 = vmatpush1.bf16.msra.mxu0 %v536
  %765 = vmatprep.subr.bf16.mxu0 0
  %766 = vmatpush1.bf16.msra.mxu0 %v535
  %767 = vmatprep.subr.bf16.mxu0 0
  %768 = vmatpush2.bf16.msra.mxu0 %v550
  %769 = vmatprep.subr.bf16.mxu0 0
  %770 = vmatpush2.bf16.msra.mxu0 %v549
  %771 = vmatprep.subr.bf16.mxu0 0
  %772 = vmatpush2.bf16.msra.mxu0 %v548
  %773 = vmatprep.subr.bf16.mxu0 0
  %774 = vmatpush2.bf16.msra.mxu0 %v547
  %775 = vmatprep.subr.bf16.mxu0 0
  %776 = vmatpush2.bf16.msra.mxu0 %v546
  %777 = vmatprep.subr.bf16.mxu0 0
  %778 = vmatpush2.bf16.msra.mxu0 %v545
  %779 = vmatprep.subr.bf16.mxu0 0
  %780 = vmatpush2.bf16.msra.mxu0 %v544
  %781 = vmatprep.subr.bf16.mxu0 0
  %782 = vmatpush2.bf16.msra.mxu0 %v543
  %783 = vmatprep.mubr.bf16.mxu0 %v188
  %784 = vmatmul.mubr.bf16.gmra.mxu0 %v187
  %v785 = vpop.f32.mrf.mxu0
  %v786 = vadd.f32 %v746, %v785
  %v787 = vpop.f32.mrf.mxu0
  %v788 = vpop.f32.mrf.mxu0
  %v789 = vpop.f32.mrf.mxu0
  %790 = vdwg.mxu0
  %791 = vmatprep.subr.bf16.mxu0 0
  %792 = vmatpush1.bf16.msra.mxu0 %v558
  %793 = vmatprep.subr.bf16.mxu0 0
  %794 = vmatpush1.bf16.msra.mxu0 %v557
  %795 = vmatprep.subr.bf16.mxu0 0
  %796 = vmatpush1.bf16.msra.mxu0 %v556
  %797 = vmatprep.subr.bf16.mxu0 0
  %798 = vmatpush1.bf16.msra.mxu0 %v555
  %799 = vmatprep.subr.bf16.mxu0 0
  %800 = vmatpush1.bf16.msra.mxu0 %v554
  %801 = vmatprep.subr.bf16.mxu0 0
  %802 = vmatpush1.bf16.msra.mxu0 %v553
  %803 = vmatprep.subr.bf16.mxu0 0
  %804 = vmatpush1.bf16.msra.mxu0 %v552
  %805 = vmatprep.subr.bf16.mxu0 0
  %806 = vmatpush1.bf16.msra.mxu0 %v551
  %807 = vmatprep.subr.bf16.mxu0 0
  %808 = vmatpush2.bf16.msra.mxu0 0
  %809 = vmatprep.subr.bf16.mxu0 0
  %810 = vmatpush2.bf16.msra.mxu0 0
  %811 = vmatprep.subr.bf16.mxu0 0
  %812 = vmatpush2.bf16.msra.mxu0 0
  %813 = vmatprep.subr.bf16.mxu0 0
  %814 = vmatpush2.bf16.msra.mxu0 0
  %815 = vmatprep.subr.bf16.mxu0 0
  %816 = vmatpush2.bf16.msra.mxu0 0
  %817 = vmatprep.subr.bf16.mxu0 0
  %818 = vmatpush2.bf16.msra.mxu0 0
  %819 = vmatprep.subr.bf16.mxu0 0
  %820 = vmatpush2.bf16.msra.mxu0 0
  %821 = vmatprep.subr.bf16.mxu0 0
  %822 = vmatpush2.bf16.msra.mxu0 0
  %823 = vmatprep.mubr.bf16.mxu0 0
  %824 = vmatmul.mubr.bf16.gmra.mxu0 %v189
  %v825 = vpop.f32.mrf.mxu0
  %v826 = vadd.f32 %v786, %v825
  %v827 = vpop.f32.mrf.mxu0
  %v828 = vpop.f32.mrf.mxu0
  %v829 = vpop.f32.mrf.mxu0
  %830 = vdwg.mxu0
  %v831 = vrot.slane %v826, 4
  %v832 = vadd.f32 %v826, %v831
  %v833 = vrot.slane %v832, 2
  %v834 = vadd.f32 %v832, %v833
  %v835 = vrot.slane %v834, 1
  %v836 = vadd.f32 %v834, %v835
  %v837 = vmul.f32 %v826, %v826
  %v838 = vrot.slane %v837, 4
  %v839 = vadd.f32 %v837, %v838
  %v840 = vrot.slane %v839, 2
  %v841 = vadd.f32 %v839, %v840
  %v842 = vrot.slane %v841, 1
  %v843 = vadd.f32 %v841, %v842
  %v844 = vmul.f32 %v836, 0.125
  %v845 = vmul.f32 %v843, 0.125
  %v846 = vmul.f32 %v844, %v844
  %v847 = vsub.f32 %v845, %v846
  %v848 = vmax.f32 %v847, 0.0
  %v849 = vld [vmem:[%s2] sm:$0x1]
  %v850 = vadd.f32 %v848, 1e-05
  %v851 = vrsqrt.pop %v850
  %v852 = vmul.f32 %v849, %v851
  %v853 = vld [vmem:[%s3] sm:$0x1]
  %v854 = vmul.f32 %v844, %v852
  %v855 = vsub.f32 %v853, %v854
  %v857 = vlaneseq
  %v858 = vshrl.u32 %v857, 7
  %v859 = vsub.s32 0, %v858
  %v860 = vrot.slane %v852, %v859
  %v862 = vmul.f32 %v826, %v860
  %v864 = vlaneseq
  %v865 = vshrl.u32 %v864, 7
  %v866 = vsub.s32 0, %v865
  %v867 = vrot.slane %v855, %v866
  %v869 = vadd.f32 %v862, %v867
  %v870 = vmax.f32 %v869, 0.0
  %871 = vst [vmem:[%s4] sm:$0xff] %v870
  // Predicated region
  $region18: #{encdec_forward.12} parent=0 // pred_check
    _
  $region19: #{encdec_forward.12} parent=0 // pred_check_branch
    %873 = sbr.rel (0) target = $region21
  $region20: #{encdec_forward.12} parent=0 // pred_region
    _
  $region21: #{encdec_forward.12} parent=0 // pred_fallthru
    _
  // Predicated region
  $region22: #{encdec_forward.12} parent=0 // pred_check
    _
  $region23: #{encdec_forward.12} parent=0 // pred_check_branch
    %875 = sbr.rel (0) target = $region25
  $region24: #{encdec_forward.12} parent=0 // pred_region
    _
  $region25: #{encdec_forward.12} parent=0 // pred_fallthru
    _

// kernel: encdec_forward.13
$region0: #{encdec_forward.13}
  #allocation0 [shape = 'u32[]', space=smem, size = 0x4, offset = 0x4, fixed_abs, tag = 'smem constant byte address 0x4 - core index']
  #allocation1 [shape = 'u32[144,128]{1,0:T(1,128)}', space=vmem, size = 0x12000, scoped, tag = 'internal scratch']
  %s0 = inlined_call_operand.vmem [shape: bf16[32,576], index: 0, kind: input, shape index: {}]
  %s1 = inlined_call_operand.vmem [shape: bf16[576,128], index: 1, kind: input, shape index: {}]
  %s2 = inlined_call_operand.vmem [shape: f32[1,128], index: 2, kind: input, shape index: {}]
  %s3 = inlined_call_operand.vmem [shape: f32[1,128], index: 3, kind: input, shape index: {}]
  %s4 = inlined_call_operand.vmem [shape: f32[32,128], index: 4, kind: output, shape index: {}]
  %s5 = sld [smem:[#allocation0]]
  $region26: #{encdec_forward.13} parent=0
    _
  %s7 = ssub.s32 1, %s5
  %s8 = scalar_select 0, %s7, %s5
  // Predicated region
  $region2: #{encdec_forward.13} parent=0 // pred_check
    _
  $region3: #{encdec_forward.13} parent=0 // pred_check_branch
    %10 = sbr.rel (0) target = $region5
  $region4: #{encdec_forward.13} parent=0 // pred_region
    _
  $region5: #{encdec_forward.13} parent=0 // pred_fallthru
    _
  // Predicated region
  $region6: #{encdec_forward.13} parent=0 // pred_check
    _
  $region7: #{encdec_forward.13} parent=0 // pred_check_branch
    %12 = sbr.rel (0) target = $region9
  $region8: #{encdec_forward.13} parent=0 // pred_region
    _
  $region9: #{encdec_forward.13} parent=0 // pred_fallthru
    _
  // Predicated region
  $region10: #{encdec_forward.13} parent=0 // pred_check
    _
  $region11: #{encdec_forward.13} parent=0 // pred_check_branch
    %14 = sbr.rel (0) target = $region13
  $region12: #{encdec_forward.13} parent=0 // pred_region
    _
  $region13: #{encdec_forward.13} parent=0 // pred_fallthru
    _
  // Predicated region
  $region14: #{encdec_forward.13} parent=0 // pred_check
    _
  $region15: #{encdec_forward.13} parent=0 // pred_check_branch
    %16 = sbr.rel (0) target = $region17
  $region16: #{encdec_forward.13} parent=0 // pred_region
    _
  $region17: #{encdec_forward.13} parent=0 // pred_fallthru
    _
  %v18 = vld [vmem:[%s0] sm:$0xff]
  %v19 = vld [vmem:[%s0 + $0x8] sm:$0xff]
  %v20 = vld [vmem:[%s0 + $0x10] sm:$0xf]
  %v21 = vld [vmem:[%s0 + $0x14] sm:$0xff]
  %v22 = vld [vmem:[%s0 + $0x1c] sm:$0xff]
  %v23 = vld [vmem:[%s0 + $0x24] sm:$0xf]
  %v24 = vld [vmem:[%s0 + $0x28] sm:$0xff]
  %v25 = vld [vmem:[%s0 + $0x30] sm:$0xff]
  %v26 = vld [vmem:[%s0 + $0x38] sm:$0xf]
  %v27 = vld [vmem:[%s0 + $0x3c] sm:$0xff]
  %v28 = vld [vmem:[%s0 + $0x44] sm:$0xff]
  %v29 = vld [vmem:[%s0 + $0x4c] sm:$0xf]
  %v30 = vld [vmem:[%s1] sm:$0xf]
  %v31 = vld [vmem:[%s1 + $0x4] sm:$0xf]
  %v32 = vld [vmem:[%s1 + $0x8] sm:$0xf]
  %v33 = vld [vmem:[%s1 + $0xc] sm:$0xf]
  %v34 = vld [vmem:[%s1 + $0x10] sm:$0xf]
  %v35 = vld [vmem:[%s1 + $0x14] sm:$0xf]
  %v36 = vld [vmem:[%s1 + $0x18] sm:$0xf]
  %v37 = vld [vmem:[%s1 + $0x1c] sm:$0xf]
  %v38 = vld [vmem:[%s1 + $0x20] sm:$0xf]
  %v39 = vld [vmem:[%s1 + $0x24] sm:$0xf]
  %v40 = vld [vmem:[%s1 + $0x28] sm:$0xf]
  %v41 = vld [vmem:[%s1 + $0x2c] sm:$0xf]
  %v42 = vld [vmem:[%s1 + $0x30] sm:$0xf]
  %v43 = vld [vmem:[%s1 + $0x34] sm:$0xf]
  %v44 = vld [vmem:[%s1 + $0x38] sm:$0xf]
  %v45 = vld [vmem:[%s1 + $0x3c] sm:$0xf]
  %v46 = vld [vmem:[%s1 + $0x40] sm:$0xf]
  %v47 = vld [vmem:[%s1 + $0x44] sm:$0xf]
  %v48 = vld [vmem:[%s1 + $0x48] sm:$0xf]
  %v49 = vld [vmem:[%s1 + $0x4c] sm:$0xf]
  %v50 = vld [vmem:[%s1 + $0x50] sm:$0xf]
  %v51 = vld [vmem:[%s1 + $0x54] sm:$0xf]
  %v52 = vld [vmem:[%s1 + $0x58] sm:$0xf]
  %v53 = vld [vmem:[%s1 + $0x5c] sm:$0xf]
  %v54 = vld [vmem:[%s1 + $0x60] sm:$0xf]
  %v55 = vld [vmem:[%s1 + $0x64] sm:$0xf]
  %v56 = vld [vmem:[%s1 + $0x68] sm:$0xf]
  %v57 = vld [vmem:[%s1 + $0x6c] sm:$0xf]
  %v58 = vld [vmem:[%s1 + $0x70] sm:$0xf]
  %v59 = vld [vmem:[%s1 + $0x74] sm:$0xf]
  %v60 = vld [vmem:[%s1 + $0x78] sm:$0xf]
  %v61 = vld [vmem:[%s1 + $0x7c] sm:$0xf]
  %v62 = vld [vmem:[%s1 + $0x80] sm:$0xf]
  %v63 = vld [vmem:[%s1 + $0x84] sm:$0xf]
  %v64 = vld [vmem:[%s1 + $0x88] sm:$0xf]
  %v65 = vld [vmem:[%s1 + $0x8c] sm:$0xf]
  %v66 = vld [vmem:[%s1 + $0x90] sm:$0xf]
  %v67 = vld [vmem:[%s1 + $0x94] sm:$0xf]
  %v68 = vld [vmem:[%s1 + $0x98] sm:$0xf]
  %v69 = vld [vmem:[%s1 + $0x9c] sm:$0xf]
  %v70 = vld [vmem:[%s1 + $0xa0] sm:$0xf]
  %v71 = vld [vmem:[%s1 + $0xa4] sm:$0xf]
  %v72 = vld [vmem:[%s1 + $0xa8] sm:$0xf]
  %v73 = vld [vmem:[%s1 + $0xac] sm:$0xf]
  %v74 = vld [vmem:[%s1 + $0xb0] sm:$0xf]
  %v75 = vld [vmem:[%s1 + $0xb4] sm:$0xf]
  %v76 = vld [vmem:[%s1 + $0xb8] sm:$0xf]
  %v77 = vld [vmem:[%s1 + $0xbc] sm:$0xf]
  %v78 = vld [vmem:[%s1 + $0xc0] sm:$0xf]
  %v79 = vld [vmem:[%s1 + $0xc4] sm:$0xf]
  %v80 = vld [vmem:[%s1 + $0xc8] sm:$0xf]
  %v81 = vld [vmem:[%s1 + $0xcc] sm:$0xf]
  %v82 = vld [vmem:[%s1 + $0xd0] sm:$0xf]
  %v83 = vld [vmem:[%s1 + $0xd4] sm:$0xf]
  %v84 = vld [vmem:[%s1 + $0xd8] sm:$0xf]
  %v85 = vld [vmem:[%s1 + $0xdc] sm:$0xf]
  %v86 = vld [vmem:[%s1 + $0xe0] sm:$0xf]
  %v87 = vld [vmem:[%s1 + $0xe4] sm:$0xf]
  %v88 = vld [vmem:[%s1 + $0xe8] sm:$0xf]
  %v89 = vld [vmem:[%s1 + $0xec] sm:$0xf]
  %v90 = vld [vmem:[%s1 + $0xf0] sm:$0xf]
  %v91 = vld [vmem:[%s1 + $0xf4] sm:$0xf]
  %v92 = vld [vmem:[%s1 + $0xf8] sm:$0xf]
  %v93 = vld [vmem:[%s1 + $0xfc] sm:$0xf]
  %v94 = vld [vmem:[%s1 + $0x100] sm:$0xf]
  %v95 = vld [vmem:[%s1 + $0x104] sm:$0xf]
  %v96 = vld [vmem:[%s1 + $0x108] sm:$0xf]
  %v97 = vld [vmem:[%s1 + $0x10c] sm:$0xf]
  %v98 = vld [vmem:[%s1 + $0x110] sm:$0xf]
  %v99 = vld [vmem:[%s1 + $0x114] sm:$0xf]
  %v100 = vld [vmem:[%s1 + $0x118] sm:$0xf]
  %v101 = vld [vmem:[%s1 + $0x11c] sm:$0xf]
  %v114 = vunpack.c.l.b16 %v18
  %v115 = vunpack.c.h.b16 %v18
  %v116 = vunpack.c.l.b16 %v19
  %v117 = vunpack.c.h.b16 %v19
  %v118 = vunpack.c.l.b16 %v20
  %v119 = vunpack.c.l.b16 %v21
  %v120 = vunpack.c.h.b16 %v21
  %v121 = vunpack.c.l.b16 %v22
  %v122 = vunpack.c.h.b16 %v22
  %v123 = vunpack.c.l.b16 %v23
  %v124 = vunpack.c.l.b16 %v24
  %v125 = vunpack.c.h.b16 %v24
  %v126 = vunpack.c.l.b16 %v25
  %v127 = vunpack.c.h.b16 %v25
  %v128 = vunpack.c.l.b16 %v26
  %v129 = vunpack.c.l.b16 %v27
  %v130 = vunpack.c.h.b16 %v27
  %v131 = vunpack.c.l.b16 %v28
  %v132 = vunpack.c.h.b16 %v28
  %v133 = vunpack.c.l.b16 %v29
  %v134 = vpack.c.b16 %v119, %v114
  %v135 = vpack.c.b16 %v120, %v115
  %v136 = vpack.c.b16 %v121, %v116
  %v137 = vpack.c.b16 %v122, %v117
  %v138 = vpack.c.b16 %v123, %v118
  %v139 = vpack.c.b16 %v129, %v124
  %v140 = vpack.c.b16 %v130, %v125
  %v141 = vpack.c.b16 %v131, %v126
  %v142 = vpack.c.b16 %v132, %v127
  %v143 = vpack.c.b16 %v133, %v128
  %v224 = vunpack.c.l.b16 %v30
  %v225 = vunpack.c.l.b16 %v31
  %v226 = vunpack.c.l.b16 %v32
  %v227 = vunpack.c.l.b16 %v33
  %v228 = vunpack.c.l.b16 %v34
  %v229 = vunpack.c.l.b16 %v35
  %v230 = vunpack.c.l.b16 %v36
  %v231 = vunpack.c.l.b16 %v37
  %v232 = vunpack.c.l.b16 %v38
  %v233 = vunpack.c.l.b16 %v39
  %v234 = vunpack.c.l.b16 %v40
  %v235 = vunpack.c.l.b16 %v41
  %v236 = vunpack.c.l.b16 %v42
  %v237 = vunpack.c.l.b16 %v43
  %v238 = vunpack.c.l.b16 %v44
  %v239 = vunpack.c.l.b16 %v45
  %v240 = vunpack.c.l.b16 %v46
  %v241 = vunpack.c.l.b16 %v47
  %v242 = vunpack.c.l.b16 %v48
  %v243 = vunpack.c.l.b16 %v49
  %v244 = vunpack.c.l.b16 %v50
  %v245 = vunpack.c.l.b16 %v51
  %v246 = vunpack.c.l.b16 %v52
  %v247 = vunpack.c.l.b16 %v53
  %v248 = vunpack.c.l.b16 %v54
  %v249 = vunpack.c.l.b16 %v55
  %v250 = vunpack.c.l.b16 %v56
  %v251 = vunpack.c.l.b16 %v57
  %v252 = vunpack.c.l.b16 %v58
  %v253 = vunpack.c.l.b16 %v59
  %v254 = vunpack.c.l.b16 %v60
  %v255 = vunpack.c.l.b16 %v61
  %v256 = vunpack.c.l.b16 %v62
  %v257 = vunpack.c.l.b16 %v63
  %v258 = vunpack.c.l.b16 %v64
  %v259 = vunpack.c.l.b16 %v65
  %v260 = vunpack.c.l.b16 %v66
  %v261 = vunpack.c.l.b16 %v67
  %v262 = vunpack.c.l.b16 %v68
  %v263 = vunpack.c.l.b16 %v69
  %v264 = vunpack.c.l.b16 %v70
  %v265 = vunpack.c.l.b16 %v71
  %v266 = vunpack.c.l.b16 %v72
  %v267 = vunpack.c.l.b16 %v73
  %v268 = vunpack.c.l.b16 %v74
  %v269 = vunpack.c.l.b16 %v75
  %v270 = vunpack.c.l.b16 %v76
  %v271 = vunpack.c.l.b16 %v77
  %v272 = vunpack.c.l.b16 %v78
  %v273 = vunpack.c.l.b16 %v79
  %v274 = vunpack.c.l.b16 %v80
  %v275 = vunpack.c.l.b16 %v81
  %v276 = vunpack.c.l.b16 %v82
  %v277 = vunpack.c.l.b16 %v83
  %v278 = vunpack.c.l.b16 %v84
  %v279 = vunpack.c.l.b16 %v85
  %v280 = vunpack.c.l.b16 %v86
  %v281 = vunpack.c.l.b16 %v87
  %v282 = vunpack.c.l.b16 %v88
  %v283 = vunpack.c.l.b16 %v89
  %v284 = vunpack.c.l.b16 %v90
  %v285 = vunpack.c.l.b16 %v91
  %v286 = vunpack.c.l.b16 %v92
  %v287 = vunpack.c.l.b16 %v93
  %v288 = vunpack.c.l.b16 %v94
  %v289 = vunpack.c.l.b16 %v95
  %v290 = vunpack.c.l.b16 %v96
  %v291 = vunpack.c.l.b16 %v97
  %v292 = vunpack.c.l.b16 %v98
  %v293 = vunpack.c.l.b16 %v99
  %v294 = vunpack.c.l.b16 %v100
  %v295 = vunpack.c.l.b16 %v101
  %v296 = vpack.c.b16 %v225, %v224
  %v297 = vpack.c.b16 %v227, %v226
  %v298 = vpack.c.b16 %v229, %v228
  %v299 = vpack.c.b16 %v231, %v230
  %v300 = vpack.c.b16 %v233, %v232
  %v301 = vpack.c.b16 %v235, %v234
  %v302 = vpack.c.b16 %v237, %v236
  %v303 = vpack.c.b16 %v239, %v238
  %v304 = vpack.c.b16 %v241, %v240
  %v305 = vpack.c.b16 %v243, %v242
  %v306 = vpack.c.b16 %v245, %v244
  %v307 = vpack.c.b16 %v247, %v246
  %v308 = vpack.c.b16 %v249, %v248
  %v309 = vpack.c.b16 %v251, %v250
  %v310 = vpack.c.b16 %v253, %v252
  %v311 = vpack.c.b16 %v255, %v254
  %v312 = vpack.c.b16 %v257, %v256
  %v313 = vpack.c.b16 %v259, %v258
  %v314 = vpack.c.b16 %v261, %v260
  %v315 = vpack.c.b16 %v263, %v262
  %v316 = vpack.c.b16 %v265, %v264
  %v317 = vpack.c.b16 %v267, %v266
  %v318 = vpack.c.b16 %v269, %v268
  %v319 = vpack.c.b16 %v271, %v270
  %v320 = vpack.c.b16 %v273, %v272
  %v321 = vpack.c.b16 %v275, %v274
  %v322 = vpack.c.b16 %v277, %v276
  %v323 = vpack.c.b16 %v279, %v278
  %v324 = vpack.c.b16 %v281, %v280
  %v325 = vpack.c.b16 %v283, %v282
  %v326 = vpack.c.b16 %v285, %v284
  %v327 = vpack.c.b16 %v287, %v286
  %v328 = vpack.c.b16 %v289, %v288
  %v329 = vpack.c.b16 %v291, %v290
  %v330 = vpack.c.b16 %v293, %v292
  %v331 = vpack.c.b16 %v295, %v294
  %vm368 = vcmask 523264
  %v370 = vsel %vm368, %v138, 0
  %v373 = vsel %vm368, %v143, 0
  %375 = vmatprep.subr.bf16.mxu0 0
  %376 = vmatpush1.bf16.msra.mxu0 %v303
  %377 = vmatprep.subr.bf16.mxu0 0
  %378 = vmatpush1.bf16.msra.mxu0 %v302
  %379 = vmatprep.subr.bf16.mxu0 0
  %380 = vmatpush1.bf16.msra.mxu0 %v301
  %381 = vmatprep.subr.bf16.mxu0 0
  %382 = vmatpush1.bf16.msra.mxu0 %v300
  %383 = vmatprep.subr.bf16.mxu0 0
  %384 = vmatpush1.bf16.msra.mxu0 %v299
  %385 = vmatprep.subr.bf16.mxu0 0
  %386 = vmatpush1.bf16.msra.mxu0 %v298
  %387 = vmatprep.subr.bf16.mxu0 0
  %388 = vmatpush1.bf16.msra.mxu0 %v297
  %389 = vmatprep.subr.bf16.mxu0 0
  %390 = vmatpush1.bf16.msra.mxu0 %v296
  %391 = vmatprep.subr.bf16.mxu0 0
  %392 = vmatpush2.bf16.msra.mxu0 %v311
  %393 = vmatprep.subr.bf16.mxu0 0
  %394 = vmatpush2.bf16.msra.mxu0 %v310
  %395 = vmatprep.subr.bf16.mxu0 0
  %396 = vmatpush2.bf16.msra.mxu0 %v309
  %397 = vmatprep.subr.bf16.mxu0 0
  %398 = vmatpush2.bf16.msra.mxu0 %v308
  %399 = vmatprep.subr.bf16.mxu0 0
  %400 = vmatpush2.bf16.msra.mxu0 %v307
  %401 = vmatprep.subr.bf16.mxu0 0
  %402 = vmatpush2.bf16.msra.mxu0 %v306
  %403 = vmatprep.subr.bf16.mxu0 0
  %404 = vmatpush2.bf16.msra.mxu0 %v305
  %405 = vmatprep.subr.bf16.mxu0 0
  %406 = vmatpush2.bf16.msra.mxu0 %v304
  %407 = vmatprep.mubr.bf16.mxu0 %v135
  %408 = vmatmul.mubr.bf16.gmra.mxu0 %v134
  %v409 = vpop.f32.mrf.mxu0
  %v410 = vadd.f32 0.0, %v409
  %v411 = vpop.f32.mrf.mxu0
  %v412 = vpop.f32.mrf.mxu0
  %v413 = vadd.f32 0.0, %v412
  %v414 = vpop.f32.mrf.mxu0
  %415 = vmatprep.mubr.bf16.mxu0 %v140
  %416 = vmatmul.mubr.bf16.gmra.mxu0 %v139
  %v417 = vpop.f32.mrf.mxu0
  %v418 = vadd.f32 0.0, %v417
  %v419 = vpop.f32.mrf.mxu0
  %v420 = vpop.f32.mrf.mxu0
  %v421 = vadd.f32 0.0, %v420
  %v422 = vpop.f32.mrf.mxu0
  %423 = vdwg.mxu0
  %424 = vmatprep.subr.bf16.mxu0 0
  %425 = vmatpush1.bf16.msra.mxu0 %v319
  %426 = vmatprep.subr.bf16.mxu0 0
  %427 = vmatpush1.bf16.msra.mxu0 %v318
  %428 = vmatprep.subr.bf16.mxu0 0
  %429 = vmatpush1.bf16.msra.mxu0 %v317
  %430 = vmatprep.subr.bf16.mxu0 0
  %431 = vmatpush1.bf16.msra.mxu0 %v316
  %432 = vmatprep.subr.bf16.mxu0 0
  %433 = vmatpush1.bf16.msra.mxu0 %v315
  %434 = vmatprep.subr.bf16.mxu0 0
  %435 = vmatpush1.bf16.msra.mxu0 %v314
  %436 = vmatprep.subr.bf16.mxu0 0
  %437 = vmatpush1.bf16.msra.mxu0 %v313
  %438 = vmatprep.subr.bf16.mxu0 0
  %439 = vmatpush1.bf16.msra.mxu0 %v312
  %440 = vmatprep.subr.bf16.mxu0 0
  %441 = vmatpush2.bf16.msra.mxu0 %v327
  %442 = vmatprep.subr.bf16.mxu0 0
  %443 = vmatpush2.bf16.msra.mxu0 %v326
  %444 = vmatprep.subr.bf16.mxu0 0
  %445 = vmatpush2.bf16.msra.mxu0 %v325
  %446 = vmatprep.subr.bf16.mxu0 0
  %447 = vmatpush2.bf16.msra.mxu0 %v324
  %448 = vmatprep.subr.bf16.mxu0 0
  %449 = vmatpush2.bf16.msra.mxu0 %v323
  %450 = vmatprep.subr.bf16.mxu0 0
  %451 = vmatpush2.bf16.msra.mxu0 %v322
  %452 = vmatprep.subr.bf16.mxu0 0
  %453 = vmatpush2.bf16.msra.mxu0 %v321
  %454 = vmatprep.subr.bf16.mxu0 0
  %455 = vmatpush2.bf16.msra.mxu0 %v320
  %456 = vmatprep.mubr.bf16.mxu0 %v137
  %457 = vmatmul.mubr.bf16.gmra.mxu0 %v136
  %v458 = vpop.f32.mrf.mxu0
  %v459 = vadd.f32 %v410, %v458
  %v460 = vpop.f32.mrf.mxu0
  %v461 = vpop.f32.mrf.mxu0
  %v462 = vadd.f32 %v413, %v461
  %v463 = vpop.f32.mrf.mxu0
  %464 = vmatprep.mubr.bf16.mxu0 %v142
  %465 = vmatmul.mubr.bf16.gmra.mxu0 %v141
  %v466 = vpop.f32.mrf.mxu0
  %v467 = vadd.f32 %v418, %v466
  %v468 = vpop.f32.mrf.mxu0
  %v469 = vpop.f32.mrf.mxu0
  %v470 = vadd.f32 %v421, %v469
  %v471 = vpop.f32.mrf.mxu0
  %472 = vdwg.mxu0
  %473 = vmatprep.subr.bf16.mxu0 0
  %474 = vmatpush1.bf16.msra.mxu0 0
  %475 = vmatprep.subr.bf16.mxu0 0
  %476 = vmatpush1.bf16.msra.mxu0 0
  %477 = vmatprep.subr.bf16.mxu0 0
  %478 = vmatpush1.bf16.msra.mxu0 0
  %479 = vmatprep.subr.bf16.mxu0 0
  %480 = vmatpush1.bf16.msra.mxu0 0
  %481 = vmatprep.subr.bf16.mxu0 0
  %482 = vmatpush1.bf16.msra.mxu0 %v331
  %483 = vmatprep.subr.bf16.mxu0 0
  %484 = vmatpush1.bf16.msra.mxu0 %v330
  %485 = vmatprep.subr.bf16.mxu0 0
  %486 = vmatpush1.bf16.msra.mxu0 %v329
  %487 = vmatprep.subr.bf16.mxu0 0
  %488 = vmatpush1.bf16.msra.mxu0 %v328
  %489 = vmatprep.subr.bf16.mxu0 0
  %490 = vmatpush2.bf16.msra.mxu0 0
  %491 = vmatprep.subr.bf16.mxu0 0
  %492 = vmatpush2.bf16.msra.mxu0 0
  %493 = vmatprep.subr.bf16.mxu0 0
  %494 = vmatpush2.bf16.msra.mxu0 0
  %495 = vmatprep.subr.bf16.mxu0 0
  %496 = vmatpush2.bf16.msra.mxu0 0
  %497 = vmatprep.subr.bf16.mxu0 0
  %498 = vmatpush2.bf16.msra.mxu0 0
  %499 = vmatprep.subr.bf16.mxu0 0
  %500 = vmatpush2.bf16.msra.mxu0 0
  %501 = vmatprep.subr.bf16.mxu0 0
  %502 = vmatpush2.bf16.msra.mxu0 0
  %503 = vmatprep.subr.bf16.mxu0 0
  %504 = vmatpush2.bf16.msra.mxu0 0
  %505 = vmatprep.mubr.bf16.mxu0 0
  %506 = vmatmul.mubr.bf16.gmra.mxu0 %v370
  %v507 = vpop.f32.mrf.mxu0
  %v508 = vadd.f32 %v459, %v507
  %v509 = vpop.f32.mrf.mxu0
  %v510 = vpop.f32.mrf.mxu0
  %v511 = vadd.f32 %v462, %v510
  %v512 = vpop.f32.mrf.mxu0
  %513 = vmatprep.mubr.bf16.mxu0 0
  %514 = vmatmul.mubr.bf16.gmra.mxu0 %v373
  %v515 = vpop.f32.mrf.mxu0
  %v516 = vadd.f32 %v467, %v515
  %v517 = vpop.f32.mrf.mxu0
  %v518 = vpop.f32.mrf.mxu0
  %v519 = vadd.f32 %v470, %v518
  %v520 = vpop.f32.mrf.mxu0
  %521 = vdwg.mxu0
  %v522 = vadd.f32 %v508, %v511
  %v523 = vadd.f32 %v522, %v516
  %v524 = vadd.f32 %v523, %v519
  %v525 = vrot.slane %v524, 4
  %v526 = vadd.f32 %v524, %v525
  %v527 = vrot.slane %v526, 2
  %v528 = vadd.f32 %v526, %v527
  %v529 = vrot.slane %v528, 1
  %v530 = vadd.f32 %v528, %v529
  %v531 = vmul.f32 %v508, %v508
  %v532 = vmul.f32 %v511, %v511
  %v533 = vmul.f32 %v516, %v516
  %v534 = vmul.f32 %v519, %v519
  %v535 = vadd.f32 %v531, %v532
  %v536 = vadd.f32 %v535, %v533
  %v537 = vadd.f32 %v536, %v534
  %v538 = vrot.slane %v537, 4
  %v539 = vadd.f32 %v537, %v538
  %v540 = vrot.slane %v539, 2
  %v541 = vadd.f32 %v539, %v540
  %v542 = vrot.slane %v541, 1
  %v543 = vadd.f32 %v541, %v542
  %v544 = vmul.f32 %v530, 0.03125
  %v545 = vmul.f32 %v543, 0.03125
  %v546 = vmul.f32 %v544, %v544
  %v547 = vsub.f32 %v545, %v546
  %v548 = vmax.f32 %v547, 0.0
  %v549 = vld [vmem:[%s2] sm:$0x1]
  %v550 = vadd.f32 %v548, 1e-05
  %v551 = vrsqrt.pop %v550
  %v552 = vmul.f32 %v549, %v551
  %v553 = vld [vmem:[%s3] sm:$0x1]
  %v554 = vmul.f32 %v544, %v552
  %v555 = vsub.f32 %v553, %v554
  %v557 = vlaneseq
  %v558 = vshrl.u32 %v557, 7
  %v559 = vsub.s32 0, %v558
  %v560 = vrot.slane %v552, %v559
  %v562 = vmul.f32 %v508, %v560
  %v563 = vmul.f32 %v511, %v560
  %v564 = vmul.f32 %v516, %v560
  %v565 = vmul.f32 %v519, %v560
  %v567 = vlaneseq
  %v568 = vshrl.u32 %v567, 7
  %v569 = vsub.s32 0, %v568
  %v570 = vrot.slane %v555, %v569
  %v572 = vadd.f32 %v562, %v570
  %v573 = vadd.f32 %v563, %v570
  %v574 = vadd.f32 %v564, %v570
  %v575 = vadd.f32 %v565, %v570
  %v576 = vmax.f32 %v572, 0.0
  %v577 = vmax.f32 %v573, 0.0
  %v578 = vmax.f32 %v574, 0.0
  %v579 = vmax.f32 %v575, 0.0
  %580 = vst [vmem:[%s4] sm:$0xff] %v576
  %581 = vst [vmem:[%s4 + $0x8] sm:$0xff] %v577
  %582 = vst [vmem:[%s4 + $0x10] sm:$0xff] %v578
  %583 = vst [vmem:[%s4 + $0x18] sm:$0xff] %v579
  // Predicated region
  $region18: #{encdec_forward.13} parent=0 // pred_check
    _
  $region19: #{encdec_forward.13} parent=0 // pred_check_branch
    %585 = sbr.rel (0) target = $region21
  $region20: #{encdec_forward.13} parent=0 // pred_region
    _
  $region21: #{encdec_forward.13} parent=0 // pred_fallthru
    _
  // Predicated region
  $region22: #{encdec_forward.13} parent=0 // pred_check
    _
  $region23: #{encdec_forward.13} parent=0 // pred_check_branch
    %587 = sbr.rel (0) target = $region25
  $region24: #{encdec_forward.13} parent=0 // pred_region
    _
  $region25: #{encdec_forward.13} parent=0 // pred_fallthru
    _

// kernel: encdec_forward.14
$region0: #{encdec_forward.14}
  #allocation0 [shape = 'u32[]', space=smem, size = 0x4, offset = 0x4, fixed_abs, tag = 'smem constant byte address 0x4 - core index']
  #allocation1 [shape = 'u32[144,128]{1,0:T(1,128)}', space=vmem, size = 0x12000, scoped, tag = 'internal scratch']
  %s0 = inlined_call_operand.vmem [shape: bf16[128,288], index: 0, kind: input, shape index: {}]
  %s1 = inlined_call_operand.vmem [shape: bf16[288,128], index: 1, kind: input, shape index: {}]
  %s2 = inlined_call_operand.vmem [shape: f32[1,128], index: 2, kind: input, shape index: {}]
  %s3 = inlined_call_operand.vmem [shape: f32[1,128], index: 3, kind: input, shape index: {}]
  %s4 = inlined_call_operand.vmem [shape: f32[128,128], index: 4, kind: output, shape index: {}]
  %s5 = sld [smem:[#allocation0]]
  $region26: #{encdec_forward.14} parent=0
    _
  %s7 = ssub.s32 1, %s5
  %s8 = scalar_select 0, %s7, %s5
  // Predicated region
  $region2: #{encdec_forward.14} parent=0 // pred_check
    _
  $region3: #{encdec_forward.14} parent=0 // pred_check_branch
    %10 = sbr.rel (0) target = $region5
  $region4: #{encdec_forward.14} parent=0 // pred_region
    _
  $region5: #{encdec_forward.14} parent=0 // pred_fallthru
    _
  // Predicated region
  $region6: #{encdec_forward.14} parent=0 // pred_check
    _
  $region7: #{encdec_forward.14} parent=0 // pred_check_branch
    %12 = sbr.rel (0) target = $region9
  $region8: #{encdec_forward.14} parent=0 // pred_region
    _
  $region9: #{encdec_forward.14} parent=0 // pred_fallthru
    _
  // Predicated region
  $region10: #{encdec_forward.14} parent=0 // pred_check
    _
  $region11: #{encdec_forward.14} parent=0 // pred_check_branch
    %14 = sbr.rel (0) target = $region13
  $region12: #{encdec_forward.14} parent=0 // pred_region
    _
  $region13: #{encdec_forward.14} parent=0 // pred_fallthru
    _
  // Predicated region
  $region14: #{encdec_forward.14} parent=0 // pred_check
    _
  $region15: #{encdec_forward.14} parent=0 // pred_check_branch
    %16 = sbr.rel (0) target = $region17
  $region16: #{encdec_forward.14} parent=0 // pred_region
    _
  $region17: #{encdec_forward.14} parent=0 // pred_fallthru
    _
  %v18 = vld [vmem:[%s0] sm:$0xff]
  %v19 = vld [vmem:[%s0 + $0x8] sm:$0xf]
  %v20 = vld [vmem:[%s0 + $0xc] sm:$0xff]
  %v21 = vld [vmem:[%s0 + $0x14] sm:$0xf]
  %v22 = vld [vmem:[%s0 + $0x18] sm:$0xff]
  %v23 = vld [vmem:[%s0 + $0x20] sm:$0xf]
  %v24 = vld [vmem:[%s0 + $0x24] sm:$0xff]
  %v25 = vld [vmem:[%s0 + $0x2c] sm:$0xf]
  %v26 = vld [vmem:[%s0 + $0x30] sm:$0xff]
  %v27 = vld [vmem:[%s0 + $0x38] sm:$0xf]
  %v28 = vld [vmem:[%s0 + $0x3c] sm:$0xff]
  %v29 = vld [vmem:[%s0 + $0x44] sm:$0xf]
  %v30 = vld [vmem:[%s0 + $0x48] sm:$0xff]
  %v31 = vld [vmem:[%s0 + $0x50] sm:$0xf]
  %v32 = vld [vmem:[%s0 + $0x54] sm:$0xff]
  %v33 = vld [vmem:[%s0 + $0x5c] sm:$0xf]
  %v34 = vld [vmem:[%s0 + $0x60] sm:$0xff]
  %v35 = vld [vmem:[%s0 + $0x68] sm:$0xf]
  %v36 = vld [vmem:[%s0 + $0x6c] sm:$0xff]
  %v37 = vld [vmem:[%s0 + $0x74] sm:$0xf]
  %v38 = vld [vmem:[%s0 + $0x78] sm:$0xff]
  %v39 = vld [vmem:[%s0 + $0x80] sm:$0xf]
  %v40 = vld [vmem:[%s0 + $0x84] sm:$0xff]
  %v41 = vld [vmem:[%s0 + $0x8c] sm:$0xf]
  %v42 = vld [vmem:[%s0 + $0x90] sm:$0xff]
  %v43 = vld [vmem:[%s0 + $0x98] sm:$0xf]
  %v44 = vld [vmem:[%s0 + $0x9c] sm:$0xff]
  %v45 = vld [vmem:[%s0 + $0xa4] sm:$0xf]
  %v46 = vld [vmem:[%s0 + $0xa8] sm:$0xff]
  %v47 = vld [vmem:[%s0 + $0xb0] sm:$0xf]
  %v48 = vld [vmem:[%s0 + $0xb4] sm:$0xff]
  %v49 = vld [vmem:[%s0 + $0xbc] sm:$0xf]
  %v50 = vld [vmem:[%s1] sm:$0xf]
  %v51 = vld [vmem:[%s1 + $0x4] sm:$0xf]
  %v52 = vld [vmem:[%s1 + $0x8] sm:$0xf]
  %v53 = vld [vmem:[%s1 + $0xc] sm:$0xf]
  %v54 = vld [vmem:[%s1 + $0x10] sm:$0xf]
  %v55 = vld [vmem:[%s1 + $0x14] sm:$0xf]
  %v56 = vld [vmem:[%s1 + $0x18] sm:$0xf]
  %v57 = vld [vmem:[%s1 + $0x1c] sm:$0xf]
  %v58 = vld [vmem:[%s1 + $0x20] sm:$0xf]
  %v59 = vld [vmem:[%s1 + $0x24] sm:$0xf]
  %v60 = vld [vmem:[%s1 + $0x28] sm:$0xf]
  %v61 = vld [vmem:[%s1 + $0x2c] sm:$0xf]
  %v62 = vld [vmem:[%s1 + $0x30] sm:$0xf]
  %v63 = vld [vmem:[%s1 + $0x34] sm:$0xf]
  %v64 = vld [vmem:[%s1 + $0x38] sm:$0xf]
  %v65 = vld [vmem:[%s1 + $0x3c] sm:$0xf]
  %v66 = vld [vmem:[%s1 + $0x40] sm:$0xf]
  %v67 = vld [vmem:[%s1 + $0x44] sm:$0xf]
  %v68 = vld [vmem:[%s1 + $0x48] sm:$0xf]
  %v69 = vld [vmem:[%s1 + $0x4c] sm:$0xf]
  %v70 = vld [vmem:[%s1 + $0x50] sm:$0xf]
  %v71 = vld [vmem:[%s1 + $0x54] sm:$0xf]
  %v72 = vld [vmem:[%s1 + $0x58] sm:$0xf]
  %v73 = vld [vmem:[%s1 + $0x5c] sm:$0xf]
  %v74 = vld [vmem:[%s1 + $0x60] sm:$0xf]
  %v75 = vld [vmem:[%s1 + $0x64] sm:$0xf]
  %v76 = vld [vmem:[%s1 + $0x68] sm:$0xf]
  %v77 = vld [vmem:[%s1 + $0x6c] sm:$0xf]
  %v78 = vld [vmem:[%s1 + $0x70] sm:$0xf]
  %v79 = vld [vmem:[%s1 + $0x74] sm:$0xf]
  %v80 = vld [vmem:[%s1 + $0x78] sm:$0xf]
  %v81 = vld [vmem:[%s1 + $0x7c] sm:$0xf]
  %v82 = vld [vmem:[%s1 + $0x80] sm:$0xf]
  %v83 = vld [vmem:[%s1 + $0x84] sm:$0xf]
  %v84 = vld [vmem:[%s1 + $0x88] sm:$0xf]
  %v85 = vld [vmem:[%s1 + $0x8c] sm:$0xf]
  %v118 = vunpack.c.l.b16 %v18
  %v119 = vunpack.c.h.b16 %v18
  %v120 = vunpack.c.l.b16 %v19
  %v121 = vunpack.c.l.b16 %v20
  %v122 = vunpack.c.h.b16 %v20
  %v123 = vunpack.c.l.b16 %v21
  %v124 = vunpack.c.l.b16 %v22
  %v125 = vunpack.c.h.b16 %v22
  %v126 = vunpack.c.l.b16 %v23
  %v127 = vunpack.c.l.b16 %v24
  %v128 = vunpack.c.h.b16 %v24
  %v129 = vunpack.c.l.b16 %v25
  %v130 = vunpack.c.l.b16 %v26
  %v131 = vunpack.c.h.b16 %v26
  %v132 = vunpack.c.l.b16 %v27
  %v133 = vunpack.c.l.b16 %v28
  %v134 = vunpack.c.h.b16 %v28
  %v135 = vunpack.c.l.b16 %v29
  %v136 = vunpack.c.l.b16 %v30
  %v137 = vunpack.c.h.b16 %v30
  %v138 = vunpack.c.l.b16 %v31
  %v139 = vunpack.c.l.b16 %v32
  %v140 = vunpack.c.h.b16 %v32
  %v141 = vunpack.c.l.b16 %v33
  %v142 = vunpack.c.l.b16 %v34
  %v143 = vunpack.c.h.b16 %v34
  %v144 = vunpack.c.l.b16 %v35
  %v145 = vunpack.c.l.b16 %v36
  %v146 = vunpack.c.h.b16 %v36
  %v147 = vunpack.c.l.b16 %v37
  %v148 = vunpack.c.l.b16 %v38
  %v149 = vunpack.c.h.b16 %v38
  %v150 = vunpack.c.l.b16 %v39
  %v151 = vunpack.c.l.b16 %v40
  %v152 = vunpack.c.h.b16 %v40
  %v153 = vunpack.c.l.b16 %v41
  %v154 = vunpack.c.l.b16 %v42
  %v155 = vunpack.c.h.b16 %v42
  %v156 = vunpack.c.l.b16 %v43
  %v157 = vunpack.c.l.b16 %v44
  %v158 = vunpack.c.h.b16 %v44
  %v159 = vunpack.c.l.b16 %v45
  %v160 = vunpack.c.l.b16 %v46
  %v161 = vunpack.c.h.b16 %v46
  %v162 = vunpack.c.l.b16 %v47
  %v163 = vunpack.c.l.b16 %v48
  %v164 = vunpack.c.h.b16 %v48
  %v165 = vunpack.c.l.b16 %v49
  %v166 = vpack.c.b16 %v121, %v118
  %v167 = vpack.c.b16 %v122, %v119
  %v168 = vpack.c.b16 %v123, %v120
  %v169 = vpack.c.b16 %v127, %v124
  %v170 = vpack.c.b16 %v128, %v125
  %v171 = vpack.c.b16 %v129, %v126
  %v172 = vpack.c.b16 %v133, %v130
  %v173 = vpack.c.b16 %v134, %v131
  %v174 = vpack.c.b16 %v135, %v132
  %v175 = vpack.c.b16 %v139, %v136
  %v176 = vpack.c.b16 %v140, %v137
  %v177 = vpack.c.b16 %v141, %v138
  %v178 = vpack.c.b16 %v145, %v142
  %v179 = vpack.c.b16 %v146, %v143
  %v180 = vpack.c.b16 %v147, %v144
  %v181 = vpack.c.b16 %v151, %v148
  %v182 = vpack.c.b16 %v152, %v149
  %v183 = vpack.c.b16 %v153, %v150
  %v184 = vpack.c.b16 %v157, %v154
  %v185 = vpack.c.b16 %v158, %v155
  %v186 = vpack.c.b16 %v159, %v156
  %v187 = vpack.c.b16 %v163, %v160
  %v188 = vpack.c.b16 %v164, %v161
  %v189 = vpack.c.b16 %v165, %v162
  %v242 = vunpack.c.l.b16 %v50
  %v243 = vunpack.c.l.b16 %v51
  %v244 = vunpack.c.l.b16 %v52
  %v245 = vunpack.c.l.b16 %v53
  %v246 = vunpack.c.l.b16 %v54
  %v247 = vunpack.c.l.b16 %v55
  %v248 = vunpack.c.l.b16 %v56
  %v249 = vunpack.c.l.b16 %v57
  %v250 = vunpack.c.l.b16 %v58
  %v251 = vunpack.c.l.b16 %v59
  %v252 = vunpack.c.l.b16 %v60
  %v253 = vunpack.c.l.b16 %v61
  %v254 = vunpack.c.l.b16 %v62
  %v255 = vunpack.c.l.b16 %v63
  %v256 = vunpack.c.l.b16 %v64
  %v257 = vunpack.c.l.b16 %v65
  %v258 = vunpack.c.l.b16 %v66
  %v259 = vunpack.c.l.b16 %v67
  %v260 = vunpack.c.l.b16 %v68
  %v261 = vunpack.c.l.b16 %v69
  %v262 = vunpack.c.l.b16 %v70
  %v263 = vunpack.c.l.b16 %v71
  %v264 = vunpack.c.l.b16 %v72
  %v265 = vunpack.c.l.b16 %v73
  %v266 = vunpack.c.l.b16 %v74
  %v267 = vunpack.c.l.b16 %v75
  %v268 = vunpack.c.l.b16 %v76
  %v269 = vunpack.c.l.b16 %v77
  %v270 = vunpack.c.l.b16 %v78
  %v271 = vunpack.c.l.b16 %v79
  %v272 = vunpack.c.l.b16 %v80
  %v273 = vunpack.c.l.b16 %v81
  %v274 = vunpack.c.l.b16 %v82
  %v275 = vunpack.c.l.b16 %v83
  %v276 = vunpack.c.l.b16 %v84
  %v277 = vunpack.c.l.b16 %v85
  %v278 = vpack.c.b16 %v243, %v242
  %v279 = vpack.c.b16 %v245, %v244
  %v280 = vpack.c.b16 %v247, %v246
  %v281 = vpack.c.b16 %v249, %v248
  %v282 = vpack.c.b16 %v251, %v250
  %v283 = vpack.c.b16 %v253, %v252
  %v284 = vpack.c.b16 %v255, %v254
  %v285 = vpack.c.b16 %v257, %v256
  %v286 = vpack.c.b16 %v259, %v258
  %v287 = vpack.c.b16 %v261, %v260
  %v288 = vpack.c.b16 %v263, %v262
  %v289 = vpack.c.b16 %v265, %v264
  %v290 = vpack.c.b16 %v267, %v266
  %v291 = vpack.c.b16 %v269, %v268
  %v292 = vpack.c.b16 %v271, %v270
  %v293 = vpack.c.b16 %v273, %v272
  %v294 = vpack.c.b16 %v275, %v274
  %v295 = vpack.c.b16 %v277, %v276
  %vm314 = vcmask 261120
  %v316 = vsel %vm314, %v168, 0
  %v319 = vsel %vm314, %v171, 0
  %v322 = vsel %vm314, %v174, 0
  %v325 = vsel %vm314, %v177, 0
  %v328 = vsel %vm314, %v180, 0
  %v331 = vsel %vm314, %v183, 0
  %v334 = vsel %vm314, %v186, 0
  %v337 = vsel %vm314, %v189, 0
  %339 = vmatprep.subr.bf16.mxu0 0
  %340 = vmatpush1.bf16.msra.mxu0 %v285
  %341 = vmatprep.subr.bf16.mxu0 0
  %342 = vmatpush1.bf16.msra.mxu0 %v284
  %343 = vmatprep.subr.bf16.mxu0 0
  %344 = vmatpush1.bf16.msra.mxu0 %v283
  %345 = vmatprep.subr.bf16.mxu0 0
  %346 = vmatpush1.bf16.msra.mxu0 %v282
  %347 = vmatprep.subr.bf16.mxu0 0
  %348 = vmatpush1.bf16.msra.mxu0 %v281
  %349 = vmatprep.subr.bf16.mxu0 0
  %350 = vmatpush1.bf16.msra.mxu0 %v280
  %351 = vmatprep.subr.bf16.mxu0 0
  %352 = vmatpush1.bf16.msra.mxu0 %v279
  %353 = vmatprep.subr.bf16.mxu0 0
  %354 = vmatpush1.bf16.msra.mxu0 %v278
  %355 = vmatprep.subr.bf16.mxu0 0
  %356 = vmatpush2.bf16.msra.mxu0 %v293
  %357 = vmatprep.subr.bf16.mxu0 0
  %358 = vmatpush2.bf16.msra.mxu0 %v292
  %359 = vmatprep.subr.bf16.mxu0 0
  %360 = vmatpush2.bf16.msra.mxu0 %v291
  %361 = vmatprep.subr.bf16.mxu0 0
  %362 = vmatpush2.bf16.msra.mxu0 %v290
  %363 = vmatprep.subr.bf16.mxu0 0
  %364 = vmatpush2.bf16.msra.mxu0 %v289
  %365 = vmatprep.subr.bf16.mxu0 0
  %366 = vmatpush2.bf16.msra.mxu0 %v288
  %367 = vmatprep.subr.bf16.mxu0 0
  %368 = vmatpush2.bf16.msra.mxu0 %v287
  %369 = vmatprep.subr.bf16.mxu0 0
  %370 = vmatpush2.bf16.msra.mxu0 %v286
  %371 = vmatprep.mubr.bf16.mxu0 %v167
  %372 = vmatmul.mubr.bf16.gmra.mxu0 %v166
  %v373 = vpop.f32.mrf.mxu0
  %v374 = vadd.f32 0.0, %v373
  %v375 = vpop.f32.mrf.mxu0
  %v376 = vpop.f32.mrf.mxu0
  %v377 = vadd.f32 0.0, %v376
  %v378 = vpop.f32.mrf.mxu0
  %379 = vmatprep.mubr.bf16.mxu0 %v170
  %380 = vmatmul.mubr.bf16.gmra.mxu0 %v169
  %v381 = vpop.f32.mrf.mxu0
  %v382 = vadd.f32 0.0, %v381
  %v383 = vpop.f32.mrf.mxu0
  %v384 = vpop.f32.mrf.mxu0
  %v385 = vadd.f32 0.0, %v384
  %v386 = vpop.f32.mrf.mxu0
  %387 = vmatprep.mubr.bf16.mxu0 %v173
  %388 = vmatmul.mubr.bf16.gmra.mxu0 %v172
  %v389 = vpop.f32.mrf.mxu0
  %v390 = vadd.f32 0.0, %v389
  %v391 = vpop.f32.mrf.mxu0
  %v392 = vpop.f32.mrf.mxu0
  %v393 = vadd.f32 0.0, %v392
  %v394 = vpop.f32.mrf.mxu0
  %395 = vmatprep.mubr.bf16.mxu0 %v176
  %396 = vmatmul.mubr.bf16.gmra.mxu0 %v175
  %v397 = vpop.f32.mrf.mxu0
  %v398 = vadd.f32 0.0, %v397
  %v399 = vpop.f32.mrf.mxu0
  %v400 = vpop.f32.mrf.mxu0
  %v401 = vadd.f32 0.0, %v400
  %v402 = vpop.f32.mrf.mxu0
  %403 = vmatprep.mubr.bf16.mxu0 %v179
  %404 = vmatmul.mubr.bf16.gmra.mxu0 %v178
  %v405 = vpop.f32.mrf.mxu0
  %v406 = vadd.f32 0.0, %v405
  %v407 = vpop.f32.mrf.mxu0
  %v408 = vpop.f32.mrf.mxu0
  %v409 = vadd.f32 0.0, %v408
  %v410 = vpop.f32.mrf.mxu0
  %411 = vmatprep.mubr.bf16.mxu0 %v182
  %412 = vmatmul.mubr.bf16.gmra.mxu0 %v181
  %v413 = vpop.f32.mrf.mxu0
  %v414 = vadd.f32 0.0, %v413
  %v415 = vpop.f32.mrf.mxu0
  %v416 = vpop.f32.mrf.mxu0
  %v417 = vadd.f32 0.0, %v416
  %v418 = vpop.f32.mrf.mxu0
  %419 = vmatprep.mubr.bf16.mxu0 %v185
  %420 = vmatmul.mubr.bf16.gmra.mxu0 %v184
  %v421 = vpop.f32.mrf.mxu0
  %v422 = vadd.f32 0.0, %v421
  %v423 = vpop.f32.mrf.mxu0
  %v424 = vpop.f32.mrf.mxu0
  %v425 = vadd.f32 0.0, %v424
  %v426 = vpop.f32.mrf.mxu0
  %427 = vmatprep.mubr.bf16.mxu0 %v188
  %428 = vmatmul.mubr.bf16.gmra.mxu0 %v187
  %v429 = vpop.f32.mrf.mxu0
  %v430 = vadd.f32 0.0, %v429
  %v431 = vpop.f32.mrf.mxu0
  %v432 = vpop.f32.mrf.mxu0
  %v433 = vadd.f32 0.0, %v432
  %v434 = vpop.f32.mrf.mxu0
  %435 = vdwg.mxu0
  %436 = vmatprep.subr.bf16.mxu0 0
  %437 = vmatpush1.bf16.msra.mxu0 0
  %438 = vmatprep.subr.bf16.mxu0 0
  %439 = vmatpush1.bf16.msra.mxu0 0
  %440 = vmatprep.subr.bf16.mxu0 0
  %441 = vmatpush1.bf16.msra.mxu0 0
  %442 = vmatprep.subr.bf16.mxu0 0
  %443 = vmatpush1.bf16.msra.mxu0 0
  %444 = vmatprep.subr.bf16.mxu0 0
  %445 = vmatpush1.bf16.msra.mxu0 0
  %446 = vmatprep.subr.bf16.mxu0 0
  %447 = vmatpush1.bf16.msra.mxu0 0
  %448 = vmatprep.subr.bf16.mxu0 0
  %449 = vmatpush1.bf16.msra.mxu0 %v295
  %450 = vmatprep.subr.bf16.mxu0 0
  %451 = vmatpush1.bf16.msra.mxu0 %v294
  %452 = vmatprep.subr.bf16.mxu0 0
  %453 = vmatpush2.bf16.msra.mxu0 0
  %454 = vmatprep.subr.bf16.mxu0 0
  %455 = vmatpush2.bf16.msra.mxu0 0
  %456 = vmatprep.subr.bf16.mxu0 0
  %457 = vmatpush2.bf16.msra.mxu0 0
  %458 = vmatprep.subr.bf16.mxu0 0
  %459 = vmatpush2.bf16.msra.mxu0 0
  %460 = vmatprep.subr.bf16.mxu0 0
  %461 = vmatpush2.bf16.msra.mxu0 0
  %462 = vmatprep.subr.bf16.mxu0 0
  %463 = vmatpush2.bf16.msra.mxu0 0
  %464 = vmatprep.subr.bf16.mxu0 0
  %465 = vmatpush2.bf16.msra.mxu0 0
  %466 = vmatprep.subr.bf16.mxu0 0
  %467 = vmatpush2.bf16.msra.mxu0 0
  %468 = vmatprep.mubr.bf16.mxu0 0
  %469 = vmatmul.mubr.bf16.gmra.mxu0 %v316
  %v470 = vpop.f32.mrf.mxu0
  %v471 = vadd.f32 %v374, %v470
  %v472 = vpop.f32.mrf.mxu0
  %v473 = vpop.f32.mrf.mxu0
  %v474 = vadd.f32 %v377, %v473
  %v475 = vpop.f32.mrf.mxu0
  %476 = vmatprep.mubr.bf16.mxu0 0
  %477 = vmatmul.mubr.bf16.gmra.mxu0 %v319
  %v478 = vpop.f32.mrf.mxu0
  %v479 = vadd.f32 %v382, %v478
  %v480 = vpop.f32.mrf.mxu0
  %v481 = vpop.f32.mrf.mxu0
  %v482 = vadd.f32 %v385, %v481
  %v483 = vpop.f32.mrf.mxu0
  %484 = vmatprep.mubr.bf16.mxu0 0
  %485 = vmatmul.mubr.bf16.gmra.mxu0 %v322
  %v486 = vpop.f32.mrf.mxu0
  %v487 = vadd.f32 %v390, %v486
  %v488 = vpop.f32.mrf.mxu0
  %v489 = vpop.f32.mrf.mxu0
  %v490 = vadd.f32 %v393, %v489
  %v491 = vpop.f32.mrf.mxu0
  %492 = vmatprep.mubr.bf16.mxu0 0
  %493 = vmatmul.mubr.bf16.gmra.mxu0 %v325
  %v494 = vpop.f32.mrf.mxu0
  %v495 = vadd.f32 %v398, %v494
  %v496 = vpop.f32.mrf.mxu0
  %v497 = vpop.f32.mrf.mxu0
  %v498 = vadd.f32 %v401, %v497
  %v499 = vpop.f32.mrf.mxu0
  %500 = vmatprep.mubr.bf16.mxu0 0
  %501 = vmatmul.mubr.bf16.gmra.mxu0 %v328
  %v502 = vpop.f32.mrf.mxu0
  %v503 = vadd.f32 %v406, %v502
  %v504 = vpop.f32.mrf.mxu0
  %v505 = vpop.f32.mrf.mxu0
  %v506 = vadd.f32 %v409, %v505
  %v507 = vpop.f32.mrf.mxu0
  %508 = vmatprep.mubr.bf16.mxu0 0
  %509 = vmatmul.mubr.bf16.gmra.mxu0 %v331
  %v510 = vpop.f32.mrf.mxu0
  %v511 = vadd.f32 %v414, %v510
  %v512 = vpop.f32.mrf.mxu0
  %v513 = vpop.f32.mrf.mxu0
  %v514 = vadd.f32 %v417, %v513
  %v515 = vpop.f32.mrf.mxu0
  %516 = vmatprep.mubr.bf16.mxu0 0
  %517 = vmatmul.mubr.bf16.gmra.mxu0 %v334
  %v518 = vpop.f32.mrf.mxu0
  %v519 = vadd.f32 %v422, %v518
  %v520 = vpop.f32.mrf.mxu0
  %v521 = vpop.f32.mrf.mxu0
  %v522 = vadd.f32 %v425, %v521
  %v523 = vpop.f32.mrf.mxu0
  %524 = vmatprep.mubr.bf16.mxu0 0
  %525 = vmatmul.mubr.bf16.gmra.mxu0 %v337
  %v526 = vpop.f32.mrf.mxu0
  %v527 = vadd.f32 %v430, %v526
  %v528 = vpop.f32.mrf.mxu0
  %v529 = vpop.f32.mrf.mxu0
  %v530 = vadd.f32 %v433, %v529
  %v531 = vpop.f32.mrf.mxu0
  %532 = vdwg.mxu0
  %v533 = vadd.f32 %v471, %v474
  %v534 = vadd.f32 %v533, %v479
  %v535 = vadd.f32 %v534, %v482
  %v536 = vadd.f32 %v535, %v487
  %v537 = vadd.f32 %v536, %v490
  %v538 = vadd.f32 %v537, %v495
  %v539 = vadd.f32 %v538, %v498
  %v540 = vadd.f32 %v539, %v503
  %v541 = vadd.f32 %v540, %v506
  %v542 = vadd.f32 %v541, %v511
  %v543 = vadd.f32 %v542, %v514
  %v544 = vadd.f32 %v543, %v519
  %v545 = vadd.f32 %v544, %v522
  %v546 = vadd.f32 %v545, %v527
  %v547 = vadd.f32 %v546, %v530
  %v548 = vrot.slane %v547, 4
  %v549 = vadd.f32 %v547, %v548
  %v550 = vrot.slane %v549, 2
  %v551 = vadd.f32 %v549, %v550
  %v552 = vrot.slane %v551, 1
  %v553 = vadd.f32 %v551, %v552
  %v554 = vmul.f32 %v471, %v471
  %v555 = vmul.f32 %v474, %v474
  %v556 = vmul.f32 %v479, %v479
  %v557 = vmul.f32 %v482, %v482
  %v558 = vmul.f32 %v487, %v487
  %v559 = vmul.f32 %v490, %v490
  %v560 = vmul.f32 %v495, %v495
  %v561 = vmul.f32 %v498, %v498
  %v562 = vmul.f32 %v503, %v503
  %v563 = vmul.f32 %v506, %v506
  %v564 = vmul.f32 %v511, %v511
  %v565 = vmul.f32 %v514, %v514
  %v566 = vmul.f32 %v519, %v519
  %v567 = vmul.f32 %v522, %v522
  %v568 = vmul.f32 %v527, %v527
  %v569 = vmul.f32 %v530, %v530
  %v570 = vadd.f32 %v554, %v555
  %v571 = vadd.f32 %v570, %v556
  %v572 = vadd.f32 %v571, %v557
  %v573 = vadd.f32 %v572, %v558
  %v574 = vadd.f32 %v573, %v559
  %v575 = vadd.f32 %v574, %v560
  %v576 = vadd.f32 %v575, %v561
  %v577 = vadd.f32 %v576, %v562
  %v578 = vadd.f32 %v577, %v563
  %v579 = vadd.f32 %v578, %v564
  %v580 = vadd.f32 %v579, %v565
  %v581 = vadd.f32 %v580, %v566
  %v582 = vadd.f32 %v581, %v567
  %v583 = vadd.f32 %v582, %v568
  %v584 = vadd.f32 %v583, %v569
  %v585 = vrot.slane %v584, 4
  %v586 = vadd.f32 %v584, %v585
  %v587 = vrot.slane %v586, 2
  %v588 = vadd.f32 %v586, %v587
  %v589 = vrot.slane %v588, 1
  %v590 = vadd.f32 %v588, %v589
  %v591 = vmul.f32 %v553, 0.0078125
  %v592 = vmul.f32 %v590, 0.0078125
  %v593 = vmul.f32 %v591, %v591
  %v594 = vsub.f32 %v592, %v593
  %v595 = vmax.f32 %v594, 0.0
  %v596 = vld [vmem:[%s2] sm:$0x1]
  %v597 = vadd.f32 %v595, 1e-05
  %v598 = vrsqrt.pop %v597
  %v599 = vmul.f32 %v596, %v598
  %v600 = vld [vmem:[%s3] sm:$0x1]
  %v601 = vmul.f32 %v591, %v599
  %v602 = vsub.f32 %v600, %v601
  %v604 = vlaneseq
  %v605 = vshrl.u32 %v604, 7
  %v606 = vsub.s32 0, %v605
  %v607 = vrot.slane %v599, %v606
  %v609 = vmul.f32 %v471, %v607
  %v610 = vmul.f32 %v474, %v607
  %v611 = vmul.f32 %v479, %v607
  %v612 = vmul.f32 %v482, %v607
  %v613 = vmul.f32 %v487, %v607
  %v614 = vmul.f32 %v490, %v607
  %v615 = vmul.f32 %v495, %v607
  %v616 = vmul.f32 %v498, %v607
  %v617 = vmul.f32 %v503, %v607
  %v618 = vmul.f32 %v506, %v607
  %v619 = vmul.f32 %v511, %v607
  %v620 = vmul.f32 %v514, %v607
  %v621 = vmul.f32 %v519, %v607
  %v622 = vmul.f32 %v522, %v607
  %v623 = vmul.f32 %v527, %v607
  %v624 = vmul.f32 %v530, %v607
  %v626 = vlaneseq
  %v627 = vshrl.u32 %v626, 7
  %v628 = vsub.s32 0, %v627
  %v629 = vrot.slane %v602, %v628
  %v631 = vadd.f32 %v609, %v629
  %v632 = vadd.f32 %v610, %v629
  %v633 = vadd.f32 %v611, %v629
  %v634 = vadd.f32 %v612, %v629
  %v635 = vadd.f32 %v613, %v629
  %v636 = vadd.f32 %v614, %v629
  %v637 = vadd.f32 %v615, %v629
  %v638 = vadd.f32 %v616, %v629
  %v639 = vadd.f32 %v617, %v629
  %v640 = vadd.f32 %v618, %v629
  %v641 = vadd.f32 %v619, %v629
  %v642 = vadd.f32 %v620, %v629
  %v643 = vadd.f32 %v621, %v629
  %v644 = vadd.f32 %v622, %v629
  %v645 = vadd.f32 %v623, %v629
  %v646 = vadd.f32 %v624, %v629
  %v647 = vmax.f32 %v631, 0.0
  %v648 = vmax.f32 %v632, 0.0
  %v649 = vmax.f32 %v633, 0.0
  %v650 = vmax.f32 %v634, 0.0
  %v651 = vmax.f32 %v635, 0.0
  %v652 = vmax.f32 %v636, 0.0
  %v653 = vmax.f32 %v637, 0.0
  %v654 = vmax.f32 %v638, 0.0
  %v655 = vmax.f32 %v639, 0.0
  %v656 = vmax.f32 %v640, 0.0
  %v657 = vmax.f32 %v641, 0.0
  %v658 = vmax.f32 %v642, 0.0
  %v659 = vmax.f32 %v643, 0.0
  %v660 = vmax.f32 %v644, 0.0
  %v661 = vmax.f32 %v645, 0.0
  %v662 = vmax.f32 %v646, 0.0
  %663 = vst [vmem:[%s4] sm:$0xff] %v647
  %664 = vst [vmem:[%s4 + $0x8] sm:$0xff] %v648
  %665 = vst [vmem:[%s4 + $0x10] sm:$0xff] %v649
  %666 = vst [vmem:[%s4 + $0x18] sm:$0xff] %v650
  %667 = vst [vmem:[%s4 + $0x20] sm:$0xff] %v651
  %668 = vst [vmem:[%s4 + $0x28] sm:$0xff] %v652
  %669 = vst [vmem:[%s4 + $0x30] sm:$0xff] %v653
  %670 = vst [vmem:[%s4 + $0x38] sm:$0xff] %v654
  %671 = vst [vmem:[%s4 + $0x40] sm:$0xff] %v655
  %672 = vst [vmem:[%s4 + $0x48] sm:$0xff] %v656
  %673 = vst [vmem:[%s4 + $0x50] sm:$0xff] %v657
  %674 = vst [vmem:[%s4 + $0x58] sm:$0xff] %v658
  %675 = vst [vmem:[%s4 + $0x60] sm:$0xff] %v659
  %676 = vst [vmem:[%s4 + $0x68] sm:$0xff] %v660
  %677 = vst [vmem:[%s4 + $0x70] sm:$0xff] %v661
  %678 = vst [vmem:[%s4 + $0x78] sm:$0xff] %v662
  // Predicated region
  $region18: #{encdec_forward.14} parent=0 // pred_check
    _
  $region19: #{encdec_forward.14} parent=0 // pred_check_branch
    %680 = sbr.rel (0) target = $region21
  $region20: #{encdec_forward.14} parent=0 // pred_region
    _
  $region21: #{encdec_forward.14} parent=0 // pred_fallthru
    _
  // Predicated region
  $region22: #{encdec_forward.14} parent=0 // pred_check
    _
  $region23: #{encdec_forward.14} parent=0 // pred_check_branch
    %682 = sbr.rel (0) target = $region25
  $region24: #{encdec_forward.14} parent=0 // pred_region
    _
  $region25: #{encdec_forward.14} parent=0 // pred_fallthru
    _

// kernel: encdec_forward.15
$region0: #{encdec_forward.15}
  #allocation0 [shape = 'u32[]', space=smem, size = 0x4, offset = 0x4, fixed_abs, tag = 'smem constant byte address 0x4 - core index']
  #allocation1 [shape = 'u32[144,128]{1,0:T(1,128)}', space=vmem, size = 0x12000, scoped, tag = 'internal scratch']
  %s0 = inlined_call_operand.vmem [shape: bf16[512,288], index: 0, kind: input, shape index: {}]
  %s1 = inlined_call_operand.vmem [shape: bf16[288,128], index: 1, kind: input, shape index: {}]
  %s2 = inlined_call_operand.vmem [shape: f32[1,128], index: 2, kind: input, shape index: {}]
  %s3 = inlined_call_operand.vmem [shape: f32[1,128], index: 3, kind: input, shape index: {}]
  %s4 = inlined_call_operand.vmem [shape: f32[512,128], index: 4, kind: output, shape index: {}]
  %s5 = sld [smem:[#allocation0]]
  $region26: #{encdec_forward.15} parent=0
    _
  %s7 = ssub.s32 1, %s5
  %s8 = scalar_select 0, %s7, %s5
  // Predicated region
  $region2: #{encdec_forward.15} parent=0 // pred_check
    _
  $region3: #{encdec_forward.15} parent=0 // pred_check_branch
    %10 = sbr.rel (0) target = $region5
  $region4: #{encdec_forward.15} parent=0 // pred_region
    _
  $region5: #{encdec_forward.15} parent=0 // pred_fallthru
    _
  // Predicated region
  $region6: #{encdec_forward.15} parent=0 // pred_check
    _
  $region7: #{encdec_forward.15} parent=0 // pred_check_branch
    %12 = sbr.rel (0) target = $region9
  $region8: #{encdec_forward.15} parent=0 // pred_region
    _
  $region9: #{encdec_forward.15} parent=0 // pred_fallthru
    _
  // Predicated region
  $region10: #{encdec_forward.15} parent=0 // pred_check
    _
  $region11: #{encdec_forward.15} parent=0 // pred_check_branch
    %14 = sbr.rel (0) target = $region13
  $region12: #{encdec_forward.15} parent=0 // pred_region
    _
  $region13: #{encdec_forward.15} parent=0 // pred_fallthru
    _
  // Predicated region
  $region14: #{encdec_forward.15} parent=0 // pred_check
    _
  $region15: #{encdec_forward.15} parent=0 // pred_check_branch
    %16 = sbr.rel (0) target = $region17
  $region16: #{encdec_forward.15} parent=0 // pred_region
    _
  $region17: #{encdec_forward.15} parent=0 // pred_fallthru
    _
  %v18 = vld [vmem:[%s0] sm:$0xff]
  %v19 = vld [vmem:[%s0 + $0x8] sm:$0xf]
  %v20 = vld [vmem:[%s0 + $0xc] sm:$0xff]
  %v21 = vld [vmem:[%s0 + $0x14] sm:$0xf]
  %v22 = vld [vmem:[%s0 + $0x18] sm:$0xff]
  %v23 = vld [vmem:[%s0 + $0x20] sm:$0xf]
  %v24 = vld [vmem:[%s0 + $0x24] sm:$0xff]
  %v25 = vld [vmem:[%s0 + $0x2c] sm:$0xf]
  %v26 = vld [vmem:[%s0 + $0x30] sm:$0xff]
  %v27 = vld [vmem:[%s0 + $0x38] sm:$0xf]
  %v28 = vld [vmem:[%s0 + $0x3c] sm:$0xff]
  %v29 = vld [vmem:[%s0 + $0x44] sm:$0xf]
  %v30 = vld [vmem:[%s0 + $0x48] sm:$0xff]
  %v31 = vld [vmem:[%s0 + $0x50] sm:$0xf]
  %v32 = vld [vmem:[%s0 + $0x54] sm:$0xff]
  %v33 = vld [vmem:[%s0 + $0x5c] sm:$0xf]
  %v34 = vld [vmem:[%s0 + $0x60] sm:$0xff]
  %v35 = vld [vmem:[%s0 + $0x68] sm:$0xf]
  %v36 = vld [vmem:[%s0 + $0x6c] sm:$0xff]
  %v37 = vld [vmem:[%s0 + $0x74] sm:$0xf]
  %v38 = vld [vmem:[%s0 + $0x78] sm:$0xff]
  %v39 = vld [vmem:[%s0 + $0x80] sm:$0xf]
  %v40 = vld [vmem:[%s0 + $0x84] sm:$0xff]
  %v41 = vld [vmem:[%s0 + $0x8c] sm:$0xf]
  %v42 = vld [vmem:[%s0 + $0x90] sm:$0xff]
  %v43 = vld [vmem:[%s0 + $0x98] sm:$0xf]
  %v44 = vld [vmem:[%s0 + $0x9c] sm:$0xff]
  %v45 = vld [vmem:[%s0 + $0xa4] sm:$0xf]
  %v46 = vld [vmem:[%s0 + $0xa8] sm:$0xff]
  %v47 = vld [vmem:[%s0 + $0xb0] sm:$0xf]
  %v48 = vld [vmem:[%s0 + $0xb4] sm:$0xff]
  %v49 = vld [vmem:[%s0 + $0xbc] sm:$0xf]
  %v50 = vld [vmem:[%s0 + $0xc0] sm:$0xff]
  %v51 = vld [vmem:[%s0 + $0xc8] sm:$0xf]
  %v52 = vld [vmem:[%s0 + $0xcc] sm:$0xff]
  %v53 = vld [vmem:[%s0 + $0xd4] sm:$0xf]
  %v54 = vld [vmem:[%s0 + $0xd8] sm:$0xff]
  %v55 = vld [vmem:[%s0 + $0xe0] sm:$0xf]
  %v56 = vld [vmem:[%s0 + $0xe4] sm:$0xff]
  %v57 = vld [vmem:[%s0 + $0xec] sm:$0xf]
  %v58 = vld [vmem:[%s0 + $0xf0] sm:$0xff]
  %v59 = vld [vmem:[%s0 + $0xf8] sm:$0xf]
  %v60 = vld [vmem:[%s0 + $0xfc] sm:$0xff]
  %v61 = vld [vmem:[%s0 + $0x104] sm:$0xf]
  %v62 = vld [vmem:[%s0 + $0x108] sm:$0xff]
  %v63 = vld [vmem:[%s0 + $0x110] sm:$0xf]
  %v64 = vld [vmem:[%s0 + $0x114] sm:$0xff]
  %v65 = vld [vmem:[%s0 + $0x11c] sm:$0xf]
  %v66 = vld [vmem:[%s0 + $0x120] sm:$0xff]
  %v67 = vld [vmem:[%s0 + $0x128] sm:$0xf]
  %v68 = vld [vmem:[%s0 + $0x12c] sm:$0xff]
  %v69 = vld [vmem:[%s0 + $0x134] sm:$0xf]
  %v70 = vld [vmem:[%s0 + $0x138] sm:$0xff]
  %v71 = vld [vmem:[%s0 + $0x140] sm:$0xf]
  %v72 = vld [vmem:[%s0 + $0x144] sm:$0xff]
  %v73 = vld [vmem:[%s0 + $0x14c] sm:$0xf]
  %v74 = vld [vmem:[%s0 + $0x150] sm:$0xff]
  %v75 = vld [vmem:[%s0 + $0x158] sm:$0xf]
  %v76 = vld [vmem:[%s0 + $0x15c] sm:$0xff]
  %v77 = vld [vmem:[%s0 + $0x164] sm:$0xf]
  %v78 = vld [vmem:[%s0 + $0x168] sm:$0xff]
  %v79 = vld [vmem:[%s0 + $0x170] sm:$0xf]
  %v80 = vld [vmem:[%s0 + $0x174] sm:$0xff]
  %v81 = vld [vmem:[%s0 + $0x17c] sm:$0xf]
  %v82 = vld [vmem:[%s0 + $0x180] sm:$0xff]
  %v83 = vld [vmem:[%s0 + $0x188] sm:$0xf]
  %v84 = vld [vmem:[%s0 + $0x18c] sm:$0xff]
  %v85 = vld [vmem:[%s0 + $0x194] sm:$0xf]
  %v86 = vld [vmem:[%s0 + $0x198] sm:$0xff]
  %v87 = vld [vmem:[%s0 + $0x1a0] sm:$0xf]
  %v88 = vld [vmem:[%s0 + $0x1a4] sm:$0xff]
  %v89 = vld [vmem:[%s0 + $0x1ac] sm:$0xf]
  %v90 = vld [vmem:[%s0 + $0x1b0] sm:$0xff]
  %v91 = vld [vmem:[%s0 + $0x1b8] sm:$0xf]
  %v92 = vld [vmem:[%s0 + $0x1bc] sm:$0xff]
  %v93 = vld [vmem:[%s0 + $0x1c4] sm:$0xf]
  %v94 = vld [vmem:[%s0 + $0x1c8] sm:$0xff]
  %v95 = vld [vmem:[%s0 + $0x1d0] sm:$0xf]
  %v96 = vld [vmem:[%s0 + $0x1d4] sm:$0xff]
  %v97 = vld [vmem:[%s0 + $0x1dc] sm:$0xf]
  %v98 = vld [vmem:[%s0 + $0x1e0] sm:$0xff]
  %v99 = vld [vmem:[%s0 + $0x1e8] sm:$0xf]
  %v100 = vld [vmem:[%s0 + $0x1ec] sm:$0xff]
  %v101 = vld [vmem:[%s0 + $0x1f4] sm:$0xf]
  %v102 = vld [vmem:[%s0 + $0x1f8] sm:$0xff]
  %v103 = vld [vmem:[%s0 + $0x200] sm:$0xf]
  %v104 = vld [vmem:[%s0 + $0x204] sm:$0xff]
  %v105 = vld [vmem:[%s0 + $0x20c] sm:$0xf]
  %v106 = vld [vmem:[%s0 + $0x210] sm:$0xff]
  %v107 = vld [vmem:[%s0 + $0x218] sm:$0xf]
  %v108 = vld [vmem:[%s0 + $0x21c] sm:$0xff]
  %v109 = vld [vmem:[%s0 + $0x224] sm:$0xf]
  %v110 = vld [vmem:[%s0 + $0x228] sm:$0xff]
  %v111 = vld [vmem:[%s0 + $0x230] sm:$0xf]
  %v112 = vld [vmem:[%s0 + $0x234] sm:$0xff]
  %v113 = vld [vmem:[%s0 + $0x23c] sm:$0xf]
  %v114 = vld [vmem:[%s0 + $0x240] sm:$0xff]
  %v115 = vld [vmem:[%s0 + $0x248] sm:$0xf]
  %v116 = vld [vmem:[%s0 + $0x24c] sm:$0xff]
  %v117 = vld [vmem:[%s0 + $0x254] sm:$0xf]
  %v118 = vld [vmem:[%s0 + $0x258] sm:$0xff]
  %v119 = vld [vmem:[%s0 + $0x260] sm:$0xf]
  %v120 = vld [vmem:[%s0 + $0x264] sm:$0xff]
  %v121 = vld [vmem:[%s0 + $0x26c] sm:$0xf]
  %v122 = vld [vmem:[%s0 + $0x270] sm:$0xff]
  %v123 = vld [vmem:[%s0 + $0x278] sm:$0xf]
  %v124 = vld [vmem:[%s0 + $0x27c] sm:$0xff]
  %v125 = vld [vmem:[%s0 + $0x284] sm:$0xf]
  %v126 = vld [vmem:[%s0 + $0x288] sm:$0xff]
  %v127 = vld [vmem:[%s0 + $0x290] sm:$0xf]
  %v128 = vld [vmem:[%s0 + $0x294] sm:$0xff]
  %v129 = vld [vmem:[%s0 + $0x29c] sm:$0xf]
  %v130 = vld [vmem:[%s0 + $0x2a0] sm:$0xff]
  %v131 = vld [vmem:[%s0 + $0x2a8] sm:$0xf]
  %v132 = vld [vmem:[%s0 + $0x2ac] sm:$0xff]
  %v133 = vld [vmem:[%s0 + $0x2b4] sm:$0xf]
  %v134 = vld [vmem:[%s0 + $0x2b8] sm:$0xff]
  %v135 = vld [vmem:[%s0 + $0x2c0] sm:$0xf]
  %v136 = vld [vmem:[%s0 + $0x2c4] sm:$0xff]
  %v137 = vld [vmem:[%s0 + $0x2cc] sm:$0xf]
  %v138 = vld [vmem:[%s0 + $0x2d0] sm:$0xff]
  %v139 = vld [vmem:[%s0 + $0x2d8] sm:$0xf]
  %v140 = vld [vmem:[%s0 + $0x2dc] sm:$0xff]
  %v141 = vld [vmem:[%s0 + $0x2e4] sm:$0xf]
  %v142 = vld [vmem:[%s0 + $0x2e8] sm:$0xff]
  %v143 = vld [vmem:[%s0 + $0x2f0] sm:$0xf]
  %v144 = vld [vmem:[%s0 + $0x2f4] sm:$0xff]
  %v145 = vld [vmem:[%s0 + $0x2fc] sm:$0xf]
  %v146 = vld [vmem:[%s1] sm:$0xf]
  %v147 = vld [vmem:[%s1 + $0x4] sm:$0xf]
  %v148 = vld [vmem:[%s1 + $0x8] sm:$0xf]
  %v149 = vld [vmem:[%s1 + $0xc] sm:$0xf]
  %v150 = vld [vmem:[%s1 + $0x10] sm:$0xf]
  %v151 = vld [vmem:[%s1 + $0x14] sm:$0xf]
  %v152 = vld [vmem:[%s1 + $0x18] sm:$0xf]
  %v153 = vld [vmem:[%s1 + $0x1c] sm:$0xf]
  %v154 = vld [vmem:[%s1 + $0x20] sm:$0xf]
  %v155 = vld [vmem:[%s1 + $0x24] sm:$0xf]
  %v156 = vld [vmem:[%s1 + $0x28] sm:$0xf]
  %v157 = vld [vmem:[%s1 + $0x2c] sm:$0xf]
  %v158 = vld [vmem:[%s1 + $0x30] sm:$0xf]
  %v159 = vld [vmem:[%s1 + $0x34] sm:$0xf]
  %v160 = vld [vmem:[%s1 + $0x38] sm:$0xf]
  %v161 = vld [vmem:[%s1 + $0x3c] sm:$0xf]
  %v162 = vld [vmem:[%s1 + $0x40] sm:$0xf]
  %v163 = vld [vmem:[%s1 + $0x44] sm:$0xf]
  %v164 = vld [vmem:[%s1 + $0x48] sm:$0xf]
  %v165 = vld [vmem:[%s1 + $0x4c] sm:$0xf]
  %v166 = vld [vmem:[%s1 + $0x50] sm:$0xf]
  %v167 = vld [vmem:[%s1 + $0x54] sm:$0xf]
  %v168 = vld [vmem:[%s1 + $0x58] sm:$0xf]
  %v169 = vld [vmem:[%s1 + $0x5c] sm:$0xf]
  %v170 = vld [vmem:[%s1 + $0x60] sm:$0xf]
  %v171 = vld [vmem:[%s1 + $0x64] sm:$0xf]
  %v172 = vld [vmem:[%s1 + $0x68] sm:$0xf]
  %v173 = vld [vmem:[%s1 + $0x6c] sm:$0xf]
  %v174 = vld [vmem:[%s1 + $0x70] sm:$0xf]
  %v175 = vld [vmem:[%s1 + $0x74] sm:$0xf]
  %v176 = vld [vmem:[%s1 + $0x78] sm:$0xf]
  %v177 = vld [vmem:[%s1 + $0x7c] sm:$0xf]
  %v178 = vld [vmem:[%s1 + $0x80] sm:$0xf]
  %v179 = vld [vmem:[%s1 + $0x84] sm:$0xf]
  %v180 = vld [vmem:[%s1 + $0x88] sm:$0xf]
  %v181 = vld [vmem:[%s1 + $0x8c] sm:$0xf]
  %v310 = vunpack.c.l.b16 %v18
  %v311 = vunpack.c.h.b16 %v18
  %v312 = vunpack.c.l.b16 %v19
  %v313 = vunpack.c.l.b16 %v20
  %v314 = vunpack.c.h.b16 %v20
  %v315 = vunpack.c.l.b16 %v21
  %v316 = vunpack.c.l.b16 %v22
  %v317 = vunpack.c.h.b16 %v22
  %v318 = vunpack.c.l.b16 %v23
  %v319 = vunpack.c.l.b16 %v24
  %v320 = vunpack.c.h.b16 %v24
  %v321 = vunpack.c.l.b16 %v25
  %v322 = vunpack.c.l.b16 %v26
  %v323 = vunpack.c.h.b16 %v26
  %v324 = vunpack.c.l.b16 %v27
  %v325 = vunpack.c.l.b16 %v28
  %v326 = vunpack.c.h.b16 %v28
  %v327 = vunpack.c.l.b16 %v29
  %v328 = vunpack.c.l.b16 %v30
  %v329 = vunpack.c.h.b16 %v30
  %v330 = vunpack.c.l.b16 %v31
  %v331 = vunpack.c.l.b16 %v32
  %v332 = vunpack.c.h.b16 %v32
  %v333 = vunpack.c.l.b16 %v33
  %v334 = vunpack.c.l.b16 %v34
  %v335 = vunpack.c.h.b16 %v34
  %v336 = vunpack.c.l.b16 %v35
  %v337 = vunpack.c.l.b16 %v36
  %v338 = vunpack.c.h.b16 %v36
  %v339 = vunpack.c.l.b16 %v37
  %v340 = vunpack.c.l.b16 %v38
  %v341 = vunpack.c.h.b16 %v38
  %v342 = vunpack.c.l.b16 %v39
  %v343 = vunpack.c.l.b16 %v40
  %v344 = vunpack.c.h.b16 %v40
  %v345 = vunpack.c.l.b16 %v41
  %v346 = vunpack.c.l.b16 %v42
  %v347 = vunpack.c.h.b16 %v42
  %v348 = vunpack.c.l.b16 %v43
  %v349 = vunpack.c.l.b16 %v44
  %v350 = vunpack.c.h.b16 %v44
  %v351 = vunpack.c.l.b16 %v45
  %v352 = vunpack.c.l.b16 %v46
  %v353 = vunpack.c.h.b16 %v46
  %v354 = vunpack.c.l.b16 %v47
  %v355 = vunpack.c.l.b16 %v48
  %v356 = vunpack.c.h.b16 %v48
  %v357 = vunpack.c.l.b16 %v49
  %v358 = vunpack.c.l.b16 %v50
  %v359 = vunpack.c.h.b16 %v50
  %v360 = vunpack.c.l.b16 %v51
  %v361 = vunpack.c.l.b16 %v52
  %v362 = vunpack.c.h.b16 %v52
  %v363 = vunpack.c.l.b16 %v53
  %v364 = vunpack.c.l.b16 %v54
  %v365 = vunpack.c.h.b16 %v54
  %v366 = vunpack.c.l.b16 %v55
  %v367 = vunpack.c.l.b16 %v56
  %v368 = vunpack.c.h.b16 %v56
  %v369 = vunpack.c.l.b16 %v57
  %v370 = vunpack.c.l.b16 %v58
  %v371 = vunpack.c.h.b16 %v58
  %v372 = vunpack.c.l.b16 %v59
  %v373 = vunpack.c.l.b16 %v60
  %v374 = vunpack.c.h.b16 %v60
  %v375 = vunpack.c.l.b16 %v61
  %v376 = vunpack.c.l.b16 %v62
  %v377 = vunpack.c.h.b16 %v62
  %v378 = vunpack.c.l.b16 %v63
  %v379 = vunpack.c.l.b16 %v64
  %v380 = vunpack.c.h.b16 %v64
  %v381 = vunpack.c.l.b16 %v65
  %v382 = vunpack.c.l.b16 %v66
  %v383 = vunpack.c.h.b16 %v66
  %v384 = vunpack.c.l.b16 %v67
  %v385 = vunpack.c.l.b16 %v68
  %v386 = vunpack.c.h.b16 %v68
  %v387 = vunpack.c.l.b16 %v69
  %v388 = vunpack.c.l.b16 %v70
  %v389 = vunpack.c.h.b16 %v70
  %v390 = vunpack.c.l.b16 %v71
  %v391 = vunpack.c.l.b16 %v72
  %v392 = vunpack.c.h.b16 %v72
  %v393 = vunpack.c.l.b16 %v73
  %v394 = vunpack.c.l.b16 %v74
  %v395 = vunpack.c.h.b16 %v74
  %v396 = vunpack.c.l.b16 %v75
  %v397 = vunpack.c.l.b16 %v76
  %v398 = vunpack.c.h.b16 %v76
  %v399 = vunpack.c.l.b16 %v77
  %v400 = vunpack.c.l.b16 %v78
  %v401 = vunpack.c.h.b16 %v78
  %v402 = vunpack.c.l.b16 %v79
  %v403 = vunpack.c.l.b16 %v80
  %v404 = vunpack.c.h.b16 %v80
  %v405 = vunpack.c.l.b16 %v81
  %v406 = vunpack.c.l.b16 %v82
  %v407 = vunpack.c.h.b16 %v82
  %v408 = vunpack.c.l.b16 %v83
  %v409 = vunpack.c.l.b16 %v84
  %v410 = vunpack.c.h.b16 %v84
  %v411 = vunpack.c.l.b16 %v85
  %v412 = vunpack.c.l.b16 %v86
  %v413 = vunpack.c.h.b16 %v86
  %v414 = vunpack.c.l.b16 %v87
  %v415 = vunpack.c.l.b16 %v88
  %v416 = vunpack.c.h.b16 %v88
  %v417 = vunpack.c.l.b16 %v89
  %v418 = vunpack.c.l.b16 %v90
  %v419 = vunpack.c.h.b16 %v90
  %v420 = vunpack.c.l.b16 %v91
  %v421 = vunpack.c.l.b16 %v92
  %v422 = vunpack.c.h.b16 %v92
  %v423 = vunpack.c.l.b16 %v93
  %v424 = vunpack.c.l.b16 %v94
  %v425 = vunpack.c.h.b16 %v94
  %v426 = vunpack.c.l.b16 %v95
  %v427 = vunpack.c.l.b16 %v96
  %v428 = vunpack.c.h.b16 %v96
  %v429 = vunpack.c.l.b16 %v97
  %v430 = vunpack.c.l.b16 %v98
  %v431 = vunpack.c.h.b16 %v98
  %v432 = vunpack.c.l.b16 %v99
  %v433 = vunpack.c.l.b16 %v100
  %v434 = vunpack.c.h.b16 %v100
  %v435 = vunpack.c.l.b16 %v101
  %v436 = vunpack.c.l.b16 %v102
  %v437 = vunpack.c.h.b16 %v102
  %v438 = vunpack.c.l.b16 %v103
  %v439 = vunpack.c.l.b16 %v104
  %v440 = vunpack.c.h.b16 %v104
  %v441 = vunpack.c.l.b16 %v105
  %v442 = vunpack.c.l.b16 %v106
  %v443 = vunpack.c.h.b16 %v106
  %v444 = vunpack.c.l.b16 %v107
  %v445 = vunpack.c.l.b16 %v108
  %v446 = vunpack.c.h.b16 %v108
  %v447 = vunpack.c.l.b16 %v109
  %v448 = vunpack.c.l.b16 %v110
  %v449 = vunpack.c.h.b16 %v110
  %v450 = vunpack.c.l.b16 %v111
  %v451 = vunpack.c.l.b16 %v112
  %v452 = vunpack.c.h.b16 %v112
  %v453 = vunpack.c.l.b16 %v113
  %v454 = vunpack.c.l.b16 %v114
  %v455 = vunpack.c.h.b16 %v114
  %v456 = vunpack.c.l.b16 %v115
  %v457 = vunpack.c.l.b16 %v116
  %v458 = vunpack.c.h.b16 %v116
  %v459 = vunpack.c.l.b16 %v117
  %v460 = vunpack.c.l.b16 %v118
  %v461 = vunpack.c.h.b16 %v118
  %v462 = vunpack.c.l.b16 %v119
  %v463 = vunpack.c.l.b16 %v120
  %v464 = vunpack.c.h.b16 %v120
  %v465 = vunpack.c.l.b16 %v121
  %v466 = vunpack.c.l.b16 %v122
  %v467 = vunpack.c.h.b16 %v122
  %v468 = vunpack.c.l.b16 %v123
  %v469 = vunpack.c.l.b16 %v124
  %v470 = vunpack.c.h.b16 %v124
  %v471 = vunpack.c.l.b16 %v125
  %v472 = vunpack.c.l.b16 %v126
  %v473 = vunpack.c.h.b16 %v126
  %v474 = vunpack.c.l.b16 %v127
  %v475 = vunpack.c.l.b16 %v128
  %v476 = vunpack.c.h.b16 %v128
  %v477 = vunpack.c.l.b16 %v129
  %v478 = vunpack.c.l.b16 %v130
  %v479 = vunpack.c.h.b16 %v130
  %v480 = vunpack.c.l.b16 %v131
  %v481 = vunpack.c.l.b16 %v132
  %v482 = vunpack.c.h.b16 %v132
  %v483 = vunpack.c.l.b16 %v133
  %v484 = vunpack.c.l.b16 %v134
  %v485 = vunpack.c.h.b16 %v134
  %v486 = vunpack.c.l.b16 %v135
  %v487 = vunpack.c.l.b16 %v136
  %v488 = vunpack.c.h.b16 %v136
  %v489 = vunpack.c.l.b16 %v137
  %v490 = vunpack.c.l.b16 %v138
  %v491 = vunpack.c.h.b16 %v138
  %v492 = vunpack.c.l.b16 %v139
  %v493 = vunpack.c.l.b16 %v140
  %v494 = vunpack.c.h.b16 %v140
  %v495 = vunpack.c.l.b16 %v141
  %v496 = vunpack.c.l.b16 %v142
  %v497 = vunpack.c.h.b16 %v142
  %v498 = vunpack.c.l.b16 %v143
  %v499 = vunpack.c.l.b16 %v144
  %v500 = vunpack.c.h.b16 %v144
  %v501 = vunpack.c.l.b16 %v145
  %v502 = vpack.c.b16 %v313, %v310
  %v503 = vpack.c.b16 %v314, %v311
  %v504 = vpack.c.b16 %v315, %v312
  %v505 = vpack.c.b16 %v319, %v316
  %v506 = vpack.c.b16 %v320, %v317
  %v507 = vpack.c.b16 %v321, %v318
  %v508 = vpack.c.b16 %v325, %v322
  %v509 = vpack.c.b16 %v326, %v323
  %v510 = vpack.c.b16 %v327, %v324
  %v511 = vpack.c.b16 %v331, %v328
  %v512 = vpack.c.b16 %v332, %v329
  %v513 = vpack.c.b16 %v333, %v330
  %v514 = vpack.c.b16 %v337, %v334
  %v515 = vpack.c.b16 %v338, %v335
  %v516 = vpack.c.b16 %v339, %v336
  %v517 = vpack.c.b16 %v343, %v340
  %v518 = vpack.c.b16 %v344, %v341
  %v519 = vpack.c.b16 %v345, %v342
  %v520 = vpack.c.b16 %v349, %v346
  %v521 = vpack.c.b16 %v350, %v347
  %v522 = vpack.c.b16 %v351, %v348
  %v523 = vpack.c.b16 %v355, %v352
  %v524 = vpack.c.b16 %v356, %v353
  %v525 = vpack.c.b16 %v357, %v354
  %v526 = vpack.c.b16 %v361, %v358
  %v527 = vpack.c.b16 %v362, %v359
  %v528 = vpack.c.b16 %v363, %v360
  %v529 = vpack.c.b16 %v367, %v364
  %v530 = vpack.c.b16 %v368, %v365
  %v531 = vpack.c.b16 %v369, %v366
  %v532 = vpack.c.b16 %v373, %v370
  %v533 = vpack.c.b16 %v374, %v371
  %v534 = vpack.c.b16 %v375, %v372
  %v535 = vpack.c.b16 %v379, %v376
  %v536 = vpack.c.b16 %v380, %v377
  %v537 = vpack.c.b16 %v381, %v378
  %v538 = vpack.c.b16 %v385, %v382
  %v539 = vpack.c.b16 %v386, %v383
  %v540 = vpack.c.b16 %v387, %v384
  %v541 = vpack.c.b16 %v391, %v388
  %v542 = vpack.c.b16 %v392, %v389
  %v543 = vpack.c.b16 %v393, %v390
  %v544 = vpack.c.b16 %v397, %v394
  %v545 = vpack.c.b16 %v398, %v395
  %v546 = vpack.c.b16 %v399, %v396
  %v547 = vpack.c.b16 %v403, %v400
  %v548 = vpack.c.b16 %v404, %v401
  %v549 = vpack.c.b16 %v405, %v402
  %v550 = vpack.c.b16 %v409, %v406
  %v551 = vpack.c.b16 %v410, %v407
  %v552 = vpack.c.b16 %v411, %v408
  %v553 = vpack.c.b16 %v415, %v412
  %v554 = vpack.c.b16 %v416, %v413
  %v555 = vpack.c.b16 %v417, %v414
  %v556 = vpack.c.b16 %v421, %v418
  %v557 = vpack.c.b16 %v422, %v419
  %v558 = vpack.c.b16 %v423, %v420
  %v559 = vpack.c.b16 %v427, %v424
  %v560 = vpack.c.b16 %v428, %v425
  %v561 = vpack.c.b16 %v429, %v426
  %v562 = vpack.c.b16 %v433, %v430
  %v563 = vpack.c.b16 %v434, %v431
  %v564 = vpack.c.b16 %v435, %v432
  %v565 = vpack.c.b16 %v439, %v436
  %v566 = vpack.c.b16 %v440, %v437
  %v567 = vpack.c.b16 %v441, %v438
  %v568 = vpack.c.b16 %v445, %v442
  %v569 = vpack.c.b16 %v446, %v443
  %v570 = vpack.c.b16 %v447, %v444
  %v571 = vpack.c.b16 %v451, %v448
  %v572 = vpack.c.b16 %v452, %v449
  %v573 = vpack.c.b16 %v453, %v450
  %v574 = vpack.c.b16 %v457, %v454
  %v575 = vpack.c.b16 %v458, %v455
  %v576 = vpack.c.b16 %v459, %v456
  %v577 = vpack.c.b16 %v463, %v460
  %v578 = vpack.c.b16 %v464, %v461
  %v579 = vpack.c.b16 %v465, %v462
  %v580 = vpack.c.b16 %v469, %v466
  %v581 = vpack.c.b16 %v470, %v467
  %v582 = vpack.c.b16 %v471, %v468
  %v583 = vpack.c.b16 %v475, %v472
  %v584 = vpack.c.b16 %v476, %v473
  %v585 = vpack.c.b16 %v477, %v474
  %v586 = vpack.c.b16 %v481, %v478
  %v587 = vpack.c.b16 %v482, %v479
  %v588 = vpack.c.b16 %v483, %v480
  %v589 = vpack.c.b16 %v487, %v484
  %v590 = vpack.c.b16 %v488, %v485
  %v591 = vpack.c.b16 %v489, %v486
  %v592 = vpack.c.b16 %v493, %v490
  %v593 = vpack.c.b16 %v494, %v491
  %v594 = vpack.c.b16 %v495, %v492
  %v595 = vpack.c.b16 %v499, %v496
  %v596 = vpack.c.b16 %v500, %v497
  %v597 = vpack.c.b16 %v501, %v498
  %v698 = vunpack.c.l.b16 %v146
  %v699 = vunpack.c.l.b16 %v147
  %v700 = vunpack.c.l.b16 %v148
  %v701 = vunpack.c.l.b16 %v149
  %v702 = vunpack.c.l.b16 %v150
  %v703 = vunpack.c.l.b16 %v151
  %v704 = vunpack.c.l.b16 %v152
  %v705 = vunpack.c.l.b16 %v153
  %v706 = vunpack.c.l.b16 %v154
  %v707 = vunpack.c.l.b16 %v155
  %v708 = vunpack.c.l.b16 %v156
  %v709 = vunpack.c.l.b16 %v157
  %v710 = vunpack.c.l.b16 %v158
  %v711 = vunpack.c.l.b16 %v159
  %v712 = vunpack.c.l.b16 %v160
  %v713 = vunpack.c.l.b16 %v161
  %v714 = vunpack.c.l.b16 %v162
  %v715 = vunpack.c.l.b16 %v163
  %v716 = vunpack.c.l.b16 %v164
  %v717 = vunpack.c.l.b16 %v165
  %v718 = vunpack.c.l.b16 %v166
  %v719 = vunpack.c.l.b16 %v167
  %v720 = vunpack.c.l.b16 %v168
  %v721 = vunpack.c.l.b16 %v169
  %v722 = vunpack.c.l.b16 %v170
  %v723 = vunpack.c.l.b16 %v171
  %v724 = vunpack.c.l.b16 %v172
  %v725 = vunpack.c.l.b16 %v173
  %v726 = vunpack.c.l.b16 %v174
  %v727 = vunpack.c.l.b16 %v175
  %v728 = vunpack.c.l.b16 %v176
  %v729 = vunpack.c.l.b16 %v177
  %v730 = vunpack.c.l.b16 %v178
  %v731 = vunpack.c.l.b16 %v179
  %v732 = vunpack.c.l.b16 %v180
  %v733 = vunpack.c.l.b16 %v181
  %v734 = vpack.c.b16 %v699, %v698
  %v735 = vpack.c.b16 %v701, %v700
  %v736 = vpack.c.b16 %v703, %v702
  %v737 = vpack.c.b16 %v705, %v704
  %v738 = vpack.c.b16 %v707, %v706
  %v739 = vpack.c.b16 %v709, %v708
  %v740 = vpack.c.b16 %v711, %v710
  %v741 = vpack.c.b16 %v713, %v712
  %v742 = vpack.c.b16 %v715, %v714
  %v743 = vpack.c.b16 %v717, %v716
  %v744 = vpack.c.b16 %v719, %v718
  %v745 = vpack.c.b16 %v721, %v720
  %v746 = vpack.c.b16 %v723, %v722
  %v747 = vpack.c.b16 %v725, %v724
  %v748 = vpack.c.b16 %v727, %v726
  %v749 = vpack.c.b16 %v729, %v728
  %v750 = vpack.c.b16 %v731, %v730
  %v751 = vpack.c.b16 %v733, %v732
  %vm770 = vcmask 261120
  %v772 = vsel %vm770, %v504, 0
  %v775 = vsel %vm770, %v507, 0
  %v778 = vsel %vm770, %v510, 0
  %v781 = vsel %vm770, %v513, 0
  %v784 = vsel %vm770, %v516, 0
  %v787 = vsel %vm770, %v519, 0
  %v790 = vsel %vm770, %v522, 0
  %v793 = vsel %vm770, %v525, 0
  %v796 = vsel %vm770, %v528, 0
  %v799 = vsel %vm770, %v531, 0
  %v802 = vsel %vm770, %v534, 0
  %v805 = vsel %vm770, %v537, 0
  %v808 = vsel %vm770, %v540, 0
  %v811 = vsel %vm770, %v543, 0
  %v814 = vsel %vm770, %v546, 0
  %v817 = vsel %vm770, %v549, 0
  %v820 = vsel %vm770, %v552, 0
  %v823 = vsel %vm770, %v555, 0
  %v826 = vsel %vm770, %v558, 0
  %v829 = vsel %vm770, %v561, 0
  %v832 = vsel %vm770, %v564, 0
  %v835 = vsel %vm770, %v567, 0
  %v838 = vsel %vm770, %v570, 0
  %v841 = vsel %vm770, %v573, 0
  %v844 = vsel %vm770, %v576, 0
  %v847 = vsel %vm770, %v579, 0
  %v850 = vsel %vm770, %v582, 0
  %v853 = vsel %vm770, %v585, 0
  %v856 = vsel %vm770, %v588, 0
  %v859 = vsel %vm770, %v591, 0
  %v862 = vsel %vm770, %v594, 0
  %v865 = vsel %vm770, %v597, 0
  %867 = vmatprep.subr.bf16.mxu0 0
  %868 = vmatpush1.bf16.msra.mxu0 %v741
  %869 = vmatprep.subr.bf16.mxu0 0
  %870 = vmatpush1.bf16.msra.mxu0 %v740
  %871 = vmatprep.subr.bf16.mxu0 0
  %872 = vmatpush1.bf16.msra.mxu0 %v739
  %873 = vmatprep.subr.bf16.mxu0 0
  %874 = vmatpush1.bf16.msra.mxu0 %v738
  %875 = vmatprep.subr.bf16.mxu0 0
  %876 = vmatpush1.bf16.msra.mxu0 %v737
  %877 = vmatprep.subr.bf16.mxu0 0
  %878 = vmatpush1.bf16.msra.mxu0 %v736
  %879 = vmatprep.subr.bf16.mxu0 0
  %880 = vmatpush1.bf16.msra.mxu0 %v735
  %881 = vmatprep.subr.bf16.mxu0 0
  %882 = vmatpush1.bf16.msra.mxu0 %v734
  %883 = vmatprep.subr.bf16.mxu0 0
  %884 = vmatpush2.bf16.msra.mxu0 %v749
  %885 = vmatprep.subr.bf16.mxu0 0
  %886 = vmatpush2.bf16.msra.mxu0 %v748
  %887 = vmatprep.subr.bf16.mxu0 0
  %888 = vmatpush2.bf16.msra.mxu0 %v747
  %889 = vmatprep.subr.bf16.mxu0 0
  %890 = vmatpush2.bf16.msra.mxu0 %v746
  %891 = vmatprep.subr.bf16.mxu0 0
  %892 = vmatpush2.bf16.msra.mxu0 %v745
  %893 = vmatprep.subr.bf16.mxu0 0
  %894 = vmatpush2.bf16.msra.mxu0 %v744
  %895 = vmatprep.subr.bf16.mxu0 0
  %896 = vmatpush2.bf16.msra.mxu0 %v743
  %897 = vmatprep.subr.bf16.mxu0 0
  %898 = vmatpush2.bf16.msra.mxu0 %v742
  %899 = vmatprep.mubr.bf16.mxu0 %v503
  %900 = vmatmul.mubr.bf16.gmra.mxu0 %v502
  %v901 = vpop.f32.mrf.mxu0
  %v902 = vadd.f32 0.0, %v901
  %v903 = vpop.f32.mrf.mxu0
  %v904 = vpop.f32.mrf.mxu0
  %v905 = vadd.f32 0.0, %v904
  %v906 = vpop.f32.mrf.mxu0
  %907 = vmatprep.mubr.bf16.mxu0 %v506
  %908 = vmatmul.mubr.bf16.gmra.mxu0 %v505
  %v909 = vpop.f32.mrf.mxu0
  %v910 = vadd.f32 0.0, %v909
  %v911 = vpop.f32.mrf.mxu0
  %v912 = vpop.f32.mrf.mxu0
  %v913 = vadd.f32 0.0, %v912
  %v914 = vpop.f32.mrf.mxu0
  %915 = vmatprep.mubr.bf16.mxu0 %v509
  %916 = vmatmul.mubr.bf16.gmra.mxu0 %v508
  %v917 = vpop.f32.mrf.mxu0
  %v918 = vadd.f32 0.0, %v917
  %v919 = vpop.f32.mrf.mxu0
  %v920 = vpop.f32.mrf.mxu0
  %v921 = vadd.f32 0.0, %v920
  %v922 = vpop.f32.mrf.mxu0
  %923 = vmatprep.mubr.bf16.mxu0 %v512
  %924 = vmatmul.mubr.bf16.gmra.mxu0 %v511
  %v925 = vpop.f32.mrf.mxu0
  %v926 = vadd.f32 0.0, %v925
  %v927 = vpop.f32.mrf.mxu0
  %v928 = vpop.f32.mrf.mxu0
  %v929 = vadd.f32 0.0, %v928
  %v930 = vpop.f32.mrf.mxu0
  %931 = vmatprep.mubr.bf16.mxu0 %v515
  %932 = vmatmul.mubr.bf16.gmra.mxu0 %v514
  %v933 = vpop.f32.mrf.mxu0
  %v934 = vadd.f32 0.0, %v933
  %v935 = vpop.f32.mrf.mxu0
  %v936 = vpop.f32.mrf.mxu0
  %v937 = vadd.f32 0.0, %v936
  %v938 = vpop.f32.mrf.mxu0
  %939 = vmatprep.mubr.bf16.mxu0 %v518
  %940 = vmatmul.mubr.bf16.gmra.mxu0 %v517
  %v941 = vpop.f32.mrf.mxu0
  %v942 = vadd.f32 0.0, %v941
  %v943 = vpop.f32.mrf.mxu0
  %v944 = vpop.f32.mrf.mxu0
  %v945 = vadd.f32 0.0, %v944
  %v946 = vpop.f32.mrf.mxu0
  %947 = vmatprep.mubr.bf16.mxu0 %v521
  %948 = vmatmul.mubr.bf16.gmra.mxu0 %v520
  %v949 = vpop.f32.mrf.mxu0
  %v950 = vadd.f32 0.0, %v949
  %v951 = vpop.f32.mrf.mxu0
  %v952 = vpop.f32.mrf.mxu0
  %v953 = vadd.f32 0.0, %v952
  %v954 = vpop.f32.mrf.mxu0
  %955 = vmatprep.mubr.bf16.mxu0 %v524
  %956 = vmatmul.mubr.bf16.gmra.mxu0 %v523
  %v957 = vpop.f32.mrf.mxu0
  %v958 = vadd.f32 0.0, %v957
  %v959 = vpop.f32.mrf.mxu0
  %v960 = vpop.f32.mrf.mxu0
  %v961 = vadd.f32 0.0, %v960
  %v962 = vpop.f32.mrf.mxu0
  %963 = vmatprep.mubr.bf16.mxu0 %v527
  %964 = vmatmul.mubr.bf16.gmra.mxu0 %v526
  %v965 = vpop.f32.mrf.mxu0
  %v966 = vadd.f32 0.0, %v965
  %v967 = vpop.f32.mrf.mxu0
  %v968 = vpop.f32.mrf.mxu0
  %v969 = vadd.f32 0.0, %v968
  %v970 = vpop.f32.mrf.mxu0
  %971 = vmatprep.mubr.bf16.mxu0 %v530
  %972 = vmatmul.mubr.bf16.gmra.mxu0 %v529
  %v973 = vpop.f32.mrf.mxu0
  %v974 = vadd.f32 0.0, %v973
  %v975 = vpop.f32.mrf.mxu0
  %v976 = vpop.f32.mrf.mxu0
  %v977 = vadd.f32 0.0, %v976
  %v978 = vpop.f32.mrf.mxu0
  %979 = vmatprep.mubr.bf16.mxu0 %v533
  %980 = vmatmul.mubr.bf16.gmra.mxu0 %v532
  %v981 = vpop.f32.mrf.mxu0
  %v982 = vadd.f32 0.0, %v981
  %v983 = vpop.f32.mrf.mxu0
  %v984 = vpop.f32.mrf.mxu0
  %v985 = vadd.f32 0.0, %v984
  %v986 = vpop.f32.mrf.mxu0
  %987 = vmatprep.mubr.bf16.mxu0 %v536
  %988 = vmatmul.mubr.bf16.gmra.mxu0 %v535
  %v989 = vpop.f32.mrf.mxu0
  %v990 = vadd.f32 0.0, %v989
  %v991 = vpop.f32.mrf.mxu0
  %v992 = vpop.f32.mrf.mxu0
  %v993 = vadd.f32 0.0, %v992
  %v994 = vpop.f32.mrf.mxu0
  %995 = vmatprep.mubr.bf16.mxu0 %v539
  %996 = vmatmul.mubr.bf16.gmra.mxu0 %v538
  %v997 = vpop.f32.mrf.mxu0
  %v998 = vadd.f32 0.0, %v997
  %v999 = vpop.f32.mrf.mxu0
  %v1000 = vpop.f32.mrf.mxu0
  %v1001 = vadd.f32 0.0, %v1000
  %v1002 = vpop.f32.mrf.mxu0
  %1003 = vmatprep.mubr.bf16.mxu0 %v542
  %1004 = vmatmul.mubr.bf16.gmra.mxu0 %v541
  %v1005 = vpop.f32.mrf.mxu0
  %v1006 = vadd.f32 0.0, %v1005
  %v1007 = vpop.f32.mrf.mxu0
  %v1008 = vpop.f32.mrf.mxu0
  %v1009 = vadd.f32 0.0, %v1008
  %v1010 = vpop.f32.mrf.mxu0
  %1011 = vmatprep.mubr.bf16.mxu0 %v545
  %1012 = vmatmul.mubr.bf16.gmra.mxu0 %v544
  %v1013 = vpop.f32.mrf.mxu0
  %v1014 = vadd.f32 0.0, %v1013
  %v1015 = vpop.f32.mrf.mxu0
  %v1016 = vpop.f32.mrf.mxu0
  %v1017 = vadd.f32 0.0, %v1016
  %v1018 = vpop.f32.mrf.mxu0
  %1019 = vmatprep.mubr.bf16.mxu0 %v548
  %1020 = vmatmul.mubr.bf16.gmra.mxu0 %v547
  %v1021 = vpop.f32.mrf.mxu0
  %v1022 = vadd.f32 0.0, %v1021
  %v1023 = vpop.f32.mrf.mxu0
  %v1024 = vpop.f32.mrf.mxu0
  %v1025 = vadd.f32 0.0, %v1024
  %v1026 = vpop.f32.mrf.mxu0
  %1027 = vmatprep.mubr.bf16.mxu0 %v551
  %1028 = vmatmul.mubr.bf16.gmra.mxu0 %v550
  %v1029 = vpop.f32.mrf.mxu0
  %v1030 = vadd.f32 0.0, %v1029
  %v1031 = vpop.f32.mrf.mxu0
  %v1032 = vpop.f32.mrf.mxu0
  %v1033 = vadd.f32 0.0, %v1032
  %v1034 = vpop.f32.mrf.mxu0
  %1035 = vmatprep.mubr.bf16.mxu0 %v554
  %1036 = vmatmul.mubr.bf16.gmra.mxu0 %v553
  %v1037 = vpop.f32.mrf.mxu0
  %v1038 = vadd.f32 0.0, %v1037
  %v1039 = vpop.f32.mrf.mxu0
  %v1040 = vpop.f32.mrf.mxu0
  %v1041 = vadd.f32 0.0, %v1040
  %v1042 = vpop.f32.mrf.mxu0
  %1043 = vmatprep.mubr.bf16.mxu0 %v557
  %1044 = vmatmul.mubr.bf16.gmra.mxu0 %v556
  %v1045 = vpop.f32.mrf.mxu0
  %v1046 = vadd.f32 0.0, %v1045
  %v1047 = vpop.f32.mrf.mxu0
  %v1048 = vpop.f32.mrf.mxu0
  %v1049 = vadd.f32 0.0, %v1048
  %v1050 = vpop.f32.mrf.mxu0
  %1051 = vmatprep.mubr.bf16.mxu0 %v560
  %1052 = vmatmul.mubr.bf16.gmra.mxu0 %v559
  %v1053 = vpop.f32.mrf.mxu0
  %v1054 = vadd.f32 0.0, %v1053
  %v1055 = vpop.f32.mrf.mxu0
  %v1056 = vpop.f32.mrf.mxu0
  %v1057 = vadd.f32 0.0, %v1056
  %v1058 = vpop.f32.mrf.mxu0
  %1059 = vmatprep.mubr.bf16.mxu0 %v563
  %1060 = vmatmul.mubr.bf16.gmra.mxu0 %v562
  %v1061 = vpop.f32.mrf.mxu0
  %v1062 = vadd.f32 0.0, %v1061
  %v1063 = vpop.f32.mrf.mxu0
  %v1064 = vpop.f32.mrf.mxu0
  %v1065 = vadd.f32 0.0, %v1064
  %v1066 = vpop.f32.mrf.mxu0
  %1067 = vmatprep.mubr.bf16.mxu0 %v566
  %1068 = vmatmul.mubr.bf16.gmra.mxu0 %v565
  %v1069 = vpop.f32.mrf.mxu0
  %v1070 = vadd.f32 0.0, %v1069
  %v1071 = vpop.f32.mrf.mxu0
  %v1072 = vpop.f32.mrf.mxu0
  %v1073 = vadd.f32 0.0, %v1072
  %v1074 = vpop.f32.mrf.mxu0
  %1075 = vmatprep.mubr.bf16.mxu0 %v569
  %1076 = vmatmul.mubr.bf16.gmra.mxu0 %v568
  %v1077 = vpop.f32.mrf.mxu0
  %v1078 = vadd.f32 0.0, %v1077
  %v1079 = vpop.f32.mrf.mxu0
  %v1080 = vpop.f32.mrf.mxu0
  %v1081 = vadd.f32 0.0, %v1080
  %v1082 = vpop.f32.mrf.mxu0
  %1083 = vmatprep.mubr.bf16.mxu0 %v572
  %1084 = vmatmul.mubr.bf16.gmra.mxu0 %v571
  %v1085 = vpop.f32.mrf.mxu0
  %v1086 = vadd.f32 0.0, %v1085
  %v1087 = vpop.f32.mrf.mxu0
  %v1088 = vpop.f32.mrf.mxu0
  %v1089 = vadd.f32 0.0, %v1088
  %v1090 = vpop.f32.mrf.mxu0
  %1091 = vmatprep.mubr.bf16.mxu0 %v575
  %1092 = vmatmul.mubr.bf16.gmra.mxu0 %v574
  %v1093 = vpop.f32.mrf.mxu0
  %v1094 = vadd.f32 0.0, %v1093
  %v1095 = vpop.f32.mrf.mxu0
  %v1096 = vpop.f32.mrf.mxu0
  %v1097 = vadd.f32 0.0, %v1096
  %v1098 = vpop.f32.mrf.mxu0
  %1099 = vmatprep.mubr.bf16.mxu0 %v578
  %1100 = vmatmul.mubr.bf16.gmra.mxu0 %v577
  %v1101 = vpop.f32.mrf.mxu0
  %v1102 = vadd.f32 0.0, %v1101
  %v1103 = vpop.f32.mrf.mxu0
  %v1104 = vpop.f32.mrf.mxu0
  %v1105 = vadd.f32 0.0, %v1104
  %v1106 = vpop.f32.mrf.mxu0
  %1107 = vmatprep.mubr.bf16.mxu0 %v581
  %1108 = vmatmul.mubr.bf16.gmra.mxu0 %v580
  %v1109 = vpop.f32.mrf.mxu0
  %v1110 = vadd.f32 0.0, %v1109
  %v1111 = vpop.f32.mrf.mxu0
  %v1112 = vpop.f32.mrf.mxu0
  %v1113 = vadd.f32 0.0, %v1112
  %v1114 = vpop.f32.mrf.mxu0
  %1115 = vmatprep.mubr.bf16.mxu0 %v584
  %1116 = vmatmul.mubr.bf16.gmra.mxu0 %v583
  %v1117 = vpop.f32.mrf.mxu0
  %v1118 = vadd.f32 0.0, %v1117
  %v1119 = vpop.f32.mrf.mxu0
  %v1120 = vpop.f32.mrf.mxu0
  %v1121 = vadd.f32 0.0, %v1120
  %v1122 = vpop.f32.mrf.mxu0
  %1123 = vmatprep.mubr.bf16.mxu0 %v587
  %1124 = vmatmul.mubr.bf16.gmra.mxu0 %v586
  %v1125 = vpop.f32.mrf.mxu0
  %v1126 = vadd.f32 0.0, %v1125
  %v1127 = vpop.f32.mrf.mxu0
  %v1128 = vpop.f32.mrf.mxu0
  %v1129 = vadd.f32 0.0, %v1128
  %v1130 = vpop.f32.mrf.mxu0
  %1131 = vmatprep.mubr.bf16.mxu0 %v590
  %1132 = vmatmul.mubr.bf16.gmra.mxu0 %v589
  %v1133 = vpop.f32.mrf.mxu0
  %v1134 = vadd.f32 0.0, %v1133
  %v1135 = vpop.f32.mrf.mxu0
  %v1136 = vpop.f32.mrf.mxu0
  %v1137 = vadd.f32 0.0, %v1136
  %v1138 = vpop.f32.mrf.mxu0
  %1139 = vmatprep.mubr.bf16.mxu0 %v593
  %1140 = vmatmul.mubr.bf16.gmra.mxu0 %v592
  %v1141 = vpop.f32.mrf.mxu0
  %v1142 = vadd.f32 0.0, %v1141
  %v1143 = vpop.f32.mrf.mxu0
  %v1144 = vpop.f32.mrf.mxu0
  %v1145 = vadd.f32 0.0, %v1144
  %v1146 = vpop.f32.mrf.mxu0
  %1147 = vmatprep.mubr.bf16.mxu0 %v596
  %1148 = vmatmul.mubr.bf16.gmra.mxu0 %v595
  %v1149 = vpop.f32.mrf.mxu0
  %v1150 = vadd.f32 0.0, %v1149
  %v1151 = vpop.f32.mrf.mxu0
  %v1152 = vpop.f32.mrf.mxu0
  %v1153 = vadd.f32 0.0, %v1152
  %v1154 = vpop.f32.mrf.mxu0
  %1155 = vdwg.mxu0
  %1156 = vmatprep.subr.bf16.mxu0 0
  %1157 = vmatpush1.bf16.msra.mxu0 0
  %1158 = vmatprep.subr.bf16.mxu0 0
  %1159 = vmatpush1.bf16.msra.mxu0 0
  %1160 = vmatprep.subr.bf16.mxu0 0
  %1161 = vmatpush1.bf16.msra.mxu0 0
  %1162 = vmatprep.subr.bf16.mxu0 0
  %1163 = vmatpush1.bf16.msra.mxu0 0
  %1164 = vmatprep.subr.bf16.mxu0 0
  %1165 = vmatpush1.bf16.msra.mxu0 0
  %1166 = vmatprep.subr.bf16.mxu0 0
  %1167 = vmatpush1.bf16.msra.mxu0 0
  %1168 = vmatprep.subr.bf16.mxu0 0
  %1169 = vmatpush1.bf16.msra.mxu0 %v751
  %1170 = vmatprep.subr.bf16.mxu0 0
  %1171 = vmatpush1.bf16.msra.mxu0 %v750
  %1172 = vmatprep.subr.bf16.mxu0 0
  %1173 = vmatpush2.bf16.msra.mxu0 0
  %1174 = vmatprep.subr.bf16.mxu0 0
  %1175 = vmatpush2.bf16.msra.mxu0 0
  %1176 = vmatprep.subr.bf16.mxu0 0
  %1177 = vmatpush2.bf16.msra.mxu0 0
  %1178 = vmatprep.subr.bf16.mxu0 0
  %1179 = vmatpush2.bf16.msra.mxu0 0
  %1180 = vmatprep.subr.bf16.mxu0 0
  %1181 = vmatpush2.bf16.msra.mxu0 0
  %1182 = vmatprep.subr.bf16.mxu0 0
  %1183 = vmatpush2.bf16.msra.mxu0 0
  %1184 = vmatprep.subr.bf16.mxu0 0
  %1185 = vmatpush2.bf16.msra.mxu0 0
  %1186 = vmatprep.subr.bf16.mxu0 0
  %1187 = vmatpush2.bf16.msra.mxu0 0
  %1188 = vmatprep.mubr.bf16.mxu0 0
  %1189 = vmatmul.mubr.bf16.gmra.mxu0 %v772
  %v1190 = vpop.f32.mrf.mxu0
  %v1191 = vadd.f32 %v902, %v1190
  %v1192 = vpop.f32.mrf.mxu0
  %v1193 = vpop.f32.mrf.mxu0
  %v1194 = vadd.f32 %v905, %v1193
  %v1195 = vpop.f32.mrf.mxu0
  %1196 = vmatprep.mubr.bf16.mxu0 0
  %1197 = vmatmul.mubr.bf16.gmra.mxu0 %v775
  %v1198 = vpop.f32.mrf.mxu0
  %v1199 = vadd.f32 %v910, %v1198
  %v1200 = vpop.f32.mrf.mxu0
  %v1201 = vpop.f32.mrf.mxu0
  %v1202 = vadd.f32 %v913, %v1201
  %v1203 = vpop.f32.mrf.mxu0
  %1204 = vmatprep.mubr.bf16.mxu0 0
  %1205 = vmatmul.mubr.bf16.gmra.mxu0 %v778
  %v1206 = vpop.f32.mrf.mxu0
  %v1207 = vadd.f32 %v918, %v1206
  %v1208 = vpop.f32.mrf.mxu0
  %v1209 = vpop.f32.mrf.mxu0
  %v1210 = vadd.f32 %v921, %v1209
  %v1211 = vpop.f32.mrf.mxu0
  %1212 = vmatprep.mubr.bf16.mxu0 0
  %1213 = vmatmul.mubr.bf16.gmra.mxu0 %v781
  %v1214 = vpop.f32.mrf.mxu0
  %v1215 = vadd.f32 %v926, %v1214
  %v1216 = vpop.f32.mrf.mxu0
  %v1217 = vpop.f32.mrf.mxu0
  %v1218 = vadd.f32 %v929, %v1217
  %v1219 = vpop.f32.mrf.mxu0
  %1220 = vmatprep.mubr.bf16.mxu0 0
  %1221 = vmatmul.mubr.bf16.gmra.mxu0 %v784
  %v1222 = vpop.f32.mrf.mxu0
  %v1223 = vadd.f32 %v934, %v1222
  %v1224 = vpop.f32.mrf.mxu0
  %v1225 = vpop.f32.mrf.mxu0
  %v1226 = vadd.f32 %v937, %v1225
  %v1227 = vpop.f32.mrf.mxu0
  %1228 = vmatprep.mubr.bf16.mxu0 0
  %1229 = vmatmul.mubr.bf16.gmra.mxu0 %v787
  %v1230 = vpop.f32.mrf.mxu0
  %v1231 = vadd.f32 %v942, %v1230
  %v1232 = vpop.f32.mrf.mxu0
  %v1233 = vpop.f32.mrf.mxu0
  %v1234 = vadd.f32 %v945, %v1233
  %v1235 = vpop.f32.mrf.mxu0
  %1236 = vmatprep.mubr.bf16.mxu0 0
  %1237 = vmatmul.mubr.bf16.gmra.mxu0 %v790
  %v1238 = vpop.f32.mrf.mxu0
  %v1239 = vadd.f32 %v950, %v1238
  %v1240 = vpop.f32.mrf.mxu0
  %v1241 = vpop.f32.mrf.mxu0
  %v1242 = vadd.f32 %v953, %v1241
  %v1243 = vpop.f32.mrf.mxu0
  %1244 = vmatprep.mubr.bf16.mxu0 0
  %1245 = vmatmul.mubr.bf16.gmra.mxu0 %v793
  %v1246 = vpop.f32.mrf.mxu0
  %v1247 = vadd.f32 %v958, %v1246
  %v1248 = vpop.f32.mrf.mxu0
  %v1249 = vpop.f32.mrf.mxu0
  %v1250 = vadd.f32 %v961, %v1249
  %v1251 = vpop.f32.mrf.mxu0
  %1252 = vmatprep.mubr.bf16.mxu0 0
  %1253 = vmatmul.mubr.bf16.gmra.mxu0 %v796
  %v1254 = vpop.f32.mrf.mxu0
  %v1255 = vadd.f32 %v966, %v1254
  %v1256 = vpop.f32.mrf.mxu0
  %v1257 = vpop.f32.mrf.mxu0
  %v1258 = vadd.f32 %v969, %v1257
  %v1259 = vpop.f32.mrf.mxu0
  %1260 = vmatprep.mubr.bf16.mxu0 0
  %1261 = vmatmul.mubr.bf16.gmra.mxu0 %v799
  %v1262 = vpop.f32.mrf.mxu0
  %v1263 = vadd.f32 %v974, %v1262
  %v1264 = vpop.f32.mrf.mxu0
  %v1265 = vpop.f32.mrf.mxu0
  %v1266 = vadd.f32 %v977, %v1265
  %v1267 = vpop.f32.mrf.mxu0
  %1268 = vmatprep.mubr.bf16.mxu0 0
  %1269 = vmatmul.mubr.bf16.gmra.mxu0 %v802
  %v1270 = vpop.f32.mrf.mxu0
  %v1271 = vadd.f32 %v982, %v1270
  %v1272 = vpop.f32.mrf.mxu0
  %v1273 = vpop.f32.mrf.mxu0
  %v1274 = vadd.f32 %v985, %v1273
  %v1275 = vpop.f32.mrf.mxu0
  %1276 = vmatprep.mubr.bf16.mxu0 0
  %1277 = vmatmul.mubr.bf16.gmra.mxu0 %v805
  %v1278 = vpop.f32.mrf.mxu0
  %v1279 = vadd.f32 %v990, %v1278
  %v1280 = vpop.f32.mrf.mxu0
  %v1281 = vpop.f32.mrf.mxu0
  %v1282 = vadd.f32 %v993, %v1281
  %v1283 = vpop.f32.mrf.mxu0
  %1284 = vmatprep.mubr.bf16.mxu0 0
  %1285 = vmatmul.mubr.bf16.gmra.mxu0 %v808
  %v1286 = vpop.f32.mrf.mxu0
  %v1287 = vadd.f32 %v998, %v1286
  %v1288 = vpop.f32.mrf.mxu0
  %v1289 = vpop.f32.mrf.mxu0
  %v1290 = vadd.f32 %v1001, %v1289
  %v1291 = vpop.f32.mrf.mxu0
  %1292 = vmatprep.mubr.bf16.mxu0 0
  %1293 = vmatmul.mubr.bf16.gmra.mxu0 %v811
  %v1294 = vpop.f32.mrf.mxu0
  %v1295 = vadd.f32 %v1006, %v1294
  %v1296 = vpop.f32.mrf.mxu0
  %v1297 = vpop.f32.mrf.mxu0
  %v1298 = vadd.f32 %v1009, %v1297
  %v1299 = vpop.f32.mrf.mxu0
  %1300 = vmatprep.mubr.bf16.mxu0 0
  %1301 = vmatmul.mubr.bf16.gmra.mxu0 %v814
  %v1302 = vpop.f32.mrf.mxu0
  %v1303 = vadd.f32 %v1014, %v1302
  %v1304 = vpop.f32.mrf.mxu0
  %v1305 = vpop.f32.mrf.mxu0
  %v1306 = vadd.f32 %v1017, %v1305
  %v1307 = vpop.f32.mrf.mxu0
  %1308 = vmatprep.mubr.bf16.mxu0 0
  %1309 = vmatmul.mubr.bf16.gmra.mxu0 %v817
  %v1310 = vpop.f32.mrf.mxu0
  %v1311 = vadd.f32 %v1022, %v1310
  %v1312 = vpop.f32.mrf.mxu0
  %v1313 = vpop.f32.mrf.mxu0
  %v1314 = vadd.f32 %v1025, %v1313
  %v1315 = vpop.f32.mrf.mxu0
  %1316 = vmatprep.mubr.bf16.mxu0 0
  %1317 = vmatmul.mubr.bf16.gmra.mxu0 %v820
  %v1318 = vpop.f32.mrf.mxu0
  %v1319 = vadd.f32 %v1030, %v1318
  %v1320 = vpop.f32.mrf.mxu0
  %v1321 = vpop.f32.mrf.mxu0
  %v1322 = vadd.f32 %v1033, %v1321
  %v1323 = vpop.f32.mrf.mxu0
  %1324 = vmatprep.mubr.bf16.mxu0 0
  %1325 = vmatmul.mubr.bf16.gmra.mxu0 %v823
  %v1326 = vpop.f32.mrf.mxu0
  %v1327 = vadd.f32 %v1038, %v1326
  %v1328 = vpop.f32.mrf.mxu0
  %v1329 = vpop.f32.mrf.mxu0
  %v1330 = vadd.f32 %v1041, %v1329
  %v1331 = vpop.f32.mrf.mxu0
  %1332 = vmatprep.mubr.bf16.mxu0 0
  %1333 = vmatmul.mubr.bf16.gmra.mxu0 %v826
  %v1334 = vpop.f32.mrf.mxu0
  %v1335 = vadd.f32 %v1046, %v1334
  %v1336 = vpop.f32.mrf.mxu0
  %v1337 = vpop.f32.mrf.mxu0
  %v1338 = vadd.f32 %v1049, %v1337
  %v1339 = vpop.f32.mrf.mxu0
  %1340 = vmatprep.mubr.bf16.mxu0 0
  %1341 = vmatmul.mubr.bf16.gmra.mxu0 %v829
  %v1342 = vpop.f32.mrf.mxu0
  %v1343 = vadd.f32 %v1054, %v1342
  %v1344 = vpop.f32.mrf.mxu0
  %v1345 = vpop.f32.mrf.mxu0
  %v1346 = vadd.f32 %v1057, %v1345
  %v1347 = vpop.f32.mrf.mxu0
  %1348 = vmatprep.mubr.bf16.mxu0 0
  %1349 = vmatmul.mubr.bf16.gmra.mxu0 %v832
  %v1350 = vpop.f32.mrf.mxu0
  %v1351 = vadd.f32 %v1062, %v1350
  %v1352 = vpop.f32.mrf.mxu0
  %v1353 = vpop.f32.mrf.mxu0
  %v1354 = vadd.f32 %v1065, %v1353
  %v1355 = vpop.f32.mrf.mxu0
  %1356 = vmatprep.mubr.bf16.mxu0 0
  %1357 = vmatmul.mubr.bf16.gmra.mxu0 %v835
  %v1358 = vpop.f32.mrf.mxu0
  %v1359 = vadd.f32 %v1070, %v1358
  %v1360 = vpop.f32.mrf.mxu0
  %v1361 = vpop.f32.mrf.mxu0
  %v1362 = vadd.f32 %v1073, %v1361
  %v1363 = vpop.f32.mrf.mxu0
  %1364 = vmatprep.mubr.bf16.mxu0 0
  %1365 = vmatmul.mubr.bf16.gmra.mxu0 %v838
  %v1366 = vpop.f32.mrf.mxu0
  %v1367 = vadd.f32 %v1078, %v1366
  %v1368 = vpop.f32.mrf.mxu0
  %v1369 = vpop.f32.mrf.mxu0
  %v1370 = vadd.f32 %v1081, %v1369
  %v1371 = vpop.f32.mrf.mxu0
  %1372 = vmatprep.mubr.bf16.mxu0 0
  %1373 = vmatmul.mubr.bf16.gmra.mxu0 %v841
  %v1374 = vpop.f32.mrf.mxu0
  %v1375 = vadd.f32 %v1086, %v1374
  %v1376 = vpop.f32.mrf.mxu0
  %v1377 = vpop.f32.mrf.mxu0
  %v1378 = vadd.f32 %v1089, %v1377
  %v1379 = vpop.f32.mrf.mxu0
  %1380 = vmatprep.mubr.bf16.mxu0 0
  %1381 = vmatmul.mubr.bf16.gmra.mxu0 %v844
  %v1382 = vpop.f32.mrf.mxu0
  %v1383 = vadd.f32 %v1094, %v1382
  %v1384 = vpop.f32.mrf.mxu0
  %v1385 = vpop.f32.mrf.mxu0
  %v1386 = vadd.f32 %v1097, %v1385
  %v1387 = vpop.f32.mrf.mxu0
  %1388 = vmatprep.mubr.bf16.mxu0 0
  %1389 = vmatmul.mubr.bf16.gmra.mxu0 %v847
  %v1390 = vpop.f32.mrf.mxu0
  %v1391 = vadd.f32 %v1102, %v1390
  %v1392 = vpop.f32.mrf.mxu0
  %v1393 = vpop.f32.mrf.mxu0
  %v1394 = vadd.f32 %v1105, %v1393
  %v1395 = vpop.f32.mrf.mxu0
  %1396 = vmatprep.mubr.bf16.mxu0 0
  %1397 = vmatmul.mubr.bf16.gmra.mxu0 %v850
  %v1398 = vpop.f32.mrf.mxu0
  %v1399 = vadd.f32 %v1110, %v1398
  %v1400 = vpop.f32.mrf.mxu0
  %v1401 = vpop.f32.mrf.mxu0
  %v1402 = vadd.f32 %v1113, %v1401
  %v1403 = vpop.f32.mrf.mxu0
  %1404 = vmatprep.mubr.bf16.mxu0 0
  %1405 = vmatmul.mubr.bf16.gmra.mxu0 %v853
  %v1406 = vpop.f32.mrf.mxu0
  %v1407 = vadd.f32 %v1118, %v1406
  %v1408 = vpop.f32.mrf.mxu0
  %v1409 = vpop.f32.mrf.mxu0
  %v1410 = vadd.f32 %v1121, %v1409
  %v1411 = vpop.f32.mrf.mxu0
  %1412 = vmatprep.mubr.bf16.mxu0 0
  %1413 = vmatmul.mubr.bf16.gmra.mxu0 %v856
  %v1414 = vpop.f32.mrf.mxu0
  %v1415 = vadd.f32 %v1126, %v1414
  %v1416 = vpop.f32.mrf.mxu0
  %v1417 = vpop.f32.mrf.mxu0
  %v1418 = vadd.f32 %v1129, %v1417
  %v1419 = vpop.f32.mrf.mxu0
  %1420 = vmatprep.mubr.bf16.mxu0 0
  %1421 = vmatmul.mubr.bf16.gmra.mxu0 %v859
  %v1422 = vpop.f32.mrf.mxu0
  %v1423 = vadd.f32 %v1134, %v1422
  %v1424 = vpop.f32.mrf.mxu0
  %v1425 = vpop.f32.mrf.mxu0
  %v1426 = vadd.f32 %v1137, %v1425
  %v1427 = vpop.f32.mrf.mxu0
  %1428 = vmatprep.mubr.bf16.mxu0 0
  %1429 = vmatmul.mubr.bf16.gmra.mxu0 %v862
  %v1430 = vpop.f32.mrf.mxu0
  %v1431 = vadd.f32 %v1142, %v1430
  %v1432 = vpop.f32.mrf.mxu0
  %v1433 = vpop.f32.mrf.mxu0
  %v1434 = vadd.f32 %v1145, %v1433
  %v1435 = vpop.f32.mrf.mxu0
  %1436 = vmatprep.mubr.bf16.mxu0 0
  %1437 = vmatmul.mubr.bf16.gmra.mxu0 %v865
  %v1438 = vpop.f32.mrf.mxu0
  %v1439 = vadd.f32 %v1150, %v1438
  %v1440 = vpop.f32.mrf.mxu0
  %v1441 = vpop.f32.mrf.mxu0
  %v1442 = vadd.f32 %v1153, %v1441
  %v1443 = vpop.f32.mrf.mxu0
  %1444 = vdwg.mxu0
  %v1445 = vadd.f32 %v1191, %v1194
  %v1446 = vadd.f32 %v1445, %v1199
  %v1447 = vadd.f32 %v1446, %v1202
  %v1448 = vadd.f32 %v1447, %v1207
  %v1449 = vadd.f32 %v1448, %v1210
  %v1450 = vadd.f32 %v1449, %v1215
  %v1451 = vadd.f32 %v1450, %v1218
  %v1452 = vadd.f32 %v1451, %v1223
  %v1453 = vadd.f32 %v1452, %v1226
  %v1454 = vadd.f32 %v1453, %v1231
  %v1455 = vadd.f32 %v1454, %v1234
  %v1456 = vadd.f32 %v1455, %v1239
  %v1457 = vadd.f32 %v1456, %v1242
  %v1458 = vadd.f32 %v1457, %v1247
  %v1459 = vadd.f32 %v1458, %v1250
  %v1460 = vadd.f32 %v1459, %v1255
  %v1461 = vadd.f32 %v1460, %v1258
  %v1462 = vadd.f32 %v1461, %v1263
  %v1463 = vadd.f32 %v1462, %v1266
  %v1464 = vadd.f32 %v1463, %v1271
  %v1465 = vadd.f32 %v1464, %v1274
  %v1466 = vadd.f32 %v1465, %v1279
  %v1467 = vadd.f32 %v1466, %v1282
  %v1468 = vadd.f32 %v1467, %v1287
  %v1469 = vadd.f32 %v1468, %v1290
  %v1470 = vadd.f32 %v1469, %v1295
  %v1471 = vadd.f32 %v1470, %v1298
  %v1472 = vadd.f32 %v1471, %v1303
  %v1473 = vadd.f32 %v1472, %v1306
  %v1474 = vadd.f32 %v1473, %v1311
  %v1475 = vadd.f32 %v1474, %v1314
  %v1476 = vadd.f32 %v1475, %v1319
  %v1477 = vadd.f32 %v1476, %v1322
  %v1478 = vadd.f32 %v1477, %v1327
  %v1479 = vadd.f32 %v1478, %v1330
  %v1480 = vadd.f32 %v1479, %v1335
  %v1481 = vadd.f32 %v1480, %v1338
  %v1482 = vadd.f32 %v1481, %v1343
  %v1483 = vadd.f32 %v1482, %v1346
  %v1484 = vadd.f32 %v1483, %v1351
  %v1485 = vadd.f32 %v1484, %v1354
  %v1486 = vadd.f32 %v1485, %v1359
  %v1487 = vadd.f32 %v1486, %v1362
  %v1488 = vadd.f32 %v1487, %v1367
  %v1489 = vadd.f32 %v1488, %v1370
  %v1490 = vadd.f32 %v1489, %v1375
  %v1491 = vadd.f32 %v1490, %v1378
  %v1492 = vadd.f32 %v1491, %v1383
  %v1493 = vadd.f32 %v1492, %v1386
  %v1494 = vadd.f32 %v1493, %v1391
  %v1495 = vadd.f32 %v1494, %v1394
  %v1496 = vadd.f32 %v1495, %v1399
  %v1497 = vadd.f32 %v1496, %v1402
  %v1498 = vadd.f32 %v1497, %v1407
  %v1499 = vadd.f32 %v1498, %v1410
  %v1500 = vadd.f32 %v1499, %v1415
  %v1501 = vadd.f32 %v1500, %v1418
  %v1502 = vadd.f32 %v1501, %v1423
  %v1503 = vadd.f32 %v1502, %v1426
  %v1504 = vadd.f32 %v1503, %v1431
  %v1505 = vadd.f32 %v1504, %v1434
  %v1506 = vadd.f32 %v1505, %v1439
  %v1507 = vadd.f32 %v1506, %v1442
  %v1508 = vrot.slane %v1507, 4
  %v1509 = vadd.f32 %v1507, %v1508
  %v1510 = vrot.slane %v1509, 2
  %v1511 = vadd.f32 %v1509, %v1510
  %v1512 = vrot.slane %v1511, 1
  %v1513 = vadd.f32 %v1511, %v1512
  %v1514 = vmul.f32 %v1191, %v1191
  %v1515 = vmul.f32 %v1194, %v1194
  %v1516 = vmul.f32 %v1199, %v1199
  %v1517 = vmul.f32 %v1202, %v1202
  %v1518 = vmul.f32 %v1207, %v1207
  %v1519 = vmul.f32 %v1210, %v1210
  %v1520 = vmul.f32 %v1215, %v1215
  %v1521 = vmul.f32 %v1218, %v1218
  %v1522 = vmul.f32 %v1223, %v1223
  %v1523 = vmul.f32 %v1226, %v1226
  %v1524 = vmul.f32 %v1231, %v1231
  %v1525 = vmul.f32 %v1234, %v1234
  %v1526 = vmul.f32 %v1239, %v1239
  %v1527 = vmul.f32 %v1242, %v1242
  %v1528 = vmul.f32 %v1247, %v1247
  %v1529 = vmul.f32 %v1250, %v1250
  %v1530 = vmul.f32 %v1255, %v1255
  %v1531 = vmul.f32 %v1258, %v1258
  %v1532 = vmul.f32 %v1263, %v1263
  %v1533 = vmul.f32 %v1266, %v1266
  %v1534 = vmul.f32 %v1271, %v1271
  %v1535 = vmul.f32 %v1274, %v1274
  %v1536 = vmul.f32 %v1279, %v1279
  %v1537 = vmul.f32 %v1282, %v1282
  %v1538 = vmul.f32 %v1287, %v1287
  %v1539 = vmul.f32 %v1290, %v1290
  %v1540 = vmul.f32 %v1295, %v1295
  %v1541 = vmul.f32 %v1298, %v1298
  %v1542 = vmul.f32 %v1303, %v1303
  %v1543 = vmul.f32 %v1306, %v1306
  %v1544 = vmul.f32 %v1311, %v1311
  %v1545 = vmul.f32 %v1314, %v1314
  %v1546 = vmul.f32 %v1319, %v1319
  %v1547 = vmul.f32 %v1322, %v1322
  %v1548 = vmul.f32 %v1327, %v1327
  %v1549 = vmul.f32 %v1330, %v1330
  %v1550 = vmul.f32 %v1335, %v1335
  %v1551 = vmul.f32 %v1338, %v1338
  %v1552 = vmul.f32 %v1343, %v1343
  %v1553 = vmul.f32 %v1346, %v1346
  %v1554 = vmul.f32 %v1351, %v1351
  %v1555 = vmul.f32 %v1354, %v1354
  %v1556 = vmul.f32 %v1359, %v1359
  %v1557 = vmul.f32 %v1362, %v1362
  %v1558 = vmul.f32 %v1367, %v1367
  %v1559 = vmul.f32 %v1370, %v1370
  %v1560 = vmul.f32 %v1375, %v1375
  %v1561 = vmul.f32 %v1378, %v1378
  %v1562 = vmul.f32 %v1383, %v1383
  %v1563 = vmul.f32 %v1386, %v1386
  %v1564 = vmul.f32 %v1391, %v1391
  %v1565 = vmul.f32 %v1394, %v1394
  %v1566 = vmul.f32 %v1399, %v1399
  %v1567 = vmul.f32 %v1402, %v1402
  %v1568 = vmul.f32 %v1407, %v1407
  %v1569 = vmul.f32 %v1410, %v1410
  %v1570 = vmul.f32 %v1415, %v1415
  %v1571 = vmul.f32 %v1418, %v1418
  %v1572 = vmul.f32 %v1423, %v1423
  %v1573 = vmul.f32 %v1426, %v1426
  %v1574 = vmul.f32 %v1431, %v1431
  %v1575 = vmul.f32 %v1434, %v1434
  %v1576 = vmul.f32 %v1439, %v1439
  %v1577 = vmul.f32 %v1442, %v1442
  %v1578 = vadd.f32 %v1514, %v1515
  %v1579 = vadd.f32 %v1578, %v1516
  %v1580 = vadd.f32 %v1579, %v1517
  %v1581 = vadd.f32 %v1580, %v1518
  %v1582 = vadd.f32 %v1581, %v1519
  %v1583 = vadd.f32 %v1582, %v1520
  %v1584 = vadd.f32 %v1583, %v1521
  %v1585 = vadd.f32 %v1584, %v1522
  %v1586 = vadd.f32 %v1585, %v1523
  %v1587 = vadd.f32 %v1586, %v1524
  %v1588 = vadd.f32 %v1587, %v1525
  %v1589 = vadd.f32 %v1588, %v1526
  %v1590 = vadd.f32 %v1589, %v1527
  %v1591 = vadd.f32 %v1590, %v1528
  %v1592 = vadd.f32 %v1591, %v1529
  %v1593 = vadd.f32 %v1592, %v1530
  %v1594 = vadd.f32 %v1593, %v1531
  %v1595 = vadd.f32 %v1594, %v1532
  %v1596 = vadd.f32 %v1595, %v1533
  %v1597 = vadd.f32 %v1596, %v1534
  %v1598 = vadd.f32 %v1597, %v1535
  %v1599 = vadd.f32 %v1598, %v1536
  %v1600 = vadd.f32 %v1599, %v1537
  %v1601 = vadd.f32 %v1600, %v1538
  %v1602 = vadd.f32 %v1601, %v1539
  %v1603 = vadd.f32 %v1602, %v1540
  %v1604 = vadd.f32 %v1603, %v1541
  %v1605 = vadd.f32 %v1604, %v1542
  %v1606 = vadd.f32 %v1605, %v1543
  %v1607 = vadd.f32 %v1606, %v1544
  %v1608 = vadd.f32 %v1607, %v1545
  %v1609 = vadd.f32 %v1608, %v1546
  %v1610 = vadd.f32 %v1609, %v1547
  %v1611 = vadd.f32 %v1610, %v1548
  %v1612 = vadd.f32 %v1611, %v1549
  %v1613 = vadd.f32 %v1612, %v1550
  %v1614 = vadd.f32 %v1613, %v1551
  %v1615 = vadd.f32 %v1614, %v1552
  %v1616 = vadd.f32 %v1615, %v1553
  %v1617 = vadd.f32 %v1616, %v1554
  %v1618 = vadd.f32 %v1617, %v1555
  %v1619 = vadd.f32 %v1618, %v1556
  %v1620 = vadd.f32 %v1619, %v1557
  %v1621 = vadd.f32 %v1620, %v1558
  %v1622 = vadd.f32 %v1621, %v1559
  %v1623 = vadd.f32 %v1622, %v1560
  %v1624 = vadd.f32 %v1623, %v1561
  %v1625 = vadd.f32 %v1624, %v1562
  %v1626 = vadd.f32 %v1625, %v1563
  %v1627 = vadd.f32 %v1626, %v1564
  %v1628 = vadd.f32 %v1627, %v1565
  %v1629 = vadd.f32 %v1628, %v1566
  %v1630 = vadd.f32 %v1629, %v1567
  %v1631 = vadd.f32 %v1630, %v1568
  %v1632 = vadd.f32 %v1631, %v1569
  %v1633 = vadd.f32 %v1632, %v1570
  %v1634 = vadd.f32 %v1633, %v1571
  %v1635 = vadd.f32 %v1634, %v1572
  %v1636 = vadd.f32 %v1635, %v1573
  %v1637 = vadd.f32 %v1636, %v1574
  %v1638 = vadd.f32 %v1637, %v1575
  %v1639 = vadd.f32 %v1638, %v1576
  %v1640 = vadd.f32 %v1639, %v1577
  %v1641 = vrot.slane %v1640, 4
  %v1642 = vadd.f32 %v1640, %v1641
  %v1643 = vrot.slane %v1642, 2
  %v1644 = vadd.f32 %v1642, %v1643
  %v1645 = vrot.slane %v1644, 1
  %v1646 = vadd.f32 %v1644, %v1645
  %v1647 = vmul.f32 %v1513, 0.001953125
  %v1648 = vmul.f32 %v1646, 0.001953125
  %v1649 = vmul.f32 %v1647, %v1647
  %v1650 = vsub.f32 %v1648, %v1649
  %v1651 = vmax.f32 %v1650, 0.0
  %v1652 = vld [vmem:[%s2] sm:$0x1]
  %v1653 = vadd.f32 %v1651, 1e-05
  %v1654 = vrsqrt.pop %v1653
  %v1655 = vmul.f32 %v1652, %v1654
  %v1656 = vld [vmem:[%s3] sm:$0x1]
  %v1657 = vmul.f32 %v1647, %v1655
  %v1658 = vsub.f32 %v1656, %v1657
  %v1660 = vlaneseq
  %v1661 = vshrl.u32 %v1660, 7
  %v1662 = vsub.s32 0, %v1661
  %v1663 = vrot.slane %v1655, %v1662
  %v1665 = vmul.f32 %v1191, %v1663
  %v1666 = vmul.f32 %v1194, %v1663
  %v1667 = vmul.f32 %v1199, %v1663
  %v1668 = vmul.f32 %v1202, %v1663
  %v1669 = vmul.f32 %v1207, %v1663
  %v1670 = vmul.f32 %v1210, %v1663
  %v1671 = vmul.f32 %v1215, %v1663
  %v1672 = vmul.f32 %v1218, %v1663
  %v1673 = vmul.f32 %v1223, %v1663
  %v1674 = vmul.f32 %v1226, %v1663
  %v1675 = vmul.f32 %v1231, %v1663
  %v1676 = vmul.f32 %v1234, %v1663
  %v1677 = vmul.f32 %v1239, %v1663
  %v1678 = vmul.f32 %v1242, %v1663
  %v1679 = vmul.f32 %v1247, %v1663
  %v1680 = vmul.f32 %v1250, %v1663
  %v1681 = vmul.f32 %v1255, %v1663
  %v1682 = vmul.f32 %v1258, %v1663
  %v1683 = vmul.f32 %v1263, %v1663
  %v1684 = vmul.f32 %v1266, %v1663
  %v1685 = vmul.f32 %v1271, %v1663
  %v1686 = vmul.f32 %v1274, %v1663
  %v1687 = vmul.f32 %v1279, %v1663
  %v1688 = vmul.f32 %v1282, %v1663
  %v1689 = vmul.f32 %v1287, %v1663
  %v1690 = vmul.f32 %v1290, %v1663
  %v1691 = vmul.f32 %v1295, %v1663
  %v1692 = vmul.f32 %v1298, %v1663
  %v1693 = vmul.f32 %v1303, %v1663
  %v1694 = vmul.f32 %v1306, %v1663
  %v1695 = vmul.f32 %v1311, %v1663
  %v1696 = vmul.f32 %v1314, %v1663
  %v1697 = vmul.f32 %v1319, %v1663
  %v1698 = vmul.f32 %v1322, %v1663
  %v1699 = vmul.f32 %v1327, %v1663
  %v1700 = vmul.f32 %v1330, %v1663
  %v1701 = vmul.f32 %v1335, %v1663
  %v1702 = vmul.f32 %v1338, %v1663
  %v1703 = vmul.f32 %v1343, %v1663
  %v1704 = vmul.f32 %v1346, %v1663
  %v1705 = vmul.f32 %v1351, %v1663
  %v1706 = vmul.f32 %v1354, %v1663
  %v1707 = vmul.f32 %v1359, %v1663
  %v1708 = vmul.f32 %v1362, %v1663
  %v1709 = vmul.f32 %v1367, %v1663
  %v1710 = vmul.f32 %v1370, %v1663
  %v1711 = vmul.f32 %v1375, %v1663
  %v1712 = vmul.f32 %v1378, %v1663
  %v1713 = vmul.f32 %v1383, %v1663
  %v1714 = vmul.f32 %v1386, %v1663
  %v1715 = vmul.f32 %v1391, %v1663
  %v1716 = vmul.f32 %v1394, %v1663
  %v1717 = vmul.f32 %v1399, %v1663
  %v1718 = vmul.f32 %v1402, %v1663
  %v1719 = vmul.f32 %v1407, %v1663
  %v1720 = vmul.f32 %v1410, %v1663
  %v1721 = vmul.f32 %v1415, %v1663
  %v1722 = vmul.f32 %v1418, %v1663
  %v1723 = vmul.f32 %v1423, %v1663
  %v1724 = vmul.f32 %v1426, %v1663
  %v1725 = vmul.f32 %v1431, %v1663
  %v1726 = vmul.f32 %v1434, %v1663
  %v1727 = vmul.f32 %v1439, %v1663
  %v1728 = vmul.f32 %v1442, %v1663
  %v1730 = vlaneseq
  %v1731 = vshrl.u32 %v1730, 7
  %v1732 = vsub.s32 0, %v1731
  %v1733 = vrot.slane %v1658, %v1732
  %v1735 = vadd.f32 %v1665, %v1733
  %v1736 = vadd.f32 %v1666, %v1733
  %v1737 = vadd.f32 %v1667, %v1733
  %v1738 = vadd.f32 %v1668, %v1733
  %v1739 = vadd.f32 %v1669, %v1733
  %v1740 = vadd.f32 %v1670, %v1733
  %v1741 = vadd.f32 %v1671, %v1733
  %v1742 = vadd.f32 %v1672, %v1733
  %v1743 = vadd.f32 %v1673, %v1733
  %v1744 = vadd.f32 %v1674, %v1733
  %v1745 = vadd.f32 %v1675, %v1733
  %v1746 = vadd.f32 %v1676, %v1733
  %v1747 = vadd.f32 %v1677, %v1733
  %v1748 = vadd.f32 %v1678, %v1733
  %v1749 = vadd.f32 %v1679, %v1733
  %v1750 = vadd.f32 %v1680, %v1733
  %v1751 = vadd.f32 %v1681, %v1733
  %v1752 = vadd.f32 %v1682, %v1733
  %v1753 = vadd.f32 %v1683, %v1733
  %v1754 = vadd.f32 %v1684, %v1733
  %v1755 = vadd.f32 %v1685, %v1733
  %v1756 = vadd.f32 %v1686, %v1733
  %v1757 = vadd.f32 %v1687, %v1733
  %v1758 = vadd.f32 %v1688, %v1733
  %v1759 = vadd.f32 %v1689, %v1733
  %v1760 = vadd.f32 %v1690, %v1733
  %v1761 = vadd.f32 %v1691, %v1733
  %v1762 = vadd.f32 %v1692, %v1733
  %v1763 = vadd.f32 %v1693, %v1733
  %v1764 = vadd.f32 %v1694, %v1733
  %v1765 = vadd.f32 %v1695, %v1733
  %v1766 = vadd.f32 %v1696, %v1733
  %v1767 = vadd.f32 %v1697, %v1733
  %v1768 = vadd.f32 %v1698, %v1733
  %v1769 = vadd.f32 %v1699, %v1733
  %v1770 = vadd.f32 %v1700, %v1733
  %v1771 = vadd.f32 %v1701, %v1733
  %v1772 = vadd.f32 %v1702, %v1733
  %v1773 = vadd.f32 %v1703, %v1733
  %v1774 = vadd.f32 %v1704, %v1733
  %v1775 = vadd.f32 %v1705, %v1733
  %v1776 = vadd.f32 %v1706, %v1733
  %v1777 = vadd.f32 %v1707, %v1733
  %v1778 = vadd.f32 %v1708, %v1733
  %v1779 = vadd.f32 %v1709, %v1733
  %v1780 = vadd.f32 %v1710, %v1733
  %v1781 = vadd.f32 %v1711, %v1733
  %v1782 = vadd.f32 %v1712, %v1733
  %v1783 = vadd.f32 %v1713, %v1733
  %v1784 = vadd.f32 %v1714, %v1733
  %v1785 = vadd.f32 %v1715, %v1733
  %v1786 = vadd.f32 %v1716, %v1733
  %v1787 = vadd.f32 %v1717, %v1733
  %v1788 = vadd.f32 %v1718, %v1733
  %v1789 = vadd.f32 %v1719, %v1733
  %v1790 = vadd.f32 %v1720, %v1733
  %v1791 = vadd.f32 %v1721, %v1733
  %v1792 = vadd.f32 %v1722, %v1733
  %v1793 = vadd.f32 %v1723, %v1733
  %v1794 = vadd.f32 %v1724, %v1733
  %v1795 = vadd.f32 %v1725, %v1733
  %v1796 = vadd.f32 %v1726, %v1733
  %v1797 = vadd.f32 %v1727, %v1733
  %v1798 = vadd.f32 %v1728, %v1733
  %v1799 = vmax.f32 %v1735, 0.0
  %v1800 = vmax.f32 %v1736, 0.0
  %v1801 = vmax.f32 %v1737, 0.0
  %v1802 = vmax.f32 %v1738, 0.0
  %v1803 = vmax.f32 %v1739, 0.0
  %v1804 = vmax.f32 %v1740, 0.0
  %v1805 = vmax.f32 %v1741, 0.0
  %v1806 = vmax.f32 %v1742, 0.0
  %v1807 = vmax.f32 %v1743, 0.0
  %v1808 = vmax.f32 %v1744, 0.0
  %v1809 = vmax.f32 %v1745, 0.0
  %v1810 = vmax.f32 %v1746, 0.0
  %v1811 = vmax.f32 %v1747, 0.0
  %v1812 = vmax.f32 %v1748, 0.0
  %v1813 = vmax.f32 %v1749, 0.0
  %v1814 = vmax.f32 %v1750, 0.0
  %v1815 = vmax.f32 %v1751, 0.0
  %v1816 = vmax.f32 %v1752, 0.0
  %v1817 = vmax.f32 %v1753, 0.0
  %v1818 = vmax.f32 %v1754, 0.0
  %v1819 = vmax.f32 %v1755, 0.0
  %v1820 = vmax.f32 %v1756, 0.0
  %v1821 = vmax.f32 %v1757, 0.0
  %v1822 = vmax.f32 %v1758, 0.0
  %v1823 = vmax.f32 %v1759, 0.0
  %v1824 = vmax.f32 %v1760, 0.0
  %v1825 = vmax.f32 %v1761, 0.0
  %v1826 = vmax.f32 %v1762, 0.0
  %v1827 = vmax.f32 %v1763, 0.0
  %v1828 = vmax.f32 %v1764, 0.0
  %v1829 = vmax.f32 %v1765, 0.0
  %v1830 = vmax.f32 %v1766, 0.0
  %v1831 = vmax.f32 %v1767, 0.0
  %v1832 = vmax.f32 %v1768, 0.0
  %v1833 = vmax.f32 %v1769, 0.0
  %v1834 = vmax.f32 %v1770, 0.0
  %v1835 = vmax.f32 %v1771, 0.0
  %v1836 = vmax.f32 %v1772, 0.0
  %v1837 = vmax.f32 %v1773, 0.0
  %v1838 = vmax.f32 %v1774, 0.0
  %v1839 = vmax.f32 %v1775, 0.0
  %v1840 = vmax.f32 %v1776, 0.0
  %v1841 = vmax.f32 %v1777, 0.0
  %v1842 = vmax.f32 %v1778, 0.0
  %v1843 = vmax.f32 %v1779, 0.0
  %v1844 = vmax.f32 %v1780, 0.0
  %v1845 = vmax.f32 %v1781, 0.0
  %v1846 = vmax.f32 %v1782, 0.0
  %v1847 = vmax.f32 %v1783, 0.0
  %v1848 = vmax.f32 %v1784, 0.0
  %v1849 = vmax.f32 %v1785, 0.0
  %v1850 = vmax.f32 %v1786, 0.0
  %v1851 = vmax.f32 %v1787, 0.0
  %v1852 = vmax.f32 %v1788, 0.0
  %v1853 = vmax.f32 %v1789, 0.0
  %v1854 = vmax.f32 %v1790, 0.0
  %v1855 = vmax.f32 %v1791, 0.0
  %v1856 = vmax.f32 %v1792, 0.0
  %v1857 = vmax.f32 %v1793, 0.0
  %v1858 = vmax.f32 %v1794, 0.0
  %v1859 = vmax.f32 %v1795, 0.0
  %v1860 = vmax.f32 %v1796, 0.0
  %v1861 = vmax.f32 %v1797, 0.0
  %v1862 = vmax.f32 %v1798, 0.0
  %1863 = vst [vmem:[%s4] sm:$0xff] %v1799
  %1864 = vst [vmem:[%s4 + $0x8] sm:$0xff] %v1800
  %1865 = vst [vmem:[%s4 + $0x10] sm:$0xff] %v1801
  %1866 = vst [vmem:[%s4 + $0x18] sm:$0xff] %v1802
  %1867 = vst [vmem:[%s4 + $0x20] sm:$0xff] %v1803
  %1868 = vst [vmem:[%s4 + $0x28] sm:$0xff] %v1804
  %1869 = vst [vmem:[%s4 + $0x30] sm:$0xff] %v1805
  %1870 = vst [vmem:[%s4 + $0x38] sm:$0xff] %v1806
  %1871 = vst [vmem:[%s4 + $0x40] sm:$0xff] %v1807
  %1872 = vst [vmem:[%s4 + $0x48] sm:$0xff] %v1808
  %1873 = vst [vmem:[%s4 + $0x50] sm:$0xff] %v1809
  %1874 = vst [vmem:[%s4 + $0x58] sm:$0xff] %v1810
  %1875 = vst [vmem:[%s4 + $0x60] sm:$0xff] %v1811
  %1876 = vst [vmem:[%s4 + $0x68] sm:$0xff] %v1812
  %1877 = vst [vmem:[%s4 + $0x70] sm:$0xff] %v1813
  %1878 = vst [vmem:[%s4 + $0x78] sm:$0xff] %v1814
  %1879 = vst [vmem:[%s4 + $0x80] sm:$0xff] %v1815
  %1880 = vst [vmem:[%s4 + $0x88] sm:$0xff] %v1816
  %1881 = vst [vmem:[%s4 + $0x90] sm:$0xff] %v1817
  %1882 = vst [vmem:[%s4 + $0x98] sm:$0xff] %v1818
  %1883 = vst [vmem:[%s4 + $0xa0] sm:$0xff] %v1819
  %1884 = vst [vmem:[%s4 + $0xa8] sm:$0xff] %v1820
  %1885 = vst [vmem:[%s4 + $0xb0] sm:$0xff] %v1821
  %1886 = vst [vmem:[%s4 + $0xb8] sm:$0xff] %v1822
  %1887 = vst [vmem:[%s4 + $0xc0] sm:$0xff] %v1823
  %1888 = vst [vmem:[%s4 + $0xc8] sm:$0xff] %v1824
  %1889 = vst [vmem:[%s4 + $0xd0] sm:$0xff] %v1825
  %1890 = vst [vmem:[%s4 + $0xd8] sm:$0xff] %v1826
  %1891 = vst [vmem:[%s4 + $0xe0] sm:$0xff] %v1827
  %1892 = vst [vmem:[%s4 + $0xe8] sm:$0xff] %v1828
  %1893 = vst [vmem:[%s4 + $0xf0] sm:$0xff] %v1829
  %1894 = vst [vmem:[%s4 + $0xf8] sm:$0xff] %v1830
  %1895 = vst [vmem:[%s4 + $0x100] sm:$0xff] %v1831
  %1896 = vst [vmem:[%s4 + $0x108] sm:$0xff] %v1832
  %1897 = vst [vmem:[%s4 + $0x110] sm:$0xff] %v1833
  %1898 = vst [vmem:[%s4 + $0x118] sm:$0xff] %v1834
  %1899 = vst [vmem:[%s4 + $0x120] sm:$0xff] %v1835
  %1900 = vst [vmem:[%s4 + $0x128] sm:$0xff] %v1836
  %1901 = vst [vmem:[%s4 + $0x130] sm:$0xff] %v1837
  %1902 = vst [vmem:[%s4 + $0x138] sm:$0xff] %v1838
  %1903 = vst [vmem:[%s4 + $0x140] sm:$0xff] %v1839
  %1904 = vst [vmem:[%s4 + $0x148] sm:$0xff] %v1840
  %1905 = vst [vmem:[%s4 + $0x150] sm:$0xff] %v1841
  %1906 = vst [vmem:[%s4 + $0x158] sm:$0xff] %v1842
  %1907 = vst [vmem:[%s4 + $0x160] sm:$0xff] %v1843
  %1908 = vst [vmem:[%s4 + $0x168] sm:$0xff] %v1844
  %1909 = vst [vmem:[%s4 + $0x170] sm:$0xff] %v1845
  %1910 = vst [vmem:[%s4 + $0x178] sm:$0xff] %v1846
  %1911 = vst [vmem:[%s4 + $0x180] sm:$0xff] %v1847
  %1912 = vst [vmem:[%s4 + $0x188] sm:$0xff] %v1848
  %1913 = vst [vmem:[%s4 + $0x190] sm:$0xff] %v1849
  %1914 = vst [vmem:[%s4 + $0x198] sm:$0xff] %v1850
  %1915 = vst [vmem:[%s4 + $0x1a0] sm:$0xff] %v1851
  %1916 = vst [vmem:[%s4 + $0x1a8] sm:$0xff] %v1852
  %1917 = vst [vmem:[%s4 + $0x1b0] sm:$0xff] %v1853
  %1918 = vst [vmem:[%s4 + $0x1b8] sm:$0xff] %v1854
  %1919 = vst [vmem:[%s4 + $0x1c0] sm:$0xff] %v1855
  %1920 = vst [vmem:[%s4 + $0x1c8] sm:$0xff] %v1856
  %1921 = vst [vmem:[%s4 + $0x1d0] sm:$0xff] %v1857
  %1922 = vst [vmem:[%s4 + $0x1d8] sm:$0xff] %v1858
  %1923 = vst [vmem:[%s4 + $0x1e0] sm:$0xff] %v1859
  %1924 = vst [vmem:[%s4 + $0x1e8] sm:$0xff] %v1860
  %1925 = vst [vmem:[%s4 + $0x1f0] sm:$0xff] %v1861
  %1926 = vst [vmem:[%s4 + $0x1f8] sm:$0xff] %v1862
  // Predicated region
  $region18: #{encdec_forward.15} parent=0 // pred_check
    _
  $region19: #{encdec_forward.15} parent=0 // pred_check_branch
    %1928 = sbr.rel (0) target = $region21
  $region20: #{encdec_forward.15} parent=0 // pred_region
    _
  $region21: #{encdec_forward.15} parent=0 // pred_fallthru
    _
  // Predicated region
  $region22: #{encdec_forward.15} parent=0 // pred_check
    _
  $region23: #{encdec_forward.15} parent=0 // pred_check_branch
    %1930 = sbr.rel (0) target = $region25
  $region24: #{encdec_forward.15} parent=0 // pred_region
    _
  $region25: #{encdec_forward.15} parent=0 // pred_fallthru
    _

</llo_original>
